<compile_context>
chip_gen: v6e
topology: v6e:2x2x1
jax: 0.10.0
libtpu: 0.0.40
codegen_flags: <defaults>
</compile_context>

<pallas_src>
import functools

import jax
import jax.numpy as jnp
from jax.experimental import pallas as pl
from jax.experimental.pallas import tpu as pltpu

_BN_EPS = 1e-5


def _round_up(x, m):
    return (x + m - 1) // m * m


def _device_kind():
    try:
        return jax.devices()[0].device_kind.lower()
    except Exception:
        return ""


def _vmem_limit_bytes():
    kind = _device_kind()
    if "v7" in kind:
        return 32 * 1024 * 1024     # v7x: 64 MiB physical VMEM -> stay conservative
    if "v5" in kind or "v6" in kind:
        return 100 * 1024 * 1024    # v5e/v6e: 128 MiB physical VMEM -> let tiles grow
    return 64 * 1024 * 1024


def _cout_lane_multiple(cout):
    # v6e/v7x MXUs are 2x256^2: prefer 256-granular output channels past 128 lanes.
    kind = _device_kind()
    if cout > 128 and ("v6" in kind or "v7" in kind):
        return 256
    return 128


# ---------------------------------------------------------------------------
# Kernels
# ---------------------------------------------------------------------------
def _make_conv_stats_kernel(K, stride, Hout, Wout, Cip, Cp):
    """Pass 1: implicit-GEMM conv for one image + per-channel partial BN sums."""
    HW = Hout * Wout

    def kernel(xp_ref, w_ref, y_ref, s1_ref, s2_ref):
        x = xp_ref[...]        # (1, Hp, Wp, Cip)  bf16, spatially + channel zero-padded
        w = w_ref[...]         # (K*K, Cip, Cp)    bf16, grid-invariant
        acc = jnp.zeros((HW, Cp), jnp.float32)
        for idx in range(K * K):                  # K*K shifted taps (implicit GEMM)
            ki, kj = idx // K, idx % K
            if stride == 1:
                patch = x[0, ki:ki + Hout, kj:kj + Wout, :]
            else:
                patch = jax.lax.slice(
                    x, (0, ki, kj, 0),
                    (1, ki + (Hout - 1) * stride + 1,
                     kj + (Wout - 1) * stride + 1, Cip),
                    (1, stride, stride, 1))[0]
            # (Hout*Wout, Cip) @ (Cip, Cp) on the MXU, f32 accumulation.
            acc = acc + jnp.dot(patch.reshape(HW, Cip), w[idx],
                                preferred_element_type=jnp.float32)
        y_ref[...] = acc[None].astype(y_ref.dtype)
        # Partial BN sums taken from the full-precision f32 accumulator.
        s1_ref[...] = jnp.sum(acc, axis=0, keepdims=True)[None]
        s2_ref[...] = jnp.sum(acc * acc, axis=0, keepdims=True)[None]

    return kernel


def _bn_relu_kernel(y_ref, scale_ref, shift_ref, out_ref):
    """Pass 2: pure elementwise fused BN affine + ReLU on the bf16 conv output."""
    y = y_ref[...].astype(jnp.float32)
    out_ref[...] = jnp.maximum(y * scale_ref[...] + shift_ref[...],
                               0.0).astype(out_ref.dtype)


# ---------------------------------------------------------------------------
# Wrapper
# ---------------------------------------------------------------------------
@functools.partial(jax.jit, static_argnames=("kernel_size", "padding", "stride"))
def conv_bn_relu(x, weight, bias, gamma, beta, *, kernel_size, padding, stride):
    """
    x:      [N, C_in, H, W]  (NCHW, like PyTorch), float32
    weight: [C_out, C_in, K, K]
    bias:   [C_out]  (unused: a pre-BN per-channel bias cancels exactly in train-mode BN)
    gamma:  [C_out]  (BN weight) ; beta: [C_out]  (BN bias)
    returns [N, C_out, H_out, W_out] float32
    """
    del bias  # cancels under train-mode BatchNorm (mean subtraction)

    N, Cin, H, W = x.shape
    Cout = weight.shape[0]
    K = kernel_size
    Hout = (H + 2 * padding - K) // stride + 1
    Wout = (W + 2 * padding - K) // stride + 1
    HW = Hout * Wout
    M = N * HW
    Hp, Wp = H + 2 * padding, W + 2 * padding
    KK = K * K

    Cip = _round_up(Cin, 128)                          # lane-dense contraction channels
    Cp = _round_up(Cout, _cout_lane_multiple(Cout))    # lane-dense output channels

    # Raw-input-sized prep only (no K^2-inflated im2col): NHWC bf16 with spatial and
    # channel zero padding; zeros contribute nothing to the matmul or the batch
    # statistics (no conv bias is added before BN).
    xh = jnp.transpose(x, (0, 2, 3, 1)).astype(jnp.bfloat16)
    xp = jnp.pad(xh, ((0, 0), (padding, padding), (padding, padding),
                      (0, Cip - Cin)))

    # Per-tap weight matrices: w_taps[ki*K + kj, ci, co] = weight[co, ci, ki, kj].
    w_t = jnp.transpose(weight, (2, 3, 1, 0)).reshape(KK, Cin, Cout)
    w_taps = jnp.pad(w_t, ((0, 0), (0, Cip - Cin),
                           (0, Cp - Cout))).astype(jnp.bfloat16)

    gamma_p = jnp.pad(gamma.astype(jnp.float32), (0, Cp - Cout))
    beta_p = jnp.pad(beta.astype(jnp.float32), (0, Cp - Cout))

    compiler_params = pltpu.CompilerParams(
        dimension_semantics=("parallel",),             # shard images across TCs (v7x)
        vmem_limit_bytes=_vmem_limit_bytes(),
    )

    conv_flops = 2 * M * Cip * Cp * KK
    y_bytes = M * Cp * 2
    pass1_bytes = xp.size * 2 + w_taps.size * 2 + y_bytes + 2 * N * Cp * 4

    # ---- Pass 1: implicit-GEMM conv + per-image partial BN statistics ----------
    kernel1 = _make_conv_stats_kernel(K, stride, Hout, Wout, Cip, Cp)
    y_pad, s1p, s2p = pl.pallas_call(
        kernel1,
        out_shape=(jax.ShapeDtypeStruct((N, HW, Cp), jnp.bfloat16),
                   jax.ShapeDtypeStruct((N, 1, Cp), jnp.float32),
                   jax.ShapeDtypeStruct((N, 1, Cp), jnp.float32)),
        grid=(N,),
        in_specs=[
            pl.BlockSpec((1, Hp, Wp, Cip), lambda n: (n, 0, 0, 0)),
            pl.BlockSpec((KK, Cip, Cp), lambda n: (0, 0, 0)),     # grid-invariant
        ],
        out_specs=(pl.BlockSpec((1, HW, Cp), lambda n: (n, 0, 0)),
                   pl.BlockSpec((1, 1, Cp), lambda n: (n, 0, 0)),
                   pl.BlockSpec((1, 1, Cp), lambda n: (n, 0, 0))),
        compiler_params=compiler_params,
        cost_estimate=pl.CostEstimate(flops=conv_flops, transcendentals=0,
                                      bytes_accessed=pass1_bytes),
    )(xp, w_taps)

    # Per-channel scale/shift from the batch statistics (tiny [Cp] vectors; glue).
    s1 = jnp.sum(s1p[:, 0, :], axis=0)
    s2 = jnp.sum(s2p[:, 0, :], axis=0)
    mean = s1 / M
    var = jnp.maximum(s2 / M - mean * mean, 0.0)    # biased (train-mode) variance, clamped
    rstd = jax.lax.rsqrt(var + _BN_EPS)
    scale = (gamma_p * rstd).reshape(1, 1, Cp)
    shift = (beta_p - mean * gamma_p * rstd).reshape(1, 1, Cp)

    # ---- Pass 2: elementwise fused BN affine + ReLU (bf16 in / bf16 out) --------
    out_pad = pl.pallas_call(
        _bn_relu_kernel,
        out_shape=jax.ShapeDtypeStruct((N, HW, Cp), jnp.bfloat16),
        grid=(N,),
        in_specs=[
            pl.BlockSpec((1, HW, Cp), lambda n: (n, 0, 0)),
            pl.BlockSpec((1, 1, Cp), lambda n: (0, 0, 0)),        # grid-invariant
            pl.BlockSpec((1, 1, Cp), lambda n: (0, 0, 0)),        # grid-invariant
        ],
        out_specs=pl.BlockSpec((1, HW, Cp), lambda n: (n, 0, 0)),
        compiler_params=compiler_params,
        cost_estimate=pl.CostEstimate(flops=2 * M * Cp, transcendentals=0,
                                      bytes_accessed=3 * y_bytes),
    )(y_pad, scale, shift)

    # Slice off channel padding; NHWC -> NCHW relayout + f32 upcast fuse into one copy.
    out = out_pad[:, :, :Cout].reshape(N, Hout, Wout, Cout)
    return jnp.transpose(out, (0, 3, 1, 2)).astype(jnp.float32)


if __name__ == "__main__":
    # Shapes consistent with ConvBnRelu(4, 8, kernel_size=3, padding=1, stride=1)
    N, Cin, H, W = 2, 4, 16, 16
    Cout, K, pad, stride = 8, 3, 1, 1

    key = jax.random.PRNGKey(0)
    kx, kw, kb = jax.random.split(key, 3)

    x = jax.random.normal(kx, (N, Cin, H, W), dtype=jnp.float32)

    fan_in = Cin * K * K
    bound = 1.0 / (fan_in ** 0.5)
    weight = jax.random.uniform(kw, (Cout, Cin, K, K), jnp.float32, -bound, bound)
    bias = jax.random.uniform(kb, (Cout,), jnp.float32, -bound, bound)
    gamma = jnp.ones((Cout,), jnp.float32)   # nn.BatchNorm2d default weight
    beta = jnp.zeros((Cout,), jnp.float32)   # nn.BatchNorm2d default bias

    out = conv_bn_relu(x, weight, bias, gamma, beta,
                       kernel_size=K, padding=pad, stride=stride)
    out = jax.block_until_ready(out)
    assert out.shape == (N, Cout, H, W), out.shape

    # Pure-JAX f32 reference (train-mode BN); loose tolerance for the bf16 path.
    y = jax.lax.conv_general_dilated(
        x, weight, window_strides=(stride, stride),
        padding=((pad, pad), (pad, pad)),
        dimension_numbers=("NCHW", "OIHW", "NCHW")) + bias[None, :, None, None]
    mu = y.mean(axis=(0, 2, 3), keepdims=True)
    vr = ((y - mu) ** 2).mean(axis=(0, 2, 3), keepdims=True)
    ref = jnp.maximum(
        gamma[None, :, None, None] * (y - mu) * jax.lax.rsqrt(vr + _BN_EPS)
        + beta[None, :, None, None], 0.0)
    max_err = float(jnp.max(jnp.abs(out - ref)))
    assert max_err < 0.2, max_err

    print("KERNEL_OK")
</pallas_src>

<mosaic_0001>
module attributes {stable_mosaic.version = 11 : i64} {
  func.func @kernel(%arg0: i32, %arg1: memref<1x18x18x128xbf16, #tpu.memory_space<vmem>>, %arg2: memref<9x128x128xbf16, #tpu.memory_space<vmem>>, %arg3: memref<1x256x128xbf16, #tpu.memory_space<vmem>>, %arg4: memref<1x1x128xf32, #tpu.memory_space<vmem>>, %arg5: memref<1x1x128xf32, #tpu.memory_space<vmem>>) attributes {dimension_semantics = [#tpu.dimension_semantics<parallel>], iteration_bounds = array<i64: 2>, scalar_prefetch = 0 : i64, scratch_operands = 0 : i64, tpu.core_type = #tpu.core_type<tc>, window_params = [{transform_indices = @transform_0, window_bounds = array<i64: 1, 18, 18, 128>}, {pipeline_mode = #tpu.pipeline_mode<synchronous>, transform_indices = @transform_1, window_bounds = array<i64: 9, 128, 128>}, {transform_indices = @transform_2, window_bounds = array<i64: 1, 256, 128>}, {transform_indices = @transform_3, window_bounds = array<i64: 1, 1, 128>}, {transform_indices = @transform_4, window_bounds = array<i64: 1, 1, 128>}]} {
    %c0 = arith.constant 0 : index
    %c0_0 = arith.constant 0 : index
    %c0_1 = arith.constant 0 : index
    %c0_2 = arith.constant 0 : index
    %0 = vector.load %arg1[%c0, %c0_0, %c0_1, %c0_2] : memref<1x18x18x128xbf16, #tpu.memory_space<vmem>>, vector<1x18x18x128xbf16>
    %c0_3 = arith.constant 0 : index
    %c0_4 = arith.constant 0 : index
    %c0_5 = arith.constant 0 : index
    %1 = vector.load %arg2[%c0_3, %c0_4, %c0_5] : memref<9x128x128xbf16, #tpu.memory_space<vmem>>, vector<9x128x128xbf16>
    %cst = arith.constant 0.000000e+00 : f32
    %2 = vector.broadcast %cst : f32 to vector<256x128xf32>
    %3 = vector.extract_strided_slice %0 {offsets = [0, 0, 0, 0], sizes = [1, 16, 16, 128], strides = [1, 1, 1, 1]} : vector<1x18x18x128xbf16> to vector<1x16x16x128xbf16>
    %4 = vector.shape_cast %3 : vector<1x16x16x128xbf16> to vector<16x16x128xbf16>
    %5 = vector.shape_cast %4 : vector<16x16x128xbf16> to vector<256x128xbf16>
    %6 = vector.extract_strided_slice %1 {offsets = [0, 0, 0], sizes = [1, 128, 128], strides = [1, 1, 1]} : vector<9x128x128xbf16> to vector<1x128x128xbf16>
    %7 = vector.shape_cast %6 : vector<1x128x128xbf16> to vector<128x128xbf16>
    %cst_6 = arith.constant dense<0.000000e+00> : vector<256x128xf32>
    %8 = tpu.matmul %5, %7, %cst_6 {dimension_numbers = #tpu.dot_dimension_numbers<[1], [0], [0], [1], [0, 0, 1, 1], [], []>} : vector<256x128xbf16>, vector<128x128xbf16>, vector<256x128xf32> -> vector<256x128xf32>
    %9 = arith.addf %2, %8 : vector<256x128xf32>
    %10 = vector.extract_strided_slice %0 {offsets = [0, 0, 1, 0], sizes = [1, 16, 16, 128], strides = [1, 1, 1, 1]} : vector<1x18x18x128xbf16> to vector<1x16x16x128xbf16>
    %11 = vector.shape_cast %10 : vector<1x16x16x128xbf16> to vector<16x16x128xbf16>
    %12 = vector.shape_cast %11 : vector<16x16x128xbf16> to vector<256x128xbf16>
    %13 = vector.extract_strided_slice %1 {offsets = [1, 0, 0], sizes = [1, 128, 128], strides = [1, 1, 1]} : vector<9x128x128xbf16> to vector<1x128x128xbf16>
    %14 = vector.shape_cast %13 : vector<1x128x128xbf16> to vector<128x128xbf16>
    %cst_7 = arith.constant dense<0.000000e+00> : vector<256x128xf32>
    %15 = tpu.matmul %12, %14, %cst_7 {dimension_numbers = #tpu.dot_dimension_numbers<[1], [0], [0], [1], [0, 0, 1, 1], [], []>} : vector<256x128xbf16>, vector<128x128xbf16>, vector<256x128xf32> -> vector<256x128xf32>
    %16 = arith.addf %9, %15 : vector<256x128xf32>
    %17 = vector.extract_strided_slice %0 {offsets = [0, 0, 2, 0], sizes = [1, 16, 16, 128], strides = [1, 1, 1, 1]} : vector<1x18x18x128xbf16> to vector<1x16x16x128xbf16>
    %18 = vector.shape_cast %17 : vector<1x16x16x128xbf16> to vector<16x16x128xbf16>
    %19 = vector.shape_cast %18 : vector<16x16x128xbf16> to vector<256x128xbf16>
    %20 = vector.extract_strided_slice %1 {offsets = [2, 0, 0], sizes = [1, 128, 128], strides = [1, 1, 1]} : vector<9x128x128xbf16> to vector<1x128x128xbf16>
    %21 = vector.shape_cast %20 : vector<1x128x128xbf16> to vector<128x128xbf16>
    %cst_8 = arith.constant dense<0.000000e+00> : vector<256x128xf32>
    %22 = tpu.matmul %19, %21, %cst_8 {dimension_numbers = #tpu.dot_dimension_numbers<[1], [0], [0], [1], [0, 0, 1, 1], [], []>} : vector<256x128xbf16>, vector<128x128xbf16>, vector<256x128xf32> -> vector<256x128xf32>
    %23 = arith.addf %16, %22 : vector<256x128xf32>
    %24 = vector.extract_strided_slice %0 {offsets = [0, 1, 0, 0], sizes = [1, 16, 16, 128], strides = [1, 1, 1, 1]} : vector<1x18x18x128xbf16> to vector<1x16x16x128xbf16>
    %25 = vector.shape_cast %24 : vector<1x16x16x128xbf16> to vector<16x16x128xbf16>
    %26 = vector.shape_cast %25 : vector<16x16x128xbf16> to vector<256x128xbf16>
    %27 = vector.extract_strided_slice %1 {offsets = [3, 0, 0], sizes = [1, 128, 128], strides = [1, 1, 1]} : vector<9x128x128xbf16> to vector<1x128x128xbf16>
    %28 = vector.shape_cast %27 : vector<1x128x128xbf16> to vector<128x128xbf16>
    %cst_9 = arith.constant dense<0.000000e+00> : vector<256x128xf32>
    %29 = tpu.matmul %26, %28, %cst_9 {dimension_numbers = #tpu.dot_dimension_numbers<[1], [0], [0], [1], [0, 0, 1, 1], [], []>} : vector<256x128xbf16>, vector<128x128xbf16>, vector<256x128xf32> -> vector<256x128xf32>
    %30 = arith.addf %23, %29 : vector<256x128xf32>
    %31 = vector.extract_strided_slice %0 {offsets = [0, 1, 1, 0], sizes = [1, 16, 16, 128], strides = [1, 1, 1, 1]} : vector<1x18x18x128xbf16> to vector<1x16x16x128xbf16>
    %32 = vector.shape_cast %31 : vector<1x16x16x128xbf16> to vector<16x16x128xbf16>
    %33 = vector.shape_cast %32 : vector<16x16x128xbf16> to vector<256x128xbf16>
    %34 = vector.extract_strided_slice %1 {offsets = [4, 0, 0], sizes = [1, 128, 128], strides = [1, 1, 1]} : vector<9x128x128xbf16> to vector<1x128x128xbf16>
    %35 = vector.shape_cast %34 : vector<1x128x128xbf16> to vector<128x128xbf16>
    %cst_10 = arith.constant dense<0.000000e+00> : vector<256x128xf32>
    %36 = tpu.matmul %33, %35, %cst_10 {dimension_numbers = #tpu.dot_dimension_numbers<[1], [0], [0], [1], [0, 0, 1, 1], [], []>} : vector<256x128xbf16>, vector<128x128xbf16>, vector<256x128xf32> -> vector<256x128xf32>
    %37 = arith.addf %30, %36 : vector<256x128xf32>
    %38 = vector.extract_strided_slice %0 {offsets = [0, 1, 2, 0], sizes = [1, 16, 16, 128], strides = [1, 1, 1, 1]} : vector<1x18x18x128xbf16> to vector<1x16x16x128xbf16>
    %39 = vector.shape_cast %38 : vector<1x16x16x128xbf16> to vector<16x16x128xbf16>
    %40 = vector.shape_cast %39 : vector<16x16x128xbf16> to vector<256x128xbf16>
    %41 = vector.extract_strided_slice %1 {offsets = [5, 0, 0], sizes = [1, 128, 128], strides = [1, 1, 1]} : vector<9x128x128xbf16> to vector<1x128x128xbf16>
    %42 = vector.shape_cast %41 : vector<1x128x128xbf16> to vector<128x128xbf16>
    %cst_11 = arith.constant dense<0.000000e+00> : vector<256x128xf32>
    %43 = tpu.matmul %40, %42, %cst_11 {dimension_numbers = #tpu.dot_dimension_numbers<[1], [0], [0], [1], [0, 0, 1, 1], [], []>} : vector<256x128xbf16>, vector<128x128xbf16>, vector<256x128xf32> -> vector<256x128xf32>
    %44 = arith.addf %37, %43 : vector<256x128xf32>
    %45 = vector.extract_strided_slice %0 {offsets = [0, 2, 0, 0], sizes = [1, 16, 16, 128], strides = [1, 1, 1, 1]} : vector<1x18x18x128xbf16> to vector<1x16x16x128xbf16>
    %46 = vector.shape_cast %45 : vector<1x16x16x128xbf16> to vector<16x16x128xbf16>
    %47 = vector.shape_cast %46 : vector<16x16x128xbf16> to vector<256x128xbf16>
    %48 = vector.extract_strided_slice %1 {offsets = [6, 0, 0], sizes = [1, 128, 128], strides = [1, 1, 1]} : vector<9x128x128xbf16> to vector<1x128x128xbf16>
    %49 = vector.shape_cast %48 : vector<1x128x128xbf16> to vector<128x128xbf16>
    %cst_12 = arith.constant dense<0.000000e+00> : vector<256x128xf32>
    %50 = tpu.matmul %47, %49, %cst_12 {dimension_numbers = #tpu.dot_dimension_numbers<[1], [0], [0], [1], [0, 0, 1, 1], [], []>} : vector<256x128xbf16>, vector<128x128xbf16>, vector<256x128xf32> -> vector<256x128xf32>
    %51 = arith.addf %44, %50 : vector<256x128xf32>
    %52 = vector.extract_strided_slice %0 {offsets = [0, 2, 1, 0], sizes = [1, 16, 16, 128], strides = [1, 1, 1, 1]} : vector<1x18x18x128xbf16> to vector<1x16x16x128xbf16>
    %53 = vector.shape_cast %52 : vector<1x16x16x128xbf16> to vector<16x16x128xbf16>
    %54 = vector.shape_cast %53 : vector<16x16x128xbf16> to vector<256x128xbf16>
    %55 = vector.extract_strided_slice %1 {offsets = [7, 0, 0], sizes = [1, 128, 128], strides = [1, 1, 1]} : vector<9x128x128xbf16> to vector<1x128x128xbf16>
    %56 = vector.shape_cast %55 : vector<1x128x128xbf16> to vector<128x128xbf16>
    %cst_13 = arith.constant dense<0.000000e+00> : vector<256x128xf32>
    %57 = tpu.matmul %54, %56, %cst_13 {dimension_numbers = #tpu.dot_dimension_numbers<[1], [0], [0], [1], [0, 0, 1, 1], [], []>} : vector<256x128xbf16>, vector<128x128xbf16>, vector<256x128xf32> -> vector<256x128xf32>
    %58 = arith.addf %51, %57 : vector<256x128xf32>
    %59 = vector.extract_strided_slice %0 {offsets = [0, 2, 2, 0], sizes = [1, 16, 16, 128], strides = [1, 1, 1, 1]} : vector<1x18x18x128xbf16> to vector<1x16x16x128xbf16>
    %60 = vector.shape_cast %59 : vector<1x16x16x128xbf16> to vector<16x16x128xbf16>
    %61 = vector.shape_cast %60 : vector<16x16x128xbf16> to vector<256x128xbf16>
    %62 = vector.extract_strided_slice %1 {offsets = [8, 0, 0], sizes = [1, 128, 128], strides = [1, 1, 1]} : vector<9x128x128xbf16> to vector<1x128x128xbf16>
    %63 = vector.shape_cast %62 : vector<1x128x128xbf16> to vector<128x128xbf16>
    %cst_14 = arith.constant dense<0.000000e+00> : vector<256x128xf32>
    %64 = tpu.matmul %61, %63, %cst_14 {dimension_numbers = #tpu.dot_dimension_numbers<[1], [0], [0], [1], [0, 0, 1, 1], [], []>} : vector<256x128xbf16>, vector<128x128xbf16>, vector<256x128xf32> -> vector<256x128xf32>
    %65 = arith.addf %58, %64 : vector<256x128xf32>
    %66 = vector.shape_cast %65 : vector<256x128xf32> to vector<1x256x128xf32>
    %67 = arith.truncf %66 : vector<1x256x128xf32> to vector<1x256x128xbf16>
    %c0_15 = arith.constant 0 : index
    %c0_16 = arith.constant 0 : index
    %c0_17 = arith.constant 0 : index
    %68 = vector.load %arg3[%c0_15, %c0_16, %c0_17] : memref<1x256x128xbf16, #tpu.memory_space<vmem>>, vector<1x256x128xbf16>
    tpu.vector_store %arg3[%c0_15, %c0_16, %c0_17], %67 {strides = array<i32>} : memref<1x256x128xbf16, #tpu.memory_space<vmem>>, vector<1x256x128xbf16>,
    %cst_18 = arith.constant dense<0.000000e+00> : vector<128xf32>
    %69 = vector.multi_reduction <add>, %65, %cst_18 [0] : vector<256x128xf32> to vector<128xf32>
    %70 = vector.shape_cast %69 : vector<128xf32> to vector<1x128xf32>
    %71 = vector.shape_cast %70 : vector<1x128xf32> to vector<1x1x128xf32>
    %c0_19 = arith.constant 0 : index
    %c0_20 = arith.constant 0 : index
    %c0_21 = arith.constant 0 : index
    %72 = vector.load %arg4[%c0_19, %c0_20, %c0_21] : memref<1x1x128xf32, #tpu.memory_space<vmem>>, vector<1x1x128xf32>
    tpu.vector_store %arg4[%c0_19, %c0_20, %c0_21], %71 {strides = array<i32>} : memref<1x1x128xf32, #tpu.memory_space<vmem>>, vector<1x1x128xf32>,
    %73 = arith.mulf %65, %65 : vector<256x128xf32>
    %cst_22 = arith.constant dense<0.000000e+00> : vector<128xf32>
    %74 = vector.multi_reduction <add>, %73, %cst_22 [0] : vector<256x128xf32> to vector<128xf32>
    %75 = vector.shape_cast %74 : vector<128xf32> to vector<1x128xf32>
    %76 = vector.shape_cast %75 : vector<1x128xf32> to vector<1x1x128xf32>
    %c0_23 = arith.constant 0 : index
    %c0_24 = arith.constant 0 : index
    %c0_25 = arith.constant 0 : index
    %77 = vector.load %arg5[%c0_23, %c0_24, %c0_25] : memref<1x1x128xf32, #tpu.memory_space<vmem>>, vector<1x1x128xf32>
    tpu.vector_store %arg5[%c0_23, %c0_24, %c0_25], %76 {strides = array<i32>} : memref<1x1x128xf32, #tpu.memory_space<vmem>>, vector<1x1x128xf32>,
    return
  }
  func.func @transform_0(%arg0: i32) -> (i32, i32, i32, i32) {
    %c0_i32 = arith.constant 0 : i32
    %c0_i32_0 = arith.constant 0 : i32
    %c0_i32_1 = arith.constant 0 : i32
    %c0_i32_2 = arith.constant 0 : i32
    return %arg0, %c0_i32, %c0_i32_0, %c0_i32_1 : i32, i32, i32, i32
  }
  func.func @transform_1(%arg0: i32) -> (i32, i32, i32) {
    %c0_i32 = arith.constant 0 : i32
    %c0_i32_0 = arith.constant 0 : i32
    %c0_i32_1 = arith.constant 0 : i32
    %c0_i32_2 = arith.constant 0 : i32
    return %c0_i32, %c0_i32_0, %c0_i32_1 : i32, i32, i32
  }
  func.func @transform_2(%arg0: i32) -> (i32, i32, i32) {
    %c0_i32 = arith.constant 0 : i32
    %c0_i32_0 = arith.constant 0 : i32
    %c0_i32_1 = arith.constant 0 : i32
    return %arg0, %c0_i32, %c0_i32_0 : i32, i32, i32
  }
  func.func @transform_3(%arg0: i32) -> (i32, i32, i32) {
    %c0_i32 = arith.constant 0 : i32
    %c0_i32_0 = arith.constant 0 : i32
    %c0_i32_1 = arith.constant 0 : i32
    return %arg0, %c0_i32, %c0_i32_0 : i32, i32, i32
  }
  func.func @transform_4(%arg0: i32) -> (i32, i32, i32) {
    %c0_i32 = arith.constant 0 : i32
    %c0_i32_0 = arith.constant 0 : i32
    %c0_i32_1 = arith.constant 0 : i32
    return %arg0, %c0_i32, %c0_i32_0 : i32, i32, i32
  }
}

module attributes {stable_mosaic.version = 11 : i64} {
  func.func @_bn_relu_kernel(%arg0: i32, %arg1: memref<1x256x128xbf16, #tpu.memory_space<vmem>>, %arg2: memref<1x1x128xf32, #tpu.memory_space<vmem>>, %arg3: memref<1x1x128xf32, #tpu.memory_space<vmem>>, %arg4: memref<1x256x128xbf16, #tpu.memory_space<vmem>>) attributes {dimension_semantics = [#tpu.dimension_semantics<parallel>], iteration_bounds = array<i64: 2>, scalar_prefetch = 0 : i64, scratch_operands = 0 : i64, tpu.core_type = #tpu.core_type<tc>, window_params = [{transform_indices = @transform_0, window_bounds = array<i64: 1, 256, 128>}, {pipeline_mode = #tpu.pipeline_mode<synchronous>, transform_indices = @transform_1, window_bounds = array<i64: 1, 1, 128>}, {pipeline_mode = #tpu.pipeline_mode<synchronous>, transform_indices = @transform_2, window_bounds = array<i64: 1, 1, 128>}, {transform_indices = @transform_3, window_bounds = array<i64: 1, 256, 128>}]} {
    %c0 = arith.constant 0 : index
    %c0_0 = arith.constant 0 : index
    %c0_1 = arith.constant 0 : index
    %0 = vector.load %arg1[%c0, %c0_0, %c0_1] : memref<1x256x128xbf16, #tpu.memory_space<vmem>>, vector<1x256x128xbf16>
    %1 = arith.extf %0 : vector<1x256x128xbf16> to vector<1x256x128xf32>
    %c0_2 = arith.constant 0 : index
    %c0_3 = arith.constant 0 : index
    %c0_4 = arith.constant 0 : index
    %2 = vector.load %arg2[%c0_2, %c0_3, %c0_4] : memref<1x1x128xf32, #tpu.memory_space<vmem>>, vector<1x1x128xf32>
    %3 = vector.broadcast %2 : vector<1x1x128xf32> to vector<1x256x128xf32>
    %4 = arith.mulf %1, %3 : vector<1x256x128xf32>
    %c0_5 = arith.constant 0 : index
    %c0_6 = arith.constant 0 : index
    %c0_7 = arith.constant 0 : index
    %5 = vector.load %arg3[%c0_5, %c0_6, %c0_7] : memref<1x1x128xf32, #tpu.memory_space<vmem>>, vector<1x1x128xf32>
    %6 = vector.broadcast %5 : vector<1x1x128xf32> to vector<1x256x128xf32>
    %7 = arith.addf %4, %6 : vector<1x256x128xf32>
    %cst = arith.constant 0.000000e+00 : f32
    %8 = vector.broadcast %cst : f32 to vector<1x256x128xf32>
    %9 = arith.maximumf %7, %8 : vector<1x256x128xf32>
    %10 = arith.truncf %9 : vector<1x256x128xf32> to vector<1x256x128xbf16>
    %c0_8 = arith.constant 0 : index
    %c0_9 = arith.constant 0 : index
    %c0_10 = arith.constant 0 : index
    %11 = vector.load %arg4[%c0_8, %c0_9, %c0_10] : memref<1x256x128xbf16, #tpu.memory_space<vmem>>, vector<1x256x128xbf16>
    tpu.vector_store %arg4[%c0_8, %c0_9, %c0_10], %10 {strides = array<i32>} : memref<1x256x128xbf16, #tpu.memory_space<vmem>>, vector<1x256x128xbf16>,
    return
  }
  func.func @transform_0(%arg0: i32) -> (i32, i32, i32) {
    %c0_i32 = arith.constant 0 : i32
    %c0_i32_0 = arith.constant 0 : i32
    %c0_i32_1 = arith.constant 0 : i32
    return %arg0, %c0_i32, %c0_i32_0 : i32, i32, i32
  }
  func.func @transform_1(%arg0: i32) -> (i32, i32, i32) {
    %c0_i32 = arith.constant 0 : i32
    %c0_i32_0 = arith.constant 0 : i32
    %c0_i32_1 = arith.constant 0 : i32
    %c0_i32_2 = arith.constant 0 : i32
    return %c0_i32, %c0_i32_0, %c0_i32_1 : i32, i32, i32
  }
  func.func @transform_2(%arg0: i32) -> (i32, i32, i32) {
    %c0_i32 = arith.constant 0 : i32
    %c0_i32_0 = arith.constant 0 : i32
    %c0_i32_1 = arith.constant 0 : i32
    %c0_i32_2 = arith.constant 0 : i32
    return %c0_i32, %c0_i32_0, %c0_i32_1 : i32, i32, i32
  }
  func.func @transform_3(%arg0: i32) -> (i32, i32, i32) {
    %c0_i32 = arith.constant 0 : i32
    %c0_i32_0 = arith.constant 0 : i32
    %c0_i32_1 = arith.constant 0 : i32
    return %arg0, %c0_i32, %c0_i32_0 : i32, i32, i32
  }
}

</mosaic_0001>

<llo_original>
// kernel: conv_bn_relu.3
$region0: #{conv_bn_relu.3}
  #allocation0 [shape = 'u32[]', space=smem, size = 0x4, offset = 0x4, fixed_abs, tag = 'smem constant byte address 0x4 - core index']
  #allocation1 [shape = 'u32[144,128]{1,0:T(1,128)}', space=vmem, size = 0x12000, scoped, tag = 'internal scratch']
  %s0 = inlined_call_operand.vmem [shape: bf16[2,256,128], index: 0, kind: input, shape index: {}]
  %s1 = inlined_call_operand.vmem [shape: f32[1,1,128], index: 1, kind: input, shape index: {}]
  %s2 = inlined_call_operand.vmem [shape: f32[1,1,128], index: 2, kind: input, shape index: {}]
  %s3 = inlined_call_operand.vmem [shape: bf16[2,256,128], index: 3, kind: output, shape index: {}]
  %s4 = sld [smem:[#allocation0]]
  $region45: #{conv_bn_relu.3} parent=0
    _
  %s6 = ssub.s32 1, %s4
  %s7 = scalar_select 0, %s6, %s4
  loop: start=0, step=1, limit=4
  $region2: #{conv_bn_relu.3} parent=0 // loop_pre_header
    _
  $region3: #{conv_bn_relu.3} parent=0 // loop_header
    %s9 = sphi 0, %s13
    %p10 = scmp.ge.s32.totalorder %s9, 4
    %s19 = sphi 0, %s21
    %s22 = sphi 0, %s19
    %s23 = sphi 0, %s22
    %s39 = sphi 0, %s23
    %s43 = sphi 0, %s43
    %s45 = sphi 0, %s43
    %s46 = sphi 0, %s45
    %s60 = sphi 0, %s46
    %s64 = sphi 0, %s64
    %s66 = sphi 0, %s64
    %s67 = sphi 0, %s66
    %s81 = sphi 0, %s67
    %s87 = sphi 0, %s89
    %s90 = sphi 0, %s87
    %s91 = sphi 0, %s90
    %s107 = sphi 0, %s91
  $region4: #{conv_bn_relu.3} parent=0 // loop_header_branch
    %12 = sbr.rel (%p10) target = $region8
  $region5: #{conv_bn_relu.3} parent=0 // loop_body
    %s14 = ssub.s32 %s9, 1
    %s15 = ssub.s32 %s9, 2
    %s16 = sadd.s32 %s9, 1
    %s17 = ssub.s32 %s9, %s16
    %p18 = scmp.eq.s32.totalorder %s17, 0
    %s20 = sadd.s32 %s19, 1
    %s21 = scalar_select %p18, %s19, %s20
    %p24 = pneg %p18
    %p25 = scmp.eq.s32.totalorder %s9, 1
    %p26 = por %p24, %p25
    %p27 = scmp.ne.s32.totalorder %s19, %s22
    %p28 = scmp.eq.s32.totalorder %s9, 0
    %p29 = por %p27, %p28
    %p30 = scmp.ne.s32.totalorder %s19, %s22
    %p31 = scmp.eq.s32.totalorder %s14, 1
    %p32 = por %p30, %p31
    %p33 = scmp.ne.s32.totalorder %s22, %s23
    %p34 = scmp.eq.s32.totalorder %s14, 0
    %p35 = por %p33, %p34
    %p36 = scmp.ne.s32.totalorder %s22, %s23
    %p37 = scmp.eq.s32.totalorder %s15, 1
    %p38 = por %p36, %p37
    %p40 = scmp.ne.s32.totalorder %s23, %s39
    %p41 = scmp.eq.s32.totalorder %s15, 0
    %p42 = por %p40, %p41
    %s44 = sadd.s32 %s43, 1
    %p47 = scmp.eq.s32.totalorder %s9, 1
    %p48 = scmp.ne.s32.totalorder %s43, %s45
    %p49 = scmp.eq.s32.totalorder %s9, 0
    %p50 = por %p48, %p49
    %p51 = scmp.ne.s32.totalorder %s43, %s45
    %p52 = scmp.eq.s32.totalorder %s14, 1
    %p53 = por %p51, %p52
    %p54 = scmp.ne.s32.totalorder %s45, %s46
    %p55 = scmp.eq.s32.totalorder %s14, 0
    %p56 = por %p54, %p55
    %p57 = scmp.ne.s32.totalorder %s45, %s46
    %p58 = scmp.eq.s32.totalorder %s15, 1
    %p59 = por %p57, %p58
    %p61 = scmp.ne.s32.totalorder %s46, %s60
    %p62 = scmp.eq.s32.totalorder %s15, 0
    %p63 = por %p61, %p62
    %s65 = sadd.s32 %s64, 1
    %p68 = scmp.eq.s32.totalorder %s9, 1
    %p69 = scmp.ne.s32.totalorder %s64, %s66
    %p70 = scmp.eq.s32.totalorder %s9, 0
    %p71 = por %p69, %p70
    %p72 = scmp.ne.s32.totalorder %s64, %s66
    %p73 = scmp.eq.s32.totalorder %s14, 1
    %p74 = por %p72, %p73
    %p75 = scmp.ne.s32.totalorder %s66, %s67
    %p76 = scmp.eq.s32.totalorder %s14, 0
    %p77 = por %p75, %p76
    %p78 = scmp.ne.s32.totalorder %s66, %s67
    %p79 = scmp.eq.s32.totalorder %s15, 1
    %p80 = por %p78, %p79
    %p82 = scmp.ne.s32.totalorder %s67, %s81
    %p83 = scmp.eq.s32.totalorder %s15, 0
    %p84 = por %p82, %p83
    %s85 = ssub.s32 %s9, %s16
    %p86 = scmp.eq.s32.totalorder %s85, 0
    %s88 = sadd.s32 %s87, 1
    %s89 = scalar_select %p86, %s87, %s88
    %p92 = pneg %p86
    %p93 = scmp.eq.s32.totalorder %s9, 1
    %p94 = por %p92, %p93
    %p95 = scmp.ne.s32.totalorder %s87, %s90
    %p96 = scmp.eq.s32.totalorder %s9, 0
    %p97 = por %p95, %p96
    %p98 = scmp.ne.s32.totalorder %s87, %s90
    %p99 = scmp.eq.s32.totalorder %s14, 1
    %p100 = por %p98, %p99
    %p101 = scmp.ne.s32.totalorder %s90, %s91
    %p102 = scmp.eq.s32.totalorder %s14, 0
    %p103 = por %p101, %p102
    %p104 = scmp.ne.s32.totalorder %s90, %s91
    %p105 = scmp.eq.s32.totalorder %s15, 1
    %p106 = por %p104, %p105
    %p108 = scmp.ne.s32.totalorder %s91, %s107
    %p109 = scmp.eq.s32.totalorder %s15, 0
    %p110 = por %p108, %p109
    %p111 = scmp.le.s32.totalorder 1, %s9
    %p112 = scmp.lt.s32.totalorder %s9, 3
    %p113 = pnand %p111, %p112
    %p114 = pneg %p113
    // Predicated region
    $region9: #{conv_bn_relu.3} parent=5 // pred_check
      _
    $region10: #{conv_bn_relu.3} parent=5 // pred_check_branch
      %116 = sbr.rel (%p113) target = $region12
    $region11: #{conv_bn_relu.3} parent=5 // pred_region
      %s117 = ssub.s32 %s9, 1
      // Predicated region
      $region13: #{conv_bn_relu.3} parent=11 // pred_check
        %p118 = pneg %p56
      $region14: #{conv_bn_relu.3} parent=11 // pred_check_branch
        %120 = sbr.rel (%p118) target = $region16
      $region15: #{conv_bn_relu.3} parent=11 // pred_region
        _
      $region16: #{conv_bn_relu.3} parent=11 // pred_fallthru
        _
      // Predicated region
      $region17: #{conv_bn_relu.3} parent=11 // pred_check
        %p121 = pneg %p77
      $region18: #{conv_bn_relu.3} parent=11 // pred_check_branch
        %123 = sbr.rel (%p121) target = $region20
      $region19: #{conv_bn_relu.3} parent=11 // pred_region
        _
      $region20: #{conv_bn_relu.3} parent=11 // pred_fallthru
        _
    $region12: #{conv_bn_relu.3} parent=5 // pred_fallthru
      _
    %p124 = scmp.lt.s32.totalorder %s9, 2
    // Predicated region
    $region21: #{conv_bn_relu.3} parent=5 // pred_check
      %p125 = pneg %p124
    $region22: #{conv_bn_relu.3} parent=5 // pred_check_branch
      %127 = sbr.rel (%p125) target = $region24
    $region23: #{conv_bn_relu.3} parent=5 // pred_region
      // Predicated region
      $region25: #{conv_bn_relu.3} parent=23 // pred_check
        %p128 = pneg %p29
      $region26: #{conv_bn_relu.3} parent=23 // pred_check_branch
        %130 = sbr.rel (%p128) target = $region28
      $region27: #{conv_bn_relu.3} parent=23 // pred_region
        %p131 = scmp.lt.s32.totalorder %s9, 1
        %s132 = scalar_select %p131, %s9, 1
        %s133 = smul.addr %s132, 32
        %s134 = smul.addr %s133, 4
        %s135 = scalar_lea.vmem %s0, %s134
      $region28: #{conv_bn_relu.3} parent=23 // pred_fallthru
        _
    $region24: #{conv_bn_relu.3} parent=5 // pred_fallthru
      _
    %p136 = scmp.le.s32.totalorder 1, %s9
    %p137 = scmp.lt.s32.totalorder %s9, 3
    %p138 = pnand %p136, %p137
    %p139 = pneg %p138
    // Predicated region
    $region29: #{conv_bn_relu.3} parent=5 // pred_check
      _
    $region30: #{conv_bn_relu.3} parent=5 // pred_check_branch
      %141 = sbr.rel (%p138) target = $region32
    $region31: #{conv_bn_relu.3} parent=5 // pred_region
      %s142 = ssub.s32 %s9, 1
      %p143 = scmp.lt.s32.totalorder %s14, 1
      %s144 = scalar_select %p143, %s14, 1
      %s145 = smul.addr %s144, 32
      %s146 = smul.addr %s145, 4
      %s147 = scalar_lea.vmem %s0, %s146
      %p148 = pneg %p35
      %p149 = pneg %p32
      %p150 = pneg %p56
      %p151 = pneg %p53
      %p152 = pneg %p77
      %p153 = pneg %p74
      %p154 = pneg %p103
      %p155 = pneg %p100
      %p156 = scmp.lt.s32.totalorder %s14, 1
      %s157 = scalar_select %p156, %s14, 1
      %s158 = smul.addr %s157, 32
      %s159 = smul.addr %s158, 4
      %s160 = scalar_lea.vmem %s3, %s159
      %p161 = scmp.lt.s32.totalorder %s14, 1
      %s162 = scalar_select %p161, %s14, 1
      %s163 = smul.addr %s162, 32
      %s164 = smul.addr %s163, 4
      %s165 = scalar_lea.vmem %s0, %s164
      %p166 = scmp.lt.s32.totalorder %s14, 1
      %s167 = scalar_select %p166, %s14, 1
      %s168 = smul.addr %s167, 32
      %s169 = smul.addr %s168, 4
      %s170 = scalar_lea.vmem %s3, %s169
      %v171 = vld [vmem:[%s165] sm:$0xf]
      %v172 = vld [vmem:[%s165 + $0x4] sm:$0xf]
      %v173 = vld [vmem:[%s165 + $0x8] sm:$0xf]
      %v174 = vld [vmem:[%s165 + $0xc] sm:$0xf]
      %v175 = vld [vmem:[%s165 + $0x10] sm:$0xf]
      %v176 = vld [vmem:[%s165 + $0x14] sm:$0xf]
      %v177 = vld [vmem:[%s165 + $0x18] sm:$0xf]
      %v178 = vld [vmem:[%s165 + $0x1c] sm:$0xf]
      %v179 = vld [vmem:[%s165 + $0x20] sm:$0xf]
      %v180 = vld [vmem:[%s165 + $0x24] sm:$0xf]
      %v181 = vld [vmem:[%s165 + $0x28] sm:$0xf]
      %v182 = vld [vmem:[%s165 + $0x2c] sm:$0xf]
      %v183 = vld [vmem:[%s165 + $0x30] sm:$0xf]
      %v184 = vld [vmem:[%s165 + $0x34] sm:$0xf]
      %v185 = vld [vmem:[%s165 + $0x38] sm:$0xf]
      %v186 = vld [vmem:[%s165 + $0x3c] sm:$0xf]
      %v187 = vld [vmem:[%s165 + $0x40] sm:$0xf]
      %v188 = vld [vmem:[%s165 + $0x44] sm:$0xf]
      %v189 = vld [vmem:[%s165 + $0x48] sm:$0xf]
      %v190 = vld [vmem:[%s165 + $0x4c] sm:$0xf]
      %v191 = vld [vmem:[%s165 + $0x50] sm:$0xf]
      %v192 = vld [vmem:[%s165 + $0x54] sm:$0xf]
      %v193 = vld [vmem:[%s165 + $0x58] sm:$0xf]
      %v194 = vld [vmem:[%s165 + $0x5c] sm:$0xf]
      %v195 = vld [vmem:[%s165 + $0x60] sm:$0xf]
      %v196 = vld [vmem:[%s165 + $0x64] sm:$0xf]
      %v197 = vld [vmem:[%s165 + $0x68] sm:$0xf]
      %v198 = vld [vmem:[%s165 + $0x6c] sm:$0xf]
      %v199 = vld [vmem:[%s165 + $0x70] sm:$0xf]
      %v200 = vld [vmem:[%s165 + $0x74] sm:$0xf]
      %v201 = vld [vmem:[%s165 + $0x78] sm:$0xf]
      %v202 = vld [vmem:[%s165 + $0x7c] sm:$0xf]
      %v203 = vunpack.c.l.bf16 %v171
      %v204 = vunpack.c.l.bf16 %v172
      %v205 = vunpack.c.l.bf16 %v173
      %v206 = vunpack.c.l.bf16 %v174
      %v207 = vunpack.c.l.bf16 %v175
      %v208 = vunpack.c.l.bf16 %v176
      %v209 = vunpack.c.l.bf16 %v177
      %v210 = vunpack.c.l.bf16 %v178
      %v211 = vunpack.c.l.bf16 %v179
      %v212 = vunpack.c.l.bf16 %v180
      %v213 = vunpack.c.l.bf16 %v181
      %v214 = vunpack.c.l.bf16 %v182
      %v215 = vunpack.c.l.bf16 %v183
      %v216 = vunpack.c.l.bf16 %v184
      %v217 = vunpack.c.l.bf16 %v185
      %v218 = vunpack.c.l.bf16 %v186
      %v219 = vunpack.c.l.bf16 %v187
      %v220 = vunpack.c.l.bf16 %v188
      %v221 = vunpack.c.l.bf16 %v189
      %v222 = vunpack.c.l.bf16 %v190
      %v223 = vunpack.c.l.bf16 %v191
      %v224 = vunpack.c.l.bf16 %v192
      %v225 = vunpack.c.l.bf16 %v193
      %v226 = vunpack.c.l.bf16 %v194
      %v227 = vunpack.c.l.bf16 %v195
      %v228 = vunpack.c.l.bf16 %v196
      %v229 = vunpack.c.l.bf16 %v197
      %v230 = vunpack.c.l.bf16 %v198
      %v231 = vunpack.c.l.bf16 %v199
      %v232 = vunpack.c.l.bf16 %v200
      %v233 = vunpack.c.l.bf16 %v201
      %v234 = vunpack.c.l.bf16 %v202
      %v235 = vld [vmem:[%s1] sm:$0x1]
      %v237 = vlaneseq
      %v238 = vshrl.u32 %v237, 7
      %v239 = vsub.s32 0, %v238
      %v240 = vrot.slane %v235, %v239
      %v242 = vmul.f32 %v203, %v240
      %v243 = vmul.f32 %v204, %v240
      %v244 = vmul.f32 %v205, %v240
      %v245 = vmul.f32 %v206, %v240
      %v246 = vmul.f32 %v207, %v240
      %v247 = vmul.f32 %v208, %v240
      %v248 = vmul.f32 %v209, %v240
      %v249 = vmul.f32 %v210, %v240
      %v250 = vmul.f32 %v211, %v240
      %v251 = vmul.f32 %v212, %v240
      %v252 = vmul.f32 %v213, %v240
      %v253 = vmul.f32 %v214, %v240
      %v254 = vmul.f32 %v215, %v240
      %v255 = vmul.f32 %v216, %v240
      %v256 = vmul.f32 %v217, %v240
      %v257 = vmul.f32 %v218, %v240
      %v258 = vmul.f32 %v219, %v240
      %v259 = vmul.f32 %v220, %v240
      %v260 = vmul.f32 %v221, %v240
      %v261 = vmul.f32 %v222, %v240
      %v262 = vmul.f32 %v223, %v240
      %v263 = vmul.f32 %v224, %v240
      %v264 = vmul.f32 %v225, %v240
      %v265 = vmul.f32 %v226, %v240
      %v266 = vmul.f32 %v227, %v240
      %v267 = vmul.f32 %v228, %v240
      %v268 = vmul.f32 %v229, %v240
      %v269 = vmul.f32 %v230, %v240
      %v270 = vmul.f32 %v231, %v240
      %v271 = vmul.f32 %v232, %v240
      %v272 = vmul.f32 %v233, %v240
      %v273 = vmul.f32 %v234, %v240
      %v274 = vld [vmem:[%s2] sm:$0x1]
      %v276 = vlaneseq
      %v277 = vshrl.u32 %v276, 7
      %v278 = vsub.s32 0, %v277
      %v279 = vrot.slane %v274, %v278
      %v281 = vadd.f32 %v242, %v279
      %v282 = vadd.f32 %v243, %v279
      %v283 = vadd.f32 %v244, %v279
      %v284 = vadd.f32 %v245, %v279
      %v285 = vadd.f32 %v246, %v279
      %v286 = vadd.f32 %v247, %v279
      %v287 = vadd.f32 %v248, %v279
      %v288 = vadd.f32 %v249, %v279
      %v289 = vadd.f32 %v250, %v279
      %v290 = vadd.f32 %v251, %v279
      %v291 = vadd.f32 %v252, %v279
      %v292 = vadd.f32 %v253, %v279
      %v293 = vadd.f32 %v254, %v279
      %v294 = vadd.f32 %v255, %v279
      %v295 = vadd.f32 %v256, %v279
      %v296 = vadd.f32 %v257, %v279
      %v297 = vadd.f32 %v258, %v279
      %v298 = vadd.f32 %v259, %v279
      %v299 = vadd.f32 %v260, %v279
      %v300 = vadd.f32 %v261, %v279
      %v301 = vadd.f32 %v262, %v279
      %v302 = vadd.f32 %v263, %v279
      %v303 = vadd.f32 %v264, %v279
      %v304 = vadd.f32 %v265, %v279
      %v305 = vadd.f32 %v266, %v279
      %v306 = vadd.f32 %v267, %v279
      %v307 = vadd.f32 %v268, %v279
      %v308 = vadd.f32 %v269, %v279
      %v309 = vadd.f32 %v270, %v279
      %v310 = vadd.f32 %v271, %v279
      %v311 = vadd.f32 %v272, %v279
      %v312 = vadd.f32 %v273, %v279
      %v313 = vmax.f32 %v281, 0.0
      %v314 = vmax.f32 %v282, 0.0
      %v315 = vmax.f32 %v283, 0.0
      %v316 = vmax.f32 %v284, 0.0
      %v317 = vmax.f32 %v285, 0.0
      %v318 = vmax.f32 %v286, 0.0
      %v319 = vmax.f32 %v287, 0.0
      %v320 = vmax.f32 %v288, 0.0
      %v321 = vmax.f32 %v289, 0.0
      %v322 = vmax.f32 %v290, 0.0
      %v323 = vmax.f32 %v291, 0.0
      %v324 = vmax.f32 %v292, 0.0
      %v325 = vmax.f32 %v293, 0.0
      %v326 = vmax.f32 %v294, 0.0
      %v327 = vmax.f32 %v295, 0.0
      %v328 = vmax.f32 %v296, 0.0
      %v329 = vmax.f32 %v297, 0.0
      %v330 = vmax.f32 %v298, 0.0
      %v331 = vmax.f32 %v299, 0.0
      %v332 = vmax.f32 %v300, 0.0
      %v333 = vmax.f32 %v301, 0.0
      %v334 = vmax.f32 %v302, 0.0
      %v335 = vmax.f32 %v303, 0.0
      %v336 = vmax.f32 %v304, 0.0
      %v337 = vmax.f32 %v305, 0.0
      %v338 = vmax.f32 %v306, 0.0
      %v339 = vmax.f32 %v307, 0.0
      %v340 = vmax.f32 %v308, 0.0
      %v341 = vmax.f32 %v309, 0.0
      %v342 = vmax.f32 %v310, 0.0
      %v343 = vmax.f32 %v311, 0.0
      %v344 = vmax.f32 %v312, 0.0
      %v345 = vpack.c.bf16 %v314, %v313
      %v346 = vpack.c.bf16 %v316, %v315
      %v347 = vpack.c.bf16 %v318, %v317
      %v348 = vpack.c.bf16 %v320, %v319
      %v349 = vpack.c.bf16 %v322, %v321
      %v350 = vpack.c.bf16 %v324, %v323
      %v351 = vpack.c.bf16 %v326, %v325
      %v352 = vpack.c.bf16 %v328, %v327
      %v353 = vpack.c.bf16 %v330, %v329
      %v354 = vpack.c.bf16 %v332, %v331
      %v355 = vpack.c.bf16 %v334, %v333
      %v356 = vpack.c.bf16 %v336, %v335
      %v357 = vpack.c.bf16 %v338, %v337
      %v358 = vpack.c.bf16 %v340, %v339
      %v359 = vpack.c.bf16 %v342, %v341
      %v360 = vpack.c.bf16 %v344, %v343
      %v377 = vunpack.c.l.b16 %v345
      %v378 = vunpack.c.h.b16 %v345
      %v379 = vunpack.c.l.b16 %v346
      %v380 = vunpack.c.h.b16 %v346
      %v381 = vunpack.c.l.b16 %v347
      %v382 = vunpack.c.h.b16 %v347
      %v383 = vunpack.c.l.b16 %v348
      %v384 = vunpack.c.h.b16 %v348
      %v385 = vunpack.c.l.b16 %v349
      %v386 = vunpack.c.h.b16 %v349
      %v387 = vunpack.c.l.b16 %v350
      %v388 = vunpack.c.h.b16 %v350
      %v389 = vunpack.c.l.b16 %v351
      %v390 = vunpack.c.h.b16 %v351
      %v391 = vunpack.c.l.b16 %v352
      %v392 = vunpack.c.h.b16 %v352
      %v393 = vunpack.c.l.b16 %v353
      %v394 = vunpack.c.h.b16 %v353
      %v395 = vunpack.c.l.b16 %v354
      %v396 = vunpack.c.h.b16 %v354
      %v397 = vunpack.c.l.b16 %v355
      %v398 = vunpack.c.h.b16 %v355
      %v399 = vunpack.c.l.b16 %v356
      %v400 = vunpack.c.h.b16 %v356
      %v401 = vunpack.c.l.b16 %v357
      %v402 = vunpack.c.h.b16 %v357
      %v403 = vunpack.c.l.b16 %v358
      %v404 = vunpack.c.h.b16 %v358
      %v405 = vunpack.c.l.b16 %v359
      %v406 = vunpack.c.h.b16 %v359
      %v407 = vunpack.c.l.b16 %v360
      %v408 = vunpack.c.h.b16 %v360
      %v409 = vpack.c.b16 %v377, %v377
      %v410 = vpack.c.b16 %v378, %v378
      %v411 = vpack.c.b16 %v379, %v379
      %v412 = vpack.c.b16 %v380, %v380
      %v413 = vpack.c.b16 %v381, %v381
      %v414 = vpack.c.b16 %v382, %v382
      %v415 = vpack.c.b16 %v383, %v383
      %v416 = vpack.c.b16 %v384, %v384
      %v417 = vpack.c.b16 %v385, %v385
      %v418 = vpack.c.b16 %v386, %v386
      %v419 = vpack.c.b16 %v387, %v387
      %v420 = vpack.c.b16 %v388, %v388
      %v421 = vpack.c.b16 %v389, %v389
      %v422 = vpack.c.b16 %v390, %v390
      %v423 = vpack.c.b16 %v391, %v391
      %v424 = vpack.c.b16 %v392, %v392
      %v425 = vpack.c.b16 %v393, %v393
      %v426 = vpack.c.b16 %v394, %v394
      %v427 = vpack.c.b16 %v395, %v395
      %v428 = vpack.c.b16 %v396, %v396
      %v429 = vpack.c.b16 %v397, %v397
      %v430 = vpack.c.b16 %v398, %v398
      %v431 = vpack.c.b16 %v399, %v399
      %v432 = vpack.c.b16 %v400, %v400
      %v433 = vpack.c.b16 %v401, %v401
      %v434 = vpack.c.b16 %v402, %v402
      %v435 = vpack.c.b16 %v403, %v403
      %v436 = vpack.c.b16 %v404, %v404
      %v437 = vpack.c.b16 %v405, %v405
      %v438 = vpack.c.b16 %v406, %v406
      %v439 = vpack.c.b16 %v407, %v407
      %v440 = vpack.c.b16 %v408, %v408
      %473 = vst [vmem:[%s170] sm:$0xf] %v409
      %474 = vst [vmem:[%s170 + $0x4] sm:$0xf] %v410
      %475 = vst [vmem:[%s170 + $0x8] sm:$0xf] %v411
      %476 = vst [vmem:[%s170 + $0xc] sm:$0xf] %v412
      %477 = vst [vmem:[%s170 + $0x10] sm:$0xf] %v413
      %478 = vst [vmem:[%s170 + $0x14] sm:$0xf] %v414
      %479 = vst [vmem:[%s170 + $0x18] sm:$0xf] %v415
      %480 = vst [vmem:[%s170 + $0x1c] sm:$0xf] %v416
      %481 = vst [vmem:[%s170 + $0x20] sm:$0xf] %v417
      %482 = vst [vmem:[%s170 + $0x24] sm:$0xf] %v418
      %483 = vst [vmem:[%s170 + $0x28] sm:$0xf] %v419
      %484 = vst [vmem:[%s170 + $0x2c] sm:$0xf] %v420
      %485 = vst [vmem:[%s170 + $0x30] sm:$0xf] %v421
      %486 = vst [vmem:[%s170 + $0x34] sm:$0xf] %v422
      %487 = vst [vmem:[%s170 + $0x38] sm:$0xf] %v423
      %488 = vst [vmem:[%s170 + $0x3c] sm:$0xf] %v424
      %489 = vst [vmem:[%s170 + $0x40] sm:$0xf] %v425
      %490 = vst [vmem:[%s170 + $0x44] sm:$0xf] %v426
      %491 = vst [vmem:[%s170 + $0x48] sm:$0xf] %v427
      %492 = vst [vmem:[%s170 + $0x4c] sm:$0xf] %v428
      %493 = vst [vmem:[%s170 + $0x50] sm:$0xf] %v429
      %494 = vst [vmem:[%s170 + $0x54] sm:$0xf] %v430
      %495 = vst [vmem:[%s170 + $0x58] sm:$0xf] %v431
      %496 = vst [vmem:[%s170 + $0x5c] sm:$0xf] %v432
      %497 = vst [vmem:[%s170 + $0x60] sm:$0xf] %v433
      %498 = vst [vmem:[%s170 + $0x64] sm:$0xf] %v434
      %499 = vst [vmem:[%s170 + $0x68] sm:$0xf] %v435
      %500 = vst [vmem:[%s170 + $0x6c] sm:$0xf] %v436
      %501 = vst [vmem:[%s170 + $0x70] sm:$0xf] %v437
      %502 = vst [vmem:[%s170 + $0x74] sm:$0xf] %v438
      %503 = vst [vmem:[%s170 + $0x78] sm:$0xf] %v439
      %504 = vst [vmem:[%s170 + $0x7c] sm:$0xf] %v440
      %p505 = scmp.lt.s32.totalorder %s14, 1
      %s506 = scalar_select %p505, %s14, 1
      %s507 = smul.addr %s506, 32
      %s508 = smul.addr %s507, 4
      %s509 = scalar_lea.vmem %s3, %s508
      // Predicated region
      $region33: #{conv_bn_relu.3} parent=31 // pred_check
        %p510 = pneg %p100
      $region34: #{conv_bn_relu.3} parent=31 // pred_check_branch
        %512 = sbr.rel (%p510) target = $region36
      $region35: #{conv_bn_relu.3} parent=31 // pred_region
        _
      $region36: #{conv_bn_relu.3} parent=31 // pred_fallthru
        _
    $region32: #{conv_bn_relu.3} parent=5 // pred_fallthru
      _
    %p513 = scmp.le.s32.totalorder 2, %s9
    // Predicated region
    $region37: #{conv_bn_relu.3} parent=5 // pred_check
      %p514 = pneg %p513
    $region38: #{conv_bn_relu.3} parent=5 // pred_check_branch
      %516 = sbr.rel (%p514) target = $region40
    $region39: #{conv_bn_relu.3} parent=5 // pred_region
      %s517 = ssub.s32 %s9, 2
      // Predicated region
      $region41: #{conv_bn_relu.3} parent=39 // pred_check
        %p518 = pneg %p106
      $region42: #{conv_bn_relu.3} parent=39 // pred_check_branch
        %520 = sbr.rel (%p518) target = $region44
      $region43: #{conv_bn_relu.3} parent=39 // pred_region
        %p521 = scmp.lt.s32.totalorder %s15, 1
        %s522 = scalar_select %p521, %s15, 1
        %s523 = smul.addr %s522, 32
        %s524 = smul.addr %s523, 4
        %s525 = scalar_lea.vmem %s3, %s524
      $region44: #{conv_bn_relu.3} parent=39 // pred_fallthru
        _
    $region40: #{conv_bn_relu.3} parent=5 // pred_fallthru
      _
  $region6: #{conv_bn_relu.3} parent=0 // loop_footer
    %s13 = sadd.s32 1, %s9
  $region7: #{conv_bn_relu.3} parent=0 // loop_footer_branch
    %8 = sbr.rel target = $region3
  $region8: #{conv_bn_relu.3} parent=0 // loop_exit
    _

// kernel: conv_bn_relu.2
$region0: #{conv_bn_relu.2}
  #allocation0 [shape = 'u32[]', space=smem, size = 0x4, offset = 0x4, fixed_abs, tag = 'smem constant byte address 0x4 - core index']
  #allocation1 [shape = 'u32[144,128]{1,0:T(1,128)}', space=vmem, size = 0x12000, scoped, tag = 'internal scratch']
  %s0 = inlined_call_operand.vmem [shape: bf16[2,18,18,128], index: 0, kind: input, shape index: {}]
  %s1 = inlined_call_operand.vmem [shape: bf16[9,128,128], index: 1, kind: input, shape index: {}]
  %s2 = inlined_call_operand.vmem [shape: bf16[2,256,128], index: 2, kind: output, shape index: {0}]
  %s3 = inlined_call_operand.vmem [shape: f32[2,1,128], index: 3, kind: output, shape index: {1}]
  %s4 = inlined_call_operand.vmem [shape: f32[2,1,128], index: 4, kind: output, shape index: {2}]
  %5 = xla_tuple %s2, %s3, %s4
  %s6 = sld [smem:[#allocation0]]
  $region57: #{conv_bn_relu.2} parent=0
    _
  %s8 = ssub.s32 1, %s6
  %s9 = scalar_select 0, %s8, %s6
  loop: start=0, step=1, limit=4
  $region2: #{conv_bn_relu.2} parent=0 // loop_pre_header
    _
  $region3: #{conv_bn_relu.2} parent=0 // loop_header
    %s11 = sphi 0, %s15
    %p12 = scmp.ge.s32.totalorder %s11, 4
    %s21 = sphi 0, %s23
    %s24 = sphi 0, %s21
    %s25 = sphi 0, %s24
    %s41 = sphi 0, %s25
    %s45 = sphi 0, %s45
    %s47 = sphi 0, %s45
    %s48 = sphi 0, %s47
    %s62 = sphi 0, %s48
    %s68 = sphi 0, %s70
    %s71 = sphi 0, %s68
    %s72 = sphi 0, %s71
    %s88 = sphi 0, %s72
    %s94 = sphi 0, %s96
    %s97 = sphi 0, %s94
    %s98 = sphi 0, %s97
    %s114 = sphi 0, %s98
    %s120 = sphi 0, %s122
    %s123 = sphi 0, %s120
    %s124 = sphi 0, %s123
    %s140 = sphi 0, %s124
  $region4: #{conv_bn_relu.2} parent=0 // loop_header_branch
    %14 = sbr.rel (%p12) target = $region8
  $region5: #{conv_bn_relu.2} parent=0 // loop_body
    %s16 = ssub.s32 %s11, 1
    %s17 = ssub.s32 %s11, 2
    %s18 = sadd.s32 %s11, 1
    %s19 = ssub.s32 %s11, %s18
    %p20 = scmp.eq.s32.totalorder %s19, 0
    %s22 = sadd.s32 %s21, 1
    %s23 = scalar_select %p20, %s21, %s22
    %p26 = pneg %p20
    %p27 = scmp.eq.s32.totalorder %s11, 1
    %p28 = por %p26, %p27
    %p29 = scmp.ne.s32.totalorder %s21, %s24
    %p30 = scmp.eq.s32.totalorder %s11, 0
    %p31 = por %p29, %p30
    %p32 = scmp.ne.s32.totalorder %s21, %s24
    %p33 = scmp.eq.s32.totalorder %s16, 1
    %p34 = por %p32, %p33
    %p35 = scmp.ne.s32.totalorder %s24, %s25
    %p36 = scmp.eq.s32.totalorder %s16, 0
    %p37 = por %p35, %p36
    %p38 = scmp.ne.s32.totalorder %s24, %s25
    %p39 = scmp.eq.s32.totalorder %s17, 1
    %p40 = por %p38, %p39
    %p42 = scmp.ne.s32.totalorder %s25, %s41
    %p43 = scmp.eq.s32.totalorder %s17, 0
    %p44 = por %p42, %p43
    %s46 = sadd.s32 %s45, 1
    %p49 = scmp.eq.s32.totalorder %s11, 1
    %p50 = scmp.ne.s32.totalorder %s45, %s47
    %p51 = scmp.eq.s32.totalorder %s11, 0
    %p52 = por %p50, %p51
    %p53 = scmp.ne.s32.totalorder %s45, %s47
    %p54 = scmp.eq.s32.totalorder %s16, 1
    %p55 = por %p53, %p54
    %p56 = scmp.ne.s32.totalorder %s47, %s48
    %p57 = scmp.eq.s32.totalorder %s16, 0
    %p58 = por %p56, %p57
    %p59 = scmp.ne.s32.totalorder %s47, %s48
    %p60 = scmp.eq.s32.totalorder %s17, 1
    %p61 = por %p59, %p60
    %p63 = scmp.ne.s32.totalorder %s48, %s62
    %p64 = scmp.eq.s32.totalorder %s17, 0
    %p65 = por %p63, %p64
    %s66 = ssub.s32 %s11, %s18
    %p67 = scmp.eq.s32.totalorder %s66, 0
    %s69 = sadd.s32 %s68, 1
    %s70 = scalar_select %p67, %s68, %s69
    %p73 = pneg %p67
    %p74 = scmp.eq.s32.totalorder %s11, 1
    %p75 = por %p73, %p74
    %p76 = scmp.ne.s32.totalorder %s68, %s71
    %p77 = scmp.eq.s32.totalorder %s11, 0
    %p78 = por %p76, %p77
    %p79 = scmp.ne.s32.totalorder %s68, %s71
    %p80 = scmp.eq.s32.totalorder %s16, 1
    %p81 = por %p79, %p80
    %p82 = scmp.ne.s32.totalorder %s71, %s72
    %p83 = scmp.eq.s32.totalorder %s16, 0
    %p84 = por %p82, %p83
    %p85 = scmp.ne.s32.totalorder %s71, %s72
    %p86 = scmp.eq.s32.totalorder %s17, 1
    %p87 = por %p85, %p86
    %p89 = scmp.ne.s32.totalorder %s72, %s88
    %p90 = scmp.eq.s32.totalorder %s17, 0
    %p91 = por %p89, %p90
    %s92 = ssub.s32 %s11, %s18
    %p93 = scmp.eq.s32.totalorder %s92, 0
    %s95 = sadd.s32 %s94, 1
    %s96 = scalar_select %p93, %s94, %s95
    %p99 = pneg %p93
    %p100 = scmp.eq.s32.totalorder %s11, 1
    %p101 = por %p99, %p100
    %p102 = scmp.ne.s32.totalorder %s94, %s97
    %p103 = scmp.eq.s32.totalorder %s11, 0
    %p104 = por %p102, %p103
    %p105 = scmp.ne.s32.totalorder %s94, %s97
    %p106 = scmp.eq.s32.totalorder %s16, 1
    %p107 = por %p105, %p106
    %p108 = scmp.ne.s32.totalorder %s97, %s98
    %p109 = scmp.eq.s32.totalorder %s16, 0
    %p110 = por %p108, %p109
    %p111 = scmp.ne.s32.totalorder %s97, %s98
    %p112 = scmp.eq.s32.totalorder %s17, 1
    %p113 = por %p111, %p112
    %p115 = scmp.ne.s32.totalorder %s98, %s114
    %p116 = scmp.eq.s32.totalorder %s17, 0
    %p117 = por %p115, %p116
    %s118 = ssub.s32 %s11, %s18
    %p119 = scmp.eq.s32.totalorder %s118, 0
    %s121 = sadd.s32 %s120, 1
    %s122 = scalar_select %p119, %s120, %s121
    %p125 = pneg %p119
    %p126 = scmp.eq.s32.totalorder %s11, 1
    %p127 = por %p125, %p126
    %p128 = scmp.ne.s32.totalorder %s120, %s123
    %p129 = scmp.eq.s32.totalorder %s11, 0
    %p130 = por %p128, %p129
    %p131 = scmp.ne.s32.totalorder %s120, %s123
    %p132 = scmp.eq.s32.totalorder %s16, 1
    %p133 = por %p131, %p132
    %p134 = scmp.ne.s32.totalorder %s123, %s124
    %p135 = scmp.eq.s32.totalorder %s16, 0
    %p136 = por %p134, %p135
    %p137 = scmp.ne.s32.totalorder %s123, %s124
    %p138 = scmp.eq.s32.totalorder %s17, 1
    %p139 = por %p137, %p138
    %p141 = scmp.ne.s32.totalorder %s124, %s140
    %p142 = scmp.eq.s32.totalorder %s17, 0
    %p143 = por %p141, %p142
    %p144 = scmp.le.s32.totalorder 1, %s11
    %p145 = scmp.lt.s32.totalorder %s11, 3
    %p146 = pnand %p144, %p145
    %p147 = pneg %p146
    // Predicated region
    $region9: #{conv_bn_relu.2} parent=5 // pred_check
      _
    $region10: #{conv_bn_relu.2} parent=5 // pred_check_branch
      %149 = sbr.rel (%p146) target = $region12
    $region11: #{conv_bn_relu.2} parent=5 // pred_region
      %s150 = ssub.s32 %s11, 1
      // Predicated region
      $region13: #{conv_bn_relu.2} parent=11 // pred_check
        %p151 = pneg %p58
      $region14: #{conv_bn_relu.2} parent=11 // pred_check_branch
        %153 = sbr.rel (%p151) target = $region16
      $region15: #{conv_bn_relu.2} parent=11 // pred_region
        _
      $region16: #{conv_bn_relu.2} parent=11 // pred_fallthru
        _
    $region12: #{conv_bn_relu.2} parent=5 // pred_fallthru
      _
    %p154 = scmp.lt.s32.totalorder %s11, 2
    // Predicated region
    $region17: #{conv_bn_relu.2} parent=5 // pred_check
      %p155 = pneg %p154
    $region18: #{conv_bn_relu.2} parent=5 // pred_check_branch
      %157 = sbr.rel (%p155) target = $region20
    $region19: #{conv_bn_relu.2} parent=5 // pred_region
      // Predicated region
      $region21: #{conv_bn_relu.2} parent=19 // pred_check
        %p158 = pneg %p31
      $region22: #{conv_bn_relu.2} parent=19 // pred_check_branch
        %160 = sbr.rel (%p158) target = $region24
      $region23: #{conv_bn_relu.2} parent=19 // pred_region
        %p161 = scmp.lt.s32.totalorder %s11, 1
        %s162 = scalar_select %p161, %s11, 1
        %s163 = smul.addr %s162, 54
        %s164 = smul.addr %s163, 4
        %s165 = scalar_lea.vmem %s0, %s164
      $region24: #{conv_bn_relu.2} parent=19 // pred_fallthru
        _
    $region20: #{conv_bn_relu.2} parent=5 // pred_fallthru
      _
    %p166 = scmp.le.s32.totalorder 1, %s11
    %p167 = scmp.lt.s32.totalorder %s11, 3
    %p168 = pnand %p166, %p167
    %p169 = pneg %p168
    // Predicated region
    $region25: #{conv_bn_relu.2} parent=5 // pred_check
      _
    $region26: #{conv_bn_relu.2} parent=5 // pred_check_branch
      %171 = sbr.rel (%p168) target = $region28
    $region27: #{conv_bn_relu.2} parent=5 // pred_region
      %s172 = ssub.s32 %s11, 1
      %p173 = scmp.lt.s32.totalorder %s16, 1
      %s174 = scalar_select %p173, %s16, 1
      %s175 = smul.addr %s174, 54
      %s176 = smul.addr %s175, 4
      %s177 = scalar_lea.vmem %s0, %s176
      %p178 = pneg %p37
      %p179 = pneg %p34
      %p180 = pneg %p58
      %p181 = pneg %p55
      %p182 = pneg %p84
      %p183 = pneg %p81
      %p184 = scmp.lt.s32.totalorder %s16, 1
      %s185 = scalar_select %p184, %s16, 1
      %s186 = smul.addr %s185, 32
      %s187 = smul.addr %s186, 4
      %s188 = scalar_lea.vmem %s2, %s187
      %p189 = pneg %p110
      %p190 = pneg %p107
      %p191 = scmp.lt.s32.totalorder %s16, 1
      %s192 = scalar_select %p191, %s16, 1
      %s193 = scalar_lea.vmem %s3, %s192
      %p194 = pneg %p136
      %p195 = pneg %p133
      %p196 = scmp.lt.s32.totalorder %s16, 1
      %s197 = scalar_select %p196, %s16, 1
      %s198 = scalar_lea.vmem %s4, %s197
      %p199 = scmp.lt.s32.totalorder %s16, 1
      %s200 = scalar_select %p199, %s16, 1
      %s201 = smul.addr %s200, 54
      %s202 = smul.addr %s201, 4
      %s203 = scalar_lea.vmem %s0, %s202
      %p204 = scmp.lt.s32.totalorder %s16, 1
      %s205 = scalar_select %p204, %s16, 1
      %s206 = smul.addr %s205, 32
      %s207 = smul.addr %s206, 4
      %s208 = scalar_lea.vmem %s2, %s207
      %p209 = scmp.lt.s32.totalorder %s16, 1
      %s210 = scalar_select %p209, %s16, 1
      %s211 = scalar_lea.vmem %s3, %s210
      %p212 = scmp.lt.s32.totalorder %s16, 1
      %s213 = scalar_select %p212, %s16, 1
      %s214 = scalar_lea.vmem %s4, %s213
      %v216 = vld [vmem:[%s203] sm:$0xf]
      %v217 = vld [vmem:[%s203 + $0x4] sm:$0xf]
      %v218 = vld [vmem:[%s203 + $0x8] sm:$0x1]
      %v219 = vld [vmem:[%s203 + $0xc] sm:$0xf]
      %v220 = vld [vmem:[%s203 + $0x10] sm:$0xf]
      %v221 = vld [vmem:[%s203 + $0x14] sm:$0x1]
      %v222 = vld [vmem:[%s203 + $0x18] sm:$0xf]
      %v223 = vld [vmem:[%s203 + $0x1c] sm:$0xf]
      %v224 = vld [vmem:[%s203 + $0x20] sm:$0x1]
      %v225 = vld [vmem:[%s203 + $0x24] sm:$0xf]
      %v226 = vld [vmem:[%s203 + $0x28] sm:$0xf]
      %v227 = vld [vmem:[%s203 + $0x2c] sm:$0x1]
      %v228 = vld [vmem:[%s203 + $0x30] sm:$0xf]
      %v229 = vld [vmem:[%s203 + $0x34] sm:$0xf]
      %v230 = vld [vmem:[%s203 + $0x38] sm:$0x1]
      %v231 = vld [vmem:[%s203 + $0x3c] sm:$0xf]
      %v232 = vld [vmem:[%s203 + $0x40] sm:$0xf]
      %v233 = vld [vmem:[%s203 + $0x44] sm:$0x1]
      %v234 = vld [vmem:[%s203 + $0x48] sm:$0xf]
      %v235 = vld [vmem:[%s203 + $0x4c] sm:$0xf]
      %v236 = vld [vmem:[%s203 + $0x50] sm:$0x1]
      %v237 = vld [vmem:[%s203 + $0x54] sm:$0xf]
      %v238 = vld [vmem:[%s203 + $0x58] sm:$0xf]
      %v239 = vld [vmem:[%s203 + $0x5c] sm:$0x1]
      %v240 = vld [vmem:[%s203 + $0x60] sm:$0xf]
      %v241 = vld [vmem:[%s203 + $0x64] sm:$0xf]
      %v242 = vld [vmem:[%s203 + $0x68] sm:$0x1]
      %v243 = vld [vmem:[%s203 + $0x6c] sm:$0xf]
      %v244 = vld [vmem:[%s203 + $0x70] sm:$0xf]
      %v245 = vld [vmem:[%s203 + $0x74] sm:$0x1]
      %v246 = vld [vmem:[%s203 + $0x78] sm:$0xf]
      %v247 = vld [vmem:[%s203 + $0x7c] sm:$0xf]
      %v248 = vld [vmem:[%s203 + $0x80] sm:$0x1]
      %v249 = vld [vmem:[%s203 + $0x84] sm:$0xf]
      %v250 = vld [vmem:[%s203 + $0x88] sm:$0xf]
      %v251 = vld [vmem:[%s203 + $0x8c] sm:$0x1]
      %v252 = vld [vmem:[%s203 + $0x90] sm:$0xf]
      %v253 = vld [vmem:[%s203 + $0x94] sm:$0xf]
      %v254 = vld [vmem:[%s203 + $0x98] sm:$0x1]
      %v255 = vld [vmem:[%s203 + $0x9c] sm:$0xf]
      %v256 = vld [vmem:[%s203 + $0xa0] sm:$0xf]
      %v257 = vld [vmem:[%s203 + $0xa4] sm:$0x1]
      %v258 = vld [vmem:[%s203 + $0xa8] sm:$0xf]
      %v259 = vld [vmem:[%s203 + $0xac] sm:$0xf]
      %v260 = vld [vmem:[%s203 + $0xb0] sm:$0x1]
      %v261 = vld [vmem:[%s203 + $0xb4] sm:$0xf]
      %v262 = vld [vmem:[%s203 + $0xb8] sm:$0xf]
      %v263 = vld [vmem:[%s203 + $0xbc] sm:$0x1]
      %v264 = vld [vmem:[%s203 + $0xc0] sm:$0xf]
      %v265 = vld [vmem:[%s203 + $0xc4] sm:$0xf]
      %v266 = vld [vmem:[%s203 + $0xc8] sm:$0x1]
      %v267 = vld [vmem:[%s203 + $0xcc] sm:$0xf]
      %v268 = vld [vmem:[%s203 + $0xd0] sm:$0xf]
      %v269 = vld [vmem:[%s203 + $0xd4] sm:$0x1]
      %v270 = vld [vmem:[%s1] sm:$0xf]
      %v271 = vld [vmem:[%s1 + $0x4] sm:$0xf]
      %v272 = vld [vmem:[%s1 + $0x8] sm:$0xf]
      %v273 = vld [vmem:[%s1 + $0xc] sm:$0xf]
      %v274 = vld [vmem:[%s1 + $0x10] sm:$0xf]
      %v275 = vld [vmem:[%s1 + $0x14] sm:$0xf]
      %v276 = vld [vmem:[%s1 + $0x18] sm:$0xf]
      %v277 = vld [vmem:[%s1 + $0x1c] sm:$0xf]
      %v278 = vld [vmem:[%s1 + $0x20] sm:$0xf]
      %v279 = vld [vmem:[%s1 + $0x24] sm:$0xf]
      %v280 = vld [vmem:[%s1 + $0x28] sm:$0xf]
      %v281 = vld [vmem:[%s1 + $0x2c] sm:$0xf]
      %v282 = vld [vmem:[%s1 + $0x30] sm:$0xf]
      %v283 = vld [vmem:[%s1 + $0x34] sm:$0xf]
      %v284 = vld [vmem:[%s1 + $0x38] sm:$0xf]
      %v285 = vld [vmem:[%s1 + $0x3c] sm:$0xf]
      %v286 = vld [vmem:[%s1 + $0x40] sm:$0xf]
      %v287 = vld [vmem:[%s1 + $0x44] sm:$0xf]
      %v288 = vld [vmem:[%s1 + $0x48] sm:$0xf]
      %v289 = vld [vmem:[%s1 + $0x4c] sm:$0xf]
      %v290 = vld [vmem:[%s1 + $0x50] sm:$0xf]
      %v291 = vld [vmem:[%s1 + $0x54] sm:$0xf]
      %v292 = vld [vmem:[%s1 + $0x58] sm:$0xf]
      %v293 = vld [vmem:[%s1 + $0x5c] sm:$0xf]
      %v294 = vld [vmem:[%s1 + $0x60] sm:$0xf]
      %v295 = vld [vmem:[%s1 + $0x64] sm:$0xf]
      %v296 = vld [vmem:[%s1 + $0x68] sm:$0xf]
      %v297 = vld [vmem:[%s1 + $0x6c] sm:$0xf]
      %v298 = vld [vmem:[%s1 + $0x70] sm:$0xf]
      %v299 = vld [vmem:[%s1 + $0x74] sm:$0xf]
      %v300 = vld [vmem:[%s1 + $0x78] sm:$0xf]
      %v301 = vld [vmem:[%s1 + $0x7c] sm:$0xf]
      %v302 = vld [vmem:[%s1 + $0x80] sm:$0xf]
      %v303 = vld [vmem:[%s1 + $0x84] sm:$0xf]
      %v304 = vld [vmem:[%s1 + $0x88] sm:$0xf]
      %v305 = vld [vmem:[%s1 + $0x8c] sm:$0xf]
      %v306 = vld [vmem:[%s1 + $0x90] sm:$0xf]
      %v307 = vld [vmem:[%s1 + $0x94] sm:$0xf]
      %v308 = vld [vmem:[%s1 + $0x98] sm:$0xf]
      %v309 = vld [vmem:[%s1 + $0x9c] sm:$0xf]
      %v310 = vld [vmem:[%s1 + $0xa0] sm:$0xf]
      %v311 = vld [vmem:[%s1 + $0xa4] sm:$0xf]
      %v312 = vld [vmem:[%s1 + $0xa8] sm:$0xf]
      %v313 = vld [vmem:[%s1 + $0xac] sm:$0xf]
      %v314 = vld [vmem:[%s1 + $0xb0] sm:$0xf]
      %v315 = vld [vmem:[%s1 + $0xb4] sm:$0xf]
      %v316 = vld [vmem:[%s1 + $0xb8] sm:$0xf]
      %v317 = vld [vmem:[%s1 + $0xbc] sm:$0xf]
      %v318 = vld [vmem:[%s1 + $0xc0] sm:$0xf]
      %v319 = vld [vmem:[%s1 + $0xc4] sm:$0xf]
      %v320 = vld [vmem:[%s1 + $0xc8] sm:$0xf]
      %v321 = vld [vmem:[%s1 + $0xcc] sm:$0xf]
      %v322 = vld [vmem:[%s1 + $0xd0] sm:$0xf]
      %v323 = vld [vmem:[%s1 + $0xd4] sm:$0xf]
      %v324 = vld [vmem:[%s1 + $0xd8] sm:$0xf]
      %v325 = vld [vmem:[%s1 + $0xdc] sm:$0xf]
      %v326 = vld [vmem:[%s1 + $0xe0] sm:$0xf]
      %v327 = vld [vmem:[%s1 + $0xe4] sm:$0xf]
      %v328 = vld [vmem:[%s1 + $0xe8] sm:$0xf]
      %v329 = vld [vmem:[%s1 + $0xec] sm:$0xf]
      %v330 = vld [vmem:[%s1 + $0xf0] sm:$0xf]
      %v331 = vld [vmem:[%s1 + $0xf4] sm:$0xf]
      %v332 = vld [vmem:[%s1 + $0xf8] sm:$0xf]
      %v333 = vld [vmem:[%s1 + $0xfc] sm:$0xf]
      %v334 = vld [vmem:[%s1 + $0x100] sm:$0xf]
      %v335 = vld [vmem:[%s1 + $0x104] sm:$0xf]
      %v336 = vld [vmem:[%s1 + $0x108] sm:$0xf]
      %v337 = vld [vmem:[%s1 + $0x10c] sm:$0xf]
      %v338 = vld [vmem:[%s1 + $0x110] sm:$0xf]
      %v339 = vld [vmem:[%s1 + $0x114] sm:$0xf]
      %v340 = vld [vmem:[%s1 + $0x118] sm:$0xf]
      %v341 = vld [vmem:[%s1 + $0x11c] sm:$0xf]
      %v342 = vld [vmem:[%s1 + $0x120] sm:$0xf]
      %v343 = vld [vmem:[%s1 + $0x124] sm:$0xf]
      %v344 = vld [vmem:[%s1 + $0x128] sm:$0xf]
      %v345 = vld [vmem:[%s1 + $0x12c] sm:$0xf]
      %v346 = vld [vmem:[%s1 + $0x130] sm:$0xf]
      %v347 = vld [vmem:[%s1 + $0x134] sm:$0xf]
      %v348 = vld [vmem:[%s1 + $0x138] sm:$0xf]
      %v349 = vld [vmem:[%s1 + $0x13c] sm:$0xf]
      %v350 = vld [vmem:[%s1 + $0x140] sm:$0xf]
      %v351 = vld [vmem:[%s1 + $0x144] sm:$0xf]
      %v352 = vld [vmem:[%s1 + $0x148] sm:$0xf]
      %v353 = vld [vmem:[%s1 + $0x14c] sm:$0xf]
      %v354 = vld [vmem:[%s1 + $0x150] sm:$0xf]
      %v355 = vld [vmem:[%s1 + $0x154] sm:$0xf]
      %v356 = vld [vmem:[%s1 + $0x158] sm:$0xf]
      %v357 = vld [vmem:[%s1 + $0x15c] sm:$0xf]
      %v358 = vld [vmem:[%s1 + $0x160] sm:$0xf]
      %v359 = vld [vmem:[%s1 + $0x164] sm:$0xf]
      %v360 = vld [vmem:[%s1 + $0x168] sm:$0xf]
      %v361 = vld [vmem:[%s1 + $0x16c] sm:$0xf]
      %v362 = vld [vmem:[%s1 + $0x170] sm:$0xf]
      %v363 = vld [vmem:[%s1 + $0x174] sm:$0xf]
      %v364 = vld [vmem:[%s1 + $0x178] sm:$0xf]
      %v365 = vld [vmem:[%s1 + $0x17c] sm:$0xf]
      %v366 = vld [vmem:[%s1 + $0x180] sm:$0xf]
      %v367 = vld [vmem:[%s1 + $0x184] sm:$0xf]
      %v368 = vld [vmem:[%s1 + $0x188] sm:$0xf]
      %v369 = vld [vmem:[%s1 + $0x18c] sm:$0xf]
      %v370 = vld [vmem:[%s1 + $0x190] sm:$0xf]
      %v371 = vld [vmem:[%s1 + $0x194] sm:$0xf]
      %v372 = vld [vmem:[%s1 + $0x198] sm:$0xf]
      %v373 = vld [vmem:[%s1 + $0x19c] sm:$0xf]
      %v374 = vld [vmem:[%s1 + $0x1a0] sm:$0xf]
      %v375 = vld [vmem:[%s1 + $0x1a4] sm:$0xf]
      %v376 = vld [vmem:[%s1 + $0x1a8] sm:$0xf]
      %v377 = vld [vmem:[%s1 + $0x1ac] sm:$0xf]
      %v378 = vld [vmem:[%s1 + $0x1b0] sm:$0xf]
      %v379 = vld [vmem:[%s1 + $0x1b4] sm:$0xf]
      %v380 = vld [vmem:[%s1 + $0x1b8] sm:$0xf]
      %v381 = vld [vmem:[%s1 + $0x1bc] sm:$0xf]
      %v382 = vld [vmem:[%s1 + $0x1c0] sm:$0xf]
      %v383 = vld [vmem:[%s1 + $0x1c4] sm:$0xf]
      %v384 = vld [vmem:[%s1 + $0x1c8] sm:$0xf]
      %v385 = vld [vmem:[%s1 + $0x1cc] sm:$0xf]
      %v386 = vld [vmem:[%s1 + $0x1d0] sm:$0xf]
      %v387 = vld [vmem:[%s1 + $0x1d4] sm:$0xf]
      %v388 = vld [vmem:[%s1 + $0x1d8] sm:$0xf]
      %v389 = vld [vmem:[%s1 + $0x1dc] sm:$0xf]
      %v390 = vld [vmem:[%s1 + $0x1e0] sm:$0xf]
      %v391 = vld [vmem:[%s1 + $0x1e4] sm:$0xf]
      %v392 = vld [vmem:[%s1 + $0x1e8] sm:$0xf]
      %v393 = vld [vmem:[%s1 + $0x1ec] sm:$0xf]
      %v394 = vld [vmem:[%s1 + $0x1f0] sm:$0xf]
      %v395 = vld [vmem:[%s1 + $0x1f4] sm:$0xf]
      %v396 = vld [vmem:[%s1 + $0x1f8] sm:$0xf]
      %v397 = vld [vmem:[%s1 + $0x1fc] sm:$0xf]
      %v398 = vld [vmem:[%s1 + $0x200] sm:$0xf]
      %v399 = vld [vmem:[%s1 + $0x204] sm:$0xf]
      %v400 = vld [vmem:[%s1 + $0x208] sm:$0xf]
      %v401 = vld [vmem:[%s1 + $0x20c] sm:$0xf]
      %v402 = vld [vmem:[%s1 + $0x210] sm:$0xf]
      %v403 = vld [vmem:[%s1 + $0x214] sm:$0xf]
      %v404 = vld [vmem:[%s1 + $0x218] sm:$0xf]
      %v405 = vld [vmem:[%s1 + $0x21c] sm:$0xf]
      %v406 = vld [vmem:[%s1 + $0x220] sm:$0xf]
      %v407 = vld [vmem:[%s1 + $0x224] sm:$0xf]
      %v408 = vld [vmem:[%s1 + $0x228] sm:$0xf]
      %v409 = vld [vmem:[%s1 + $0x22c] sm:$0xf]
      %v410 = vld [vmem:[%s1 + $0x230] sm:$0xf]
      %v411 = vld [vmem:[%s1 + $0x234] sm:$0xf]
      %v412 = vld [vmem:[%s1 + $0x238] sm:$0xf]
      %v413 = vld [vmem:[%s1 + $0x23c] sm:$0xf]
      %vm414 = vsmask.f32 3328
      %vm415 = vsmask.f32 7440
      %vm416 = vmor %vm414, %vm415
      %v418 = vshrl.u32 %v216, 16
      %v420 = vrot.slane %v418, 4
      %v421 = vshll.u32 %v216, 16
      %v423 = vrot.slane %v421, 5
      %v424 = vor.u32 %v420, %v423
      %v425 = vrot.slane %v424, 4
      %v427 = vshll.u32 %v217, 16
      %v429 = vrot.slane %v427, 5
      %v430 = vsel %vm416, %v425, %v429
      %v431 = vshrl.u32 %v217, 16
      %v433 = vrot.slane %v431, 4
      %v434 = vor.u32 %v433, %v429
      %v435 = vrot.slane %v434, 4
      %v437 = vshll.u32 %v218, 16
      %v439 = vrot.slane %v437, 5
      %v440 = vsel %vm416, %v435, %v439
      %v442 = vshrl.u32 %v219, 16
      %v444 = vrot.slane %v442, 4
      %v445 = vshll.u32 %v219, 16
      %v447 = vrot.slane %v445, 5
      %v448 = vor.u32 %v444, %v447
      %v449 = vrot.slane %v448, 4
      %v451 = vshll.u32 %v220, 16
      %v453 = vrot.slane %v451, 5
      %v454 = vsel %vm416, %v449, %v453
      %v455 = vshrl.u32 %v220, 16
      %v457 = vrot.slane %v455, 4
      %v458 = vor.u32 %v457, %v453
      %v459 = vrot.slane %v458, 4
      %v461 = vshll.u32 %v221, 16
      %v463 = vrot.slane %v461, 5
      %v464 = vsel %vm416, %v459, %v463
      %v466 = vshrl.u32 %v222, 16
      %v468 = vrot.slane %v466, 4
      %v469 = vshll.u32 %v222, 16
      %v471 = vrot.slane %v469, 5
      %v472 = vor.u32 %v468, %v471
      %v473 = vrot.slane %v472, 4
      %v475 = vshll.u32 %v223, 16
      %v477 = vrot.slane %v475, 5
      %v478 = vsel %vm416, %v473, %v477
      %v479 = vshrl.u32 %v223, 16
      %v481 = vrot.slane %v479, 4
      %v482 = vor.u32 %v481, %v477
      %v483 = vrot.slane %v482, 4
      %v485 = vshll.u32 %v224, 16
      %v487 = vrot.slane %v485, 5
      %v488 = vsel %vm416, %v483, %v487
      %v490 = vshrl.u32 %v225, 16
      %v492 = vrot.slane %v490, 4
      %v493 = vshll.u32 %v225, 16
      %v495 = vrot.slane %v493, 5
      %v496 = vor.u32 %v492, %v495
      %v497 = vrot.slane %v496, 4
      %v499 = vshll.u32 %v226, 16
      %v501 = vrot.slane %v499, 5
      %v502 = vsel %vm416, %v497, %v501
      %v503 = vshrl.u32 %v226, 16
      %v505 = vrot.slane %v503, 4
      %v506 = vor.u32 %v505, %v501
      %v507 = vrot.slane %v506, 4
      %v509 = vshll.u32 %v227, 16
      %v511 = vrot.slane %v509, 5
      %v512 = vsel %vm416, %v507, %v511
      %v514 = vshrl.u32 %v228, 16
      %v516 = vrot.slane %v514, 4
      %v517 = vshll.u32 %v228, 16
      %v519 = vrot.slane %v517, 5
      %v520 = vor.u32 %v516, %v519
      %v521 = vrot.slane %v520, 4
      %v523 = vshll.u32 %v229, 16
      %v525 = vrot.slane %v523, 5
      %v526 = vsel %vm416, %v521, %v525
      %v527 = vshrl.u32 %v229, 16
      %v529 = vrot.slane %v527, 4
      %v530 = vor.u32 %v529, %v525
      %v531 = vrot.slane %v530, 4
      %v533 = vshll.u32 %v230, 16
      %v535 = vrot.slane %v533, 5
      %v536 = vsel %vm416, %v531, %v535
      %v538 = vshrl.u32 %v231, 16
      %v540 = vrot.slane %v538, 4
      %v541 = vshll.u32 %v231, 16
      %v543 = vrot.slane %v541, 5
      %v544 = vor.u32 %v540, %v543
      %v545 = vrot.slane %v544, 4
      %v547 = vshll.u32 %v232, 16
      %v549 = vrot.slane %v547, 5
      %v550 = vsel %vm416, %v545, %v549
      %v551 = vshrl.u32 %v232, 16
      %v553 = vrot.slane %v551, 4
      %v554 = vor.u32 %v553, %v549
      %v555 = vrot.slane %v554, 4
      %v557 = vshll.u32 %v233, 16
      %v559 = vrot.slane %v557, 5
      %v560 = vsel %vm416, %v555, %v559
      %v562 = vshrl.u32 %v234, 16
      %v564 = vrot.slane %v562, 4
      %v565 = vshll.u32 %v234, 16
      %v567 = vrot.slane %v565, 5
      %v568 = vor.u32 %v564, %v567
      %v569 = vrot.slane %v568, 4
      %v571 = vshll.u32 %v235, 16
      %v573 = vrot.slane %v571, 5
      %v574 = vsel %vm416, %v569, %v573
      %v575 = vshrl.u32 %v235, 16
      %v577 = vrot.slane %v575, 4
      %v578 = vor.u32 %v577, %v573
      %v579 = vrot.slane %v578, 4
      %v581 = vshll.u32 %v236, 16
      %v583 = vrot.slane %v581, 5
      %v584 = vsel %vm416, %v579, %v583
      %v586 = vshrl.u32 %v237, 16
      %v588 = vrot.slane %v586, 4
      %v589 = vshll.u32 %v237, 16
      %v591 = vrot.slane %v589, 5
      %v592 = vor.u32 %v588, %v591
      %v593 = vrot.slane %v592, 4
      %v595 = vshll.u32 %v238, 16
      %v597 = vrot.slane %v595, 5
      %v598 = vsel %vm416, %v593, %v597
      %v599 = vshrl.u32 %v238, 16
      %v601 = vrot.slane %v599, 4
      %v602 = vor.u32 %v601, %v597
      %v603 = vrot.slane %v602, 4
      %v605 = vshll.u32 %v239, 16
      %v607 = vrot.slane %v605, 5
      %v608 = vsel %vm416, %v603, %v607
      %v610 = vshrl.u32 %v240, 16
      %v612 = vrot.slane %v610, 4
      %v613 = vshll.u32 %v240, 16
      %v615 = vrot.slane %v613, 5
      %v616 = vor.u32 %v612, %v615
      %v617 = vrot.slane %v616, 4
      %v619 = vshll.u32 %v241, 16
      %v621 = vrot.slane %v619, 5
      %v622 = vsel %vm416, %v617, %v621
      %v623 = vshrl.u32 %v241, 16
      %v625 = vrot.slane %v623, 4
      %v626 = vor.u32 %v625, %v621
      %v627 = vrot.slane %v626, 4
      %v629 = vshll.u32 %v242, 16
      %v631 = vrot.slane %v629, 5
      %v632 = vsel %vm416, %v627, %v631
      %v634 = vshrl.u32 %v243, 16
      %v636 = vrot.slane %v634, 4
      %v637 = vshll.u32 %v243, 16
      %v639 = vrot.slane %v637, 5
      %v640 = vor.u32 %v636, %v639
      %v641 = vrot.slane %v640, 4
      %v643 = vshll.u32 %v244, 16
      %v645 = vrot.slane %v643, 5
      %v646 = vsel %vm416, %v641, %v645
      %v647 = vshrl.u32 %v244, 16
      %v649 = vrot.slane %v647, 4
      %v650 = vor.u32 %v649, %v645
      %v651 = vrot.slane %v650, 4
      %v653 = vshll.u32 %v245, 16
      %v655 = vrot.slane %v653, 5
      %v656 = vsel %vm416, %v651, %v655
      %v658 = vshrl.u32 %v246, 16
      %v660 = vrot.slane %v658, 4
      %v661 = vshll.u32 %v246, 16
      %v663 = vrot.slane %v661, 5
      %v664 = vor.u32 %v660, %v663
      %v665 = vrot.slane %v664, 4
      %v667 = vshll.u32 %v247, 16
      %v669 = vrot.slane %v667, 5
      %v670 = vsel %vm416, %v665, %v669
      %v671 = vshrl.u32 %v247, 16
      %v673 = vrot.slane %v671, 4
      %v674 = vor.u32 %v673, %v669
      %v675 = vrot.slane %v674, 4
      %v677 = vshll.u32 %v248, 16
      %v679 = vrot.slane %v677, 5
      %v680 = vsel %vm416, %v675, %v679
      %v682 = vshrl.u32 %v249, 16
      %v684 = vrot.slane %v682, 4
      %v685 = vshll.u32 %v249, 16
      %v687 = vrot.slane %v685, 5
      %v688 = vor.u32 %v684, %v687
      %v689 = vrot.slane %v688, 4
      %v691 = vshll.u32 %v250, 16
      %v693 = vrot.slane %v691, 5
      %v694 = vsel %vm416, %v689, %v693
      %v695 = vshrl.u32 %v250, 16
      %v697 = vrot.slane %v695, 4
      %v698 = vor.u32 %v697, %v693
      %v699 = vrot.slane %v698, 4
      %v701 = vshll.u32 %v251, 16
      %v703 = vrot.slane %v701, 5
      %v704 = vsel %vm416, %v699, %v703
      %v706 = vshrl.u32 %v252, 16
      %v708 = vrot.slane %v706, 4
      %v709 = vshll.u32 %v252, 16
      %v711 = vrot.slane %v709, 5
      %v712 = vor.u32 %v708, %v711
      %v713 = vrot.slane %v712, 4
      %v715 = vshll.u32 %v253, 16
      %v717 = vrot.slane %v715, 5
      %v718 = vsel %vm416, %v713, %v717
      %v719 = vshrl.u32 %v253, 16
      %v721 = vrot.slane %v719, 4
      %v722 = vor.u32 %v721, %v717
      %v723 = vrot.slane %v722, 4
      %v725 = vshll.u32 %v254, 16
      %v727 = vrot.slane %v725, 5
      %v728 = vsel %vm416, %v723, %v727
      %v730 = vshrl.u32 %v255, 16
      %v732 = vrot.slane %v730, 4
      %v733 = vshll.u32 %v255, 16
      %v735 = vrot.slane %v733, 5
      %v736 = vor.u32 %v732, %v735
      %v737 = vrot.slane %v736, 4
      %v739 = vshll.u32 %v256, 16
      %v741 = vrot.slane %v739, 5
      %v742 = vsel %vm416, %v737, %v741
      %v743 = vshrl.u32 %v256, 16
      %v745 = vrot.slane %v743, 4
      %v746 = vor.u32 %v745, %v741
      %v747 = vrot.slane %v746, 4
      %v749 = vshll.u32 %v257, 16
      %v751 = vrot.slane %v749, 5
      %v752 = vsel %vm416, %v747, %v751
      %v754 = vshrl.u32 %v258, 16
      %v756 = vrot.slane %v754, 4
      %v757 = vshll.u32 %v258, 16
      %v759 = vrot.slane %v757, 5
      %v760 = vor.u32 %v756, %v759
      %v761 = vrot.slane %v760, 4
      %v763 = vshll.u32 %v259, 16
      %v765 = vrot.slane %v763, 5
      %v766 = vsel %vm416, %v761, %v765
      %v767 = vshrl.u32 %v259, 16
      %v769 = vrot.slane %v767, 4
      %v770 = vor.u32 %v769, %v765
      %v771 = vrot.slane %v770, 4
      %v773 = vshll.u32 %v260, 16
      %v775 = vrot.slane %v773, 5
      %v776 = vsel %vm416, %v771, %v775
      %v778 = vshrl.u32 %v261, 16
      %v780 = vrot.slane %v778, 4
      %v781 = vshll.u32 %v261, 16
      %v783 = vrot.slane %v781, 5
      %v784 = vor.u32 %v780, %v783
      %v785 = vrot.slane %v784, 4
      %v787 = vshll.u32 %v262, 16
      %v789 = vrot.slane %v787, 5
      %v790 = vsel %vm416, %v785, %v789
      %v791 = vshrl.u32 %v262, 16
      %v793 = vrot.slane %v791, 4
      %v794 = vor.u32 %v793, %v789
      %v795 = vrot.slane %v794, 4
      %v797 = vshll.u32 %v263, 16
      %v799 = vrot.slane %v797, 5
      %v800 = vsel %vm416, %v795, %v799
      %v801 = vunpack.c.l.b16 %v430
      %v802 = vunpack.c.l.b16 %v440
      %v803 = vunpack.c.l.b16 %v454
      %v804 = vunpack.c.l.b16 %v464
      %v805 = vunpack.c.l.b16 %v478
      %v806 = vunpack.c.l.b16 %v488
      %v807 = vunpack.c.l.b16 %v502
      %v808 = vunpack.c.l.b16 %v512
      %v809 = vunpack.c.l.b16 %v526
      %v810 = vunpack.c.l.b16 %v536
      %v811 = vunpack.c.l.b16 %v550
      %v812 = vunpack.c.l.b16 %v560
      %v813 = vunpack.c.l.b16 %v574
      %v814 = vunpack.c.l.b16 %v584
      %v815 = vunpack.c.l.b16 %v598
      %v816 = vunpack.c.l.b16 %v608
      %v817 = vunpack.c.l.b16 %v622
      %v818 = vunpack.c.l.b16 %v632
      %v819 = vunpack.c.l.b16 %v646
      %v820 = vunpack.c.l.b16 %v656
      %v821 = vunpack.c.l.b16 %v670
      %v822 = vunpack.c.l.b16 %v680
      %v823 = vunpack.c.l.b16 %v694
      %v824 = vunpack.c.l.b16 %v704
      %v825 = vunpack.c.l.b16 %v718
      %v826 = vunpack.c.l.b16 %v728
      %v827 = vunpack.c.l.b16 %v742
      %v828 = vunpack.c.l.b16 %v752
      %v829 = vunpack.c.l.b16 %v766
      %v830 = vunpack.c.l.b16 %v776
      %v831 = vunpack.c.l.b16 %v790
      %v832 = vunpack.c.l.b16 %v800
      %v833 = vpack.c.b16 %v802, %v801
      %v834 = vpack.c.b16 %v804, %v803
      %v835 = vpack.c.b16 %v806, %v805
      %v836 = vpack.c.b16 %v808, %v807
      %v837 = vpack.c.b16 %v810, %v809
      %v838 = vpack.c.b16 %v812, %v811
      %v839 = vpack.c.b16 %v814, %v813
      %v840 = vpack.c.b16 %v816, %v815
      %v841 = vpack.c.b16 %v818, %v817
      %v842 = vpack.c.b16 %v820, %v819
      %v843 = vpack.c.b16 %v822, %v821
      %v844 = vpack.c.b16 %v824, %v823
      %v845 = vpack.c.b16 %v826, %v825
      %v846 = vpack.c.b16 %v828, %v827
      %v847 = vpack.c.b16 %v830, %v829
      %v848 = vpack.c.b16 %v832, %v831
      %v881 = vunpack.c.l.b16 %v286
      %v882 = vunpack.c.l.b16 %v287
      %v883 = vunpack.c.l.b16 %v288
      %v884 = vunpack.c.l.b16 %v289
      %v885 = vunpack.c.l.b16 %v290
      %v886 = vunpack.c.l.b16 %v291
      %v887 = vunpack.c.l.b16 %v292
      %v888 = vunpack.c.l.b16 %v293
      %v889 = vunpack.c.l.b16 %v294
      %v890 = vunpack.c.l.b16 %v295
      %v891 = vunpack.c.l.b16 %v296
      %v892 = vunpack.c.l.b16 %v297
      %v893 = vunpack.c.l.b16 %v298
      %v894 = vunpack.c.l.b16 %v299
      %v895 = vunpack.c.l.b16 %v300
      %v896 = vunpack.c.l.b16 %v301
      %v897 = vpack.c.b16 %v882, %v881
      %v898 = vpack.c.b16 %v884, %v883
      %v899 = vpack.c.b16 %v886, %v885
      %v900 = vpack.c.b16 %v888, %v887
      %v901 = vpack.c.b16 %v890, %v889
      %v902 = vpack.c.b16 %v892, %v891
      %v903 = vpack.c.b16 %v894, %v893
      %v904 = vpack.c.b16 %v896, %v895
      %913 = vmatprep.subr.bf16.mxu0 0
      %914 = vmatpush1.bf16.msra.mxu0 %v904
      %915 = vmatprep.subr.bf16.mxu0 0
      %916 = vmatpush1.bf16.msra.mxu0 %v903
      %917 = vmatprep.subr.bf16.mxu0 0
      %918 = vmatpush1.bf16.msra.mxu0 %v902
      %919 = vmatprep.subr.bf16.mxu0 0
      %920 = vmatpush1.bf16.msra.mxu0 %v901
      %921 = vmatprep.subr.bf16.mxu0 0
      %922 = vmatpush1.bf16.msra.mxu0 %v900
      %923 = vmatprep.subr.bf16.mxu0 0
      %924 = vmatpush1.bf16.msra.mxu0 %v899
      %925 = vmatprep.subr.bf16.mxu0 0
      %926 = vmatpush1.bf16.msra.mxu0 %v898
      %927 = vmatprep.subr.bf16.mxu0 0
      %928 = vmatpush1.bf16.msra.mxu0 %v897
      %929 = vmatprep.subr.bf16.mxu0 0
      %930 = vmatpush2.bf16.msra.mxu0 0
      %931 = vmatprep.subr.bf16.mxu0 0
      %932 = vmatpush2.bf16.msra.mxu0 0
      %933 = vmatprep.subr.bf16.mxu0 0
      %934 = vmatpush2.bf16.msra.mxu0 0
      %935 = vmatprep.subr.bf16.mxu0 0
      %936 = vmatpush2.bf16.msra.mxu0 0
      %937 = vmatprep.subr.bf16.mxu0 0
      %938 = vmatpush2.bf16.msra.mxu0 0
      %939 = vmatprep.subr.bf16.mxu0 0
      %940 = vmatpush2.bf16.msra.mxu0 0
      %941 = vmatprep.subr.bf16.mxu0 0
      %942 = vmatpush2.bf16.msra.mxu0 0
      %943 = vmatprep.subr.bf16.mxu0 0
      %944 = vmatpush2.bf16.msra.mxu0 0
      %945 = vmatprep.mubr.bf16.mxu0 0
      %946 = vmatmul.mubr.bf16.gmra.mxu0 %v833
      %v947 = vpop.f32.mrf.mxu0
      %v948 = vadd.f32 0.0, %v947
      %v949 = vpop.f32.mrf.mxu0
      %v950 = vpop.f32.mrf.mxu0
      %v951 = vadd.f32 0.0, %v950
      %v952 = vpop.f32.mrf.mxu0
      %953 = vmatprep.mubr.bf16.mxu0 0
      %954 = vmatmul.mubr.bf16.gmra.mxu0 %v834
      %v955 = vpop.f32.mrf.mxu0
      %v956 = vadd.f32 0.0, %v955
      %v957 = vpop.f32.mrf.mxu0
      %v958 = vpop.f32.mrf.mxu0
      %v959 = vadd.f32 0.0, %v958
      %v960 = vpop.f32.mrf.mxu0
      %961 = vmatprep.mubr.bf16.mxu0 0
      %962 = vmatmul.mubr.bf16.gmra.mxu0 %v835
      %v963 = vpop.f32.mrf.mxu0
      %v964 = vadd.f32 0.0, %v963
      %v965 = vpop.f32.mrf.mxu0
      %v966 = vpop.f32.mrf.mxu0
      %v967 = vadd.f32 0.0, %v966
      %v968 = vpop.f32.mrf.mxu0
      %969 = vmatprep.mubr.bf16.mxu0 0
      %970 = vmatmul.mubr.bf16.gmra.mxu0 %v836
      %v971 = vpop.f32.mrf.mxu0
      %v972 = vadd.f32 0.0, %v971
      %v973 = vpop.f32.mrf.mxu0
      %v974 = vpop.f32.mrf.mxu0
      %v975 = vadd.f32 0.0, %v974
      %v976 = vpop.f32.mrf.mxu0
      %977 = vmatprep.mubr.bf16.mxu0 0
      %978 = vmatmul.mubr.bf16.gmra.mxu0 %v837
      %v979 = vpop.f32.mrf.mxu0
      %v980 = vadd.f32 0.0, %v979
      %v981 = vpop.f32.mrf.mxu0
      %v982 = vpop.f32.mrf.mxu0
      %v983 = vadd.f32 0.0, %v982
      %v984 = vpop.f32.mrf.mxu0
      %985 = vmatprep.mubr.bf16.mxu0 0
      %986 = vmatmul.mubr.bf16.gmra.mxu0 %v838
      %v987 = vpop.f32.mrf.mxu0
      %v988 = vadd.f32 0.0, %v987
      %v989 = vpop.f32.mrf.mxu0
      %v990 = vpop.f32.mrf.mxu0
      %v991 = vadd.f32 0.0, %v990
      %v992 = vpop.f32.mrf.mxu0
      %993 = vmatprep.mubr.bf16.mxu0 0
      %994 = vmatmul.mubr.bf16.gmra.mxu0 %v839
      %v995 = vpop.f32.mrf.mxu0
      %v996 = vadd.f32 0.0, %v995
      %v997 = vpop.f32.mrf.mxu0
      %v998 = vpop.f32.mrf.mxu0
      %v999 = vadd.f32 0.0, %v998
      %v1000 = vpop.f32.mrf.mxu0
      %1001 = vmatprep.mubr.bf16.mxu0 0
      %1002 = vmatmul.mubr.bf16.gmra.mxu0 %v840
      %v1003 = vpop.f32.mrf.mxu0
      %v1004 = vadd.f32 0.0, %v1003
      %v1005 = vpop.f32.mrf.mxu0
      %v1006 = vpop.f32.mrf.mxu0
      %v1007 = vadd.f32 0.0, %v1006
      %v1008 = vpop.f32.mrf.mxu0
      %1009 = vmatprep.mubr.bf16.mxu0 0
      %1010 = vmatmul.mubr.bf16.gmra.mxu0 %v841
      %v1011 = vpop.f32.mrf.mxu0
      %v1012 = vadd.f32 0.0, %v1011
      %v1013 = vpop.f32.mrf.mxu0
      %v1014 = vpop.f32.mrf.mxu0
      %v1015 = vadd.f32 0.0, %v1014
      %v1016 = vpop.f32.mrf.mxu0
      %1017 = vmatprep.mubr.bf16.mxu0 0
      %1018 = vmatmul.mubr.bf16.gmra.mxu0 %v842
      %v1019 = vpop.f32.mrf.mxu0
      %v1020 = vadd.f32 0.0, %v1019
      %v1021 = vpop.f32.mrf.mxu0
      %v1022 = vpop.f32.mrf.mxu0
      %v1023 = vadd.f32 0.0, %v1022
      %v1024 = vpop.f32.mrf.mxu0
      %1025 = vmatprep.mubr.bf16.mxu0 0
      %1026 = vmatmul.mubr.bf16.gmra.mxu0 %v843
      %v1027 = vpop.f32.mrf.mxu0
      %v1028 = vadd.f32 0.0, %v1027
      %v1029 = vpop.f32.mrf.mxu0
      %v1030 = vpop.f32.mrf.mxu0
      %v1031 = vadd.f32 0.0, %v1030
      %v1032 = vpop.f32.mrf.mxu0
      %1033 = vmatprep.mubr.bf16.mxu0 0
      %1034 = vmatmul.mubr.bf16.gmra.mxu0 %v844
      %v1035 = vpop.f32.mrf.mxu0
      %v1036 = vadd.f32 0.0, %v1035
      %v1037 = vpop.f32.mrf.mxu0
      %v1038 = vpop.f32.mrf.mxu0
      %v1039 = vadd.f32 0.0, %v1038
      %v1040 = vpop.f32.mrf.mxu0
      %1041 = vmatprep.mubr.bf16.mxu0 0
      %1042 = vmatmul.mubr.bf16.gmra.mxu0 %v845
      %v1043 = vpop.f32.mrf.mxu0
      %v1044 = vadd.f32 0.0, %v1043
      %v1045 = vpop.f32.mrf.mxu0
      %v1046 = vpop.f32.mrf.mxu0
      %v1047 = vadd.f32 0.0, %v1046
      %v1048 = vpop.f32.mrf.mxu0
      %1049 = vmatprep.mubr.bf16.mxu0 0
      %1050 = vmatmul.mubr.bf16.gmra.mxu0 %v846
      %v1051 = vpop.f32.mrf.mxu0
      %v1052 = vadd.f32 0.0, %v1051
      %v1053 = vpop.f32.mrf.mxu0
      %v1054 = vpop.f32.mrf.mxu0
      %v1055 = vadd.f32 0.0, %v1054
      %v1056 = vpop.f32.mrf.mxu0
      %1057 = vmatprep.mubr.bf16.mxu0 0
      %1058 = vmatmul.mubr.bf16.gmra.mxu0 %v847
      %v1059 = vpop.f32.mrf.mxu0
      %v1060 = vadd.f32 0.0, %v1059
      %v1061 = vpop.f32.mrf.mxu0
      %v1062 = vpop.f32.mrf.mxu0
      %v1063 = vadd.f32 0.0, %v1062
      %v1064 = vpop.f32.mrf.mxu0
      %1065 = vmatprep.mubr.bf16.mxu0 0
      %1066 = vmatmul.mubr.bf16.gmra.mxu0 %v848
      %v1067 = vpop.f32.mrf.mxu0
      %v1068 = vadd.f32 0.0, %v1067
      %v1069 = vpop.f32.mrf.mxu0
      %v1070 = vpop.f32.mrf.mxu0
      %v1071 = vadd.f32 0.0, %v1070
      %v1072 = vpop.f32.mrf.mxu0
      %1073 = vdwg.mxu0
      %v1106 = vunpack.c.l.b16 %v216
      %v1107 = vunpack.c.l.b16 %v217
      %v1108 = vunpack.c.l.b16 %v219
      %v1109 = vunpack.c.l.b16 %v220
      %v1110 = vunpack.c.l.b16 %v222
      %v1111 = vunpack.c.l.b16 %v223
      %v1112 = vunpack.c.l.b16 %v225
      %v1113 = vunpack.c.l.b16 %v226
      %v1114 = vunpack.c.l.b16 %v228
      %v1115 = vunpack.c.l.b16 %v229
      %v1116 = vunpack.c.l.b16 %v231
      %v1117 = vunpack.c.l.b16 %v232
      %v1118 = vunpack.c.l.b16 %v234
      %v1119 = vunpack.c.l.b16 %v235
      %v1120 = vunpack.c.l.b16 %v237
      %v1121 = vunpack.c.l.b16 %v238
      %v1122 = vunpack.c.l.b16 %v240
      %v1123 = vunpack.c.l.b16 %v241
      %v1124 = vunpack.c.l.b16 %v243
      %v1125 = vunpack.c.l.b16 %v244
      %v1126 = vunpack.c.l.b16 %v246
      %v1127 = vunpack.c.l.b16 %v247
      %v1128 = vunpack.c.l.b16 %v249
      %v1129 = vunpack.c.l.b16 %v250
      %v1130 = vunpack.c.l.b16 %v252
      %v1131 = vunpack.c.l.b16 %v253
      %v1132 = vunpack.c.l.b16 %v255
      %v1133 = vunpack.c.l.b16 %v256
      %v1134 = vunpack.c.l.b16 %v258
      %v1135 = vunpack.c.l.b16 %v259
      %v1136 = vunpack.c.l.b16 %v261
      %v1137 = vunpack.c.l.b16 %v262
      %v1138 = vpack.c.b16 %v1107, %v1106
      %v1139 = vpack.c.b16 %v1109, %v1108
      %v1140 = vpack.c.b16 %v1111, %v1110
      %v1141 = vpack.c.b16 %v1113, %v1112
      %v1142 = vpack.c.b16 %v1115, %v1114
      %v1143 = vpack.c.b16 %v1117, %v1116
      %v1144 = vpack.c.b16 %v1119, %v1118
      %v1145 = vpack.c.b16 %v1121, %v1120
      %v1146 = vpack.c.b16 %v1123, %v1122
      %v1147 = vpack.c.b16 %v1125, %v1124
      %v1148 = vpack.c.b16 %v1127, %v1126
      %v1149 = vpack.c.b16 %v1129, %v1128
      %v1150 = vpack.c.b16 %v1131, %v1130
      %v1151 = vpack.c.b16 %v1133, %v1132
      %v1152 = vpack.c.b16 %v1135, %v1134
      %v1153 = vpack.c.b16 %v1137, %v1136
      %v1186 = vunpack.c.l.b16 %v270
      %v1187 = vunpack.c.l.b16 %v271
      %v1188 = vunpack.c.l.b16 %v272
      %v1189 = vunpack.c.l.b16 %v273
      %v1190 = vunpack.c.l.b16 %v274
      %v1191 = vunpack.c.l.b16 %v275
      %v1192 = vunpack.c.l.b16 %v276
      %v1193 = vunpack.c.l.b16 %v277
      %v1194 = vunpack.c.l.b16 %v278
      %v1195 = vunpack.c.l.b16 %v279
      %v1196 = vunpack.c.l.b16 %v280
      %v1197 = vunpack.c.l.b16 %v281
      %v1198 = vunpack.c.l.b16 %v282
      %v1199 = vunpack.c.l.b16 %v283
      %v1200 = vunpack.c.l.b16 %v284
      %v1201 = vunpack.c.l.b16 %v285
      %v1202 = vpack.c.b16 %v1187, %v1186
      %v1203 = vpack.c.b16 %v1189, %v1188
      %v1204 = vpack.c.b16 %v1191, %v1190
      %v1205 = vpack.c.b16 %v1193, %v1192
      %v1206 = vpack.c.b16 %v1195, %v1194
      %v1207 = vpack.c.b16 %v1197, %v1196
      %v1208 = vpack.c.b16 %v1199, %v1198
      %v1209 = vpack.c.b16 %v1201, %v1200
      %1218 = vmatprep.subr.bf16.mxu0 0
      %1219 = vmatpush1.bf16.msra.mxu0 %v1209
      %1220 = vmatprep.subr.bf16.mxu0 0
      %1221 = vmatpush1.bf16.msra.mxu0 %v1208
      %1222 = vmatprep.subr.bf16.mxu0 0
      %1223 = vmatpush1.bf16.msra.mxu0 %v1207
      %1224 = vmatprep.subr.bf16.mxu0 0
      %1225 = vmatpush1.bf16.msra.mxu0 %v1206
      %1226 = vmatprep.subr.bf16.mxu0 0
      %1227 = vmatpush1.bf16.msra.mxu0 %v1205
      %1228 = vmatprep.subr.bf16.mxu0 0
      %1229 = vmatpush1.bf16.msra.mxu0 %v1204
      %1230 = vmatprep.subr.bf16.mxu0 0
      %1231 = vmatpush1.bf16.msra.mxu0 %v1203
      %1232 = vmatprep.subr.bf16.mxu0 0
      %1233 = vmatpush1.bf16.msra.mxu0 %v1202
      %1234 = vmatprep.subr.bf16.mxu0 0
      %1235 = vmatpush2.bf16.msra.mxu0 0
      %1236 = vmatprep.subr.bf16.mxu0 0
      %1237 = vmatpush2.bf16.msra.mxu0 0
      %1238 = vmatprep.subr.bf16.mxu0 0
      %1239 = vmatpush2.bf16.msra.mxu0 0
      %1240 = vmatprep.subr.bf16.mxu0 0
      %1241 = vmatpush2.bf16.msra.mxu0 0
      %1242 = vmatprep.subr.bf16.mxu0 0
      %1243 = vmatpush2.bf16.msra.mxu0 0
      %1244 = vmatprep.subr.bf16.mxu0 0
      %1245 = vmatpush2.bf16.msra.mxu0 0
      %1246 = vmatprep.subr.bf16.mxu0 0
      %1247 = vmatpush2.bf16.msra.mxu0 0
      %1248 = vmatprep.subr.bf16.mxu0 0
      %1249 = vmatpush2.bf16.msra.mxu0 0
      %1250 = vmatprep.mubr.bf16.mxu0 0
      %1251 = vmatmul.mubr.bf16.gmra.mxu0 %v1138
      %v1252 = vpop.f32.mrf.mxu0
      %v1253 = vadd.f32 %v948, %v1252
      %v1254 = vpop.f32.mrf.mxu0
      %v1255 = vpop.f32.mrf.mxu0
      %v1256 = vadd.f32 %v951, %v1255
      %v1257 = vpop.f32.mrf.mxu0
      %1258 = vmatprep.mubr.bf16.mxu0 0
      %1259 = vmatmul.mubr.bf16.gmra.mxu0 %v1139
      %v1260 = vpop.f32.mrf.mxu0
      %v1261 = vadd.f32 %v956, %v1260
      %v1262 = vpop.f32.mrf.mxu0
      %v1263 = vpop.f32.mrf.mxu0
      %v1264 = vadd.f32 %v959, %v1263
      %v1265 = vpop.f32.mrf.mxu0
      %1266 = vmatprep.mubr.bf16.mxu0 0
      %1267 = vmatmul.mubr.bf16.gmra.mxu0 %v1140
      %v1268 = vpop.f32.mrf.mxu0
      %v1269 = vadd.f32 %v964, %v1268
      %v1270 = vpop.f32.mrf.mxu0
      %v1271 = vpop.f32.mrf.mxu0
      %v1272 = vadd.f32 %v967, %v1271
      %v1273 = vpop.f32.mrf.mxu0
      %1274 = vmatprep.mubr.bf16.mxu0 0
      %1275 = vmatmul.mubr.bf16.gmra.mxu0 %v1141
      %v1276 = vpop.f32.mrf.mxu0
      %v1277 = vadd.f32 %v972, %v1276
      %v1278 = vpop.f32.mrf.mxu0
      %v1279 = vpop.f32.mrf.mxu0
      %v1280 = vadd.f32 %v975, %v1279
      %v1281 = vpop.f32.mrf.mxu0
      %1282 = vmatprep.mubr.bf16.mxu0 0
      %1283 = vmatmul.mubr.bf16.gmra.mxu0 %v1142
      %v1284 = vpop.f32.mrf.mxu0
      %v1285 = vadd.f32 %v980, %v1284
      %v1286 = vpop.f32.mrf.mxu0
      %v1287 = vpop.f32.mrf.mxu0
      %v1288 = vadd.f32 %v983, %v1287
      %v1289 = vpop.f32.mrf.mxu0
      %1290 = vmatprep.mubr.bf16.mxu0 0
      %1291 = vmatmul.mubr.bf16.gmra.mxu0 %v1143
      %v1292 = vpop.f32.mrf.mxu0
      %v1293 = vadd.f32 %v988, %v1292
      %v1294 = vpop.f32.mrf.mxu0
      %v1295 = vpop.f32.mrf.mxu0
      %v1296 = vadd.f32 %v991, %v1295
      %v1297 = vpop.f32.mrf.mxu0
      %1298 = vmatprep.mubr.bf16.mxu0 0
      %1299 = vmatmul.mubr.bf16.gmra.mxu0 %v1144
      %v1300 = vpop.f32.mrf.mxu0
      %v1301 = vadd.f32 %v996, %v1300
      %v1302 = vpop.f32.mrf.mxu0
      %v1303 = vpop.f32.mrf.mxu0
      %v1304 = vadd.f32 %v999, %v1303
      %v1305 = vpop.f32.mrf.mxu0
      %1306 = vmatprep.mubr.bf16.mxu0 0
      %1307 = vmatmul.mubr.bf16.gmra.mxu0 %v1145
      %v1308 = vpop.f32.mrf.mxu0
      %v1309 = vadd.f32 %v1004, %v1308
      %v1310 = vpop.f32.mrf.mxu0
      %v1311 = vpop.f32.mrf.mxu0
      %v1312 = vadd.f32 %v1007, %v1311
      %v1313 = vpop.f32.mrf.mxu0
      %1314 = vmatprep.mubr.bf16.mxu0 0
      %1315 = vmatmul.mubr.bf16.gmra.mxu0 %v1146
      %v1316 = vpop.f32.mrf.mxu0
      %v1317 = vadd.f32 %v1012, %v1316
      %v1318 = vpop.f32.mrf.mxu0
      %v1319 = vpop.f32.mrf.mxu0
      %v1320 = vadd.f32 %v1015, %v1319
      %v1321 = vpop.f32.mrf.mxu0
      %1322 = vmatprep.mubr.bf16.mxu0 0
      %1323 = vmatmul.mubr.bf16.gmra.mxu0 %v1147
      %v1324 = vpop.f32.mrf.mxu0
      %v1325 = vadd.f32 %v1020, %v1324
      %v1326 = vpop.f32.mrf.mxu0
      %v1327 = vpop.f32.mrf.mxu0
      %v1328 = vadd.f32 %v1023, %v1327
      %v1329 = vpop.f32.mrf.mxu0
      %1330 = vmatprep.mubr.bf16.mxu0 0
      %1331 = vmatmul.mubr.bf16.gmra.mxu0 %v1148
      %v1332 = vpop.f32.mrf.mxu0
      %v1333 = vadd.f32 %v1028, %v1332
      %v1334 = vpop.f32.mrf.mxu0
      %v1335 = vpop.f32.mrf.mxu0
      %v1336 = vadd.f32 %v1031, %v1335
      %v1337 = vpop.f32.mrf.mxu0
      %1338 = vmatprep.mubr.bf16.mxu0 0
      %1339 = vmatmul.mubr.bf16.gmra.mxu0 %v1149
      %v1340 = vpop.f32.mrf.mxu0
      %v1341 = vadd.f32 %v1036, %v1340
      %v1342 = vpop.f32.mrf.mxu0
      %v1343 = vpop.f32.mrf.mxu0
      %v1344 = vadd.f32 %v1039, %v1343
      %v1345 = vpop.f32.mrf.mxu0
      %1346 = vmatprep.mubr.bf16.mxu0 0
      %1347 = vmatmul.mubr.bf16.gmra.mxu0 %v1150
      %v1348 = vpop.f32.mrf.mxu0
      %v1349 = vadd.f32 %v1044, %v1348
      %v1350 = vpop.f32.mrf.mxu0
      %v1351 = vpop.f32.mrf.mxu0
      %v1352 = vadd.f32 %v1047, %v1351
      %v1353 = vpop.f32.mrf.mxu0
      %1354 = vmatprep.mubr.bf16.mxu0 0
      %1355 = vmatmul.mubr.bf16.gmra.mxu0 %v1151
      %v1356 = vpop.f32.mrf.mxu0
      %v1357 = vadd.f32 %v1052, %v1356
      %v1358 = vpop.f32.mrf.mxu0
      %v1359 = vpop.f32.mrf.mxu0
      %v1360 = vadd.f32 %v1055, %v1359
      %v1361 = vpop.f32.mrf.mxu0
      %1362 = vmatprep.mubr.bf16.mxu0 0
      %1363 = vmatmul.mubr.bf16.gmra.mxu0 %v1152
      %v1364 = vpop.f32.mrf.mxu0
      %v1365 = vadd.f32 %v1060, %v1364
      %v1366 = vpop.f32.mrf.mxu0
      %v1367 = vpop.f32.mrf.mxu0
      %v1368 = vadd.f32 %v1063, %v1367
      %v1369 = vpop.f32.mrf.mxu0
      %1370 = vmatprep.mubr.bf16.mxu0 0
      %1371 = vmatmul.mubr.bf16.gmra.mxu0 %v1153
      %v1372 = vpop.f32.mrf.mxu0
      %v1373 = vadd.f32 %v1068, %v1372
      %v1374 = vpop.f32.mrf.mxu0
      %v1375 = vpop.f32.mrf.mxu0
      %v1376 = vadd.f32 %v1071, %v1375
      %v1377 = vpop.f32.mrf.mxu0
      %1378 = vdwg.mxu0
      %vm1395 = vcmask 1042432
      %vm1396 = vcmask 1046532
      %vm1397 = vmor %vm1395, %vm1396
      %v1398 = vrot.slane %v216, 5
      %v1399 = vrot.slane %v1398, 4
      %v1400 = vrot.slane %v217, 5
      %v1401 = vsel %vm1397, %v1399, %v1400
      %v1402 = vrot.slane %v1400, 4
      %v1403 = vrot.slane %v218, 5
      %v1404 = vsel %vm1397, %v1402, %v1403
      %v1405 = vrot.slane %v219, 5
      %v1406 = vrot.slane %v1405, 4
      %v1407 = vrot.slane %v220, 5
      %v1408 = vsel %vm1397, %v1406, %v1407
      %v1409 = vrot.slane %v1407, 4
      %v1410 = vrot.slane %v221, 5
      %v1411 = vsel %vm1397, %v1409, %v1410
      %v1412 = vrot.slane %v222, 5
      %v1413 = vrot.slane %v1412, 4
      %v1414 = vrot.slane %v223, 5
      %v1415 = vsel %vm1397, %v1413, %v1414
      %v1416 = vrot.slane %v1414, 4
      %v1417 = vrot.slane %v224, 5
      %v1418 = vsel %vm1397, %v1416, %v1417
      %v1419 = vrot.slane %v225, 5
      %v1420 = vrot.slane %v1419, 4
      %v1421 = vrot.slane %v226, 5
      %v1422 = vsel %vm1397, %v1420, %v1421
      %v1423 = vrot.slane %v1421, 4
      %v1424 = vrot.slane %v227, 5
      %v1425 = vsel %vm1397, %v1423, %v1424
      %v1426 = vrot.slane %v228, 5
      %v1427 = vrot.slane %v1426, 4
      %v1428 = vrot.slane %v229, 5
      %v1429 = vsel %vm1397, %v1427, %v1428
      %v1430 = vrot.slane %v1428, 4
      %v1431 = vrot.slane %v230, 5
      %v1432 = vsel %vm1397, %v1430, %v1431
      %v1433 = vrot.slane %v231, 5
      %v1434 = vrot.slane %v1433, 4
      %v1435 = vrot.slane %v232, 5
      %v1436 = vsel %vm1397, %v1434, %v1435
      %v1437 = vrot.slane %v1435, 4
      %v1438 = vrot.slane %v233, 5
      %v1439 = vsel %vm1397, %v1437, %v1438
      %v1440 = vrot.slane %v234, 5
      %v1441 = vrot.slane %v1440, 4
      %v1442 = vrot.slane %v235, 5
      %v1443 = vsel %vm1397, %v1441, %v1442
      %v1444 = vrot.slane %v1442, 4
      %v1445 = vrot.slane %v236, 5
      %v1446 = vsel %vm1397, %v1444, %v1445
      %v1447 = vrot.slane %v237, 5
      %v1448 = vrot.slane %v1447, 4
      %v1449 = vrot.slane %v238, 5
      %v1450 = vsel %vm1397, %v1448, %v1449
      %v1451 = vrot.slane %v1449, 4
      %v1452 = vrot.slane %v239, 5
      %v1453 = vsel %vm1397, %v1451, %v1452
      %v1454 = vrot.slane %v240, 5
      %v1455 = vrot.slane %v1454, 4
      %v1456 = vrot.slane %v241, 5
      %v1457 = vsel %vm1397, %v1455, %v1456
      %v1458 = vrot.slane %v1456, 4
      %v1459 = vrot.slane %v242, 5
      %v1460 = vsel %vm1397, %v1458, %v1459
      %v1461 = vrot.slane %v243, 5
      %v1462 = vrot.slane %v1461, 4
      %v1463 = vrot.slane %v244, 5
      %v1464 = vsel %vm1397, %v1462, %v1463
      %v1465 = vrot.slane %v1463, 4
      %v1466 = vrot.slane %v245, 5
      %v1467 = vsel %vm1397, %v1465, %v1466
      %v1468 = vrot.slane %v246, 5
      %v1469 = vrot.slane %v1468, 4
      %v1470 = vrot.slane %v247, 5
      %v1471 = vsel %vm1397, %v1469, %v1470
      %v1472 = vrot.slane %v1470, 4
      %v1473 = vrot.slane %v248, 5
      %v1474 = vsel %vm1397, %v1472, %v1473
      %v1475 = vrot.slane %v249, 5
      %v1476 = vrot.slane %v1475, 4
      %v1477 = vrot.slane %v250, 5
      %v1478 = vsel %vm1397, %v1476, %v1477
      %v1479 = vrot.slane %v1477, 4
      %v1480 = vrot.slane %v251, 5
      %v1481 = vsel %vm1397, %v1479, %v1480
      %v1482 = vrot.slane %v252, 5
      %v1483 = vrot.slane %v1482, 4
      %v1484 = vrot.slane %v253, 5
      %v1485 = vsel %vm1397, %v1483, %v1484
      %v1486 = vrot.slane %v1484, 4
      %v1487 = vrot.slane %v254, 5
      %v1488 = vsel %vm1397, %v1486, %v1487
      %v1489 = vrot.slane %v255, 5
      %v1490 = vrot.slane %v1489, 4
      %v1491 = vrot.slane %v256, 5
      %v1492 = vsel %vm1397, %v1490, %v1491
      %v1493 = vrot.slane %v1491, 4
      %v1494 = vrot.slane %v257, 5
      %v1495 = vsel %vm1397, %v1493, %v1494
      %v1496 = vrot.slane %v258, 5
      %v1497 = vrot.slane %v1496, 4
      %v1498 = vrot.slane %v259, 5
      %v1499 = vsel %vm1397, %v1497, %v1498
      %v1500 = vrot.slane %v1498, 4
      %v1501 = vrot.slane %v260, 5
      %v1502 = vsel %vm1397, %v1500, %v1501
      %v1503 = vrot.slane %v261, 5
      %v1504 = vrot.slane %v1503, 4
      %v1505 = vrot.slane %v262, 5
      %v1506 = vsel %vm1397, %v1504, %v1505
      %v1507 = vrot.slane %v1505, 4
      %v1508 = vrot.slane %v263, 5
      %v1509 = vsel %vm1397, %v1507, %v1508
      %v1510 = vunpack.c.l.b16 %v1401
      %v1511 = vunpack.c.l.b16 %v1404
      %v1512 = vunpack.c.l.b16 %v1408
      %v1513 = vunpack.c.l.b16 %v1411
      %v1514 = vunpack.c.l.b16 %v1415
      %v1515 = vunpack.c.l.b16 %v1418
      %v1516 = vunpack.c.l.b16 %v1422
      %v1517 = vunpack.c.l.b16 %v1425
      %v1518 = vunpack.c.l.b16 %v1429
      %v1519 = vunpack.c.l.b16 %v1432
      %v1520 = vunpack.c.l.b16 %v1436
      %v1521 = vunpack.c.l.b16 %v1439
      %v1522 = vunpack.c.l.b16 %v1443
      %v1523 = vunpack.c.l.b16 %v1446
      %v1524 = vunpack.c.l.b16 %v1450
      %v1525 = vunpack.c.l.b16 %v1453
      %v1526 = vunpack.c.l.b16 %v1457
      %v1527 = vunpack.c.l.b16 %v1460
      %v1528 = vunpack.c.l.b16 %v1464
      %v1529 = vunpack.c.l.b16 %v1467
      %v1530 = vunpack.c.l.b16 %v1471
      %v1531 = vunpack.c.l.b16 %v1474
      %v1532 = vunpack.c.l.b16 %v1478
      %v1533 = vunpack.c.l.b16 %v1481
      %v1534 = vunpack.c.l.b16 %v1485
      %v1535 = vunpack.c.l.b16 %v1488
      %v1536 = vunpack.c.l.b16 %v1492
      %v1537 = vunpack.c.l.b16 %v1495
      %v1538 = vunpack.c.l.b16 %v1499
      %v1539 = vunpack.c.l.b16 %v1502
      %v1540 = vunpack.c.l.b16 %v1506
      %v1541 = vunpack.c.l.b16 %v1509
      %v1542 = vpack.c.b16 %v1511, %v1510
      %v1543 = vpack.c.b16 %v1513, %v1512
      %v1544 = vpack.c.b16 %v1515, %v1514
      %v1545 = vpack.c.b16 %v1517, %v1516
      %v1546 = vpack.c.b16 %v1519, %v1518
      %v1547 = vpack.c.b16 %v1521, %v1520
      %v1548 = vpack.c.b16 %v1523, %v1522
      %v1549 = vpack.c.b16 %v1525, %v1524
      %v1550 = vpack.c.b16 %v1527, %v1526
      %v1551 = vpack.c.b16 %v1529, %v1528
      %v1552 = vpack.c.b16 %v1531, %v1530
      %v1553 = vpack.c.b16 %v1533, %v1532
      %v1554 = vpack.c.b16 %v1535, %v1534
      %v1555 = vpack.c.b16 %v1537, %v1536
      %v1556 = vpack.c.b16 %v1539, %v1538
      %v1557 = vpack.c.b16 %v1541, %v1540
      %v1590 = vunpack.c.l.b16 %v302
      %v1591 = vunpack.c.l.b16 %v303
      %v1592 = vunpack.c.l.b16 %v304
      %v1593 = vunpack.c.l.b16 %v305
      %v1594 = vunpack.c.l.b16 %v306
      %v1595 = vunpack.c.l.b16 %v307
      %v1596 = vunpack.c.l.b16 %v308
      %v1597 = vunpack.c.l.b16 %v309
      %v1598 = vunpack.c.l.b16 %v310
      %v1599 = vunpack.c.l.b16 %v311
      %v1600 = vunpack.c.l.b16 %v312
      %v1601 = vunpack.c.l.b16 %v313
      %v1602 = vunpack.c.l.b16 %v314
      %v1603 = vunpack.c.l.b16 %v315
      %v1604 = vunpack.c.l.b16 %v316
      %v1605 = vunpack.c.l.b16 %v317
      %v1606 = vpack.c.b16 %v1591, %v1590
      %v1607 = vpack.c.b16 %v1593, %v1592
      %v1608 = vpack.c.b16 %v1595, %v1594
      %v1609 = vpack.c.b16 %v1597, %v1596
      %v1610 = vpack.c.b16 %v1599, %v1598
      %v1611 = vpack.c.b16 %v1601, %v1600
      %v1612 = vpack.c.b16 %v1603, %v1602
      %v1613 = vpack.c.b16 %v1605, %v1604
      %1622 = vmatprep.subr.bf16.mxu0 0
      %1623 = vmatpush1.bf16.msra.mxu0 %v1613
      %1624 = vmatprep.subr.bf16.mxu0 0
      %1625 = vmatpush1.bf16.msra.mxu0 %v1612
      %1626 = vmatprep.subr.bf16.mxu0 0
      %1627 = vmatpush1.bf16.msra.mxu0 %v1611
      %1628 = vmatprep.subr.bf16.mxu0 0
      %1629 = vmatpush1.bf16.msra.mxu0 %v1610
      %1630 = vmatprep.subr.bf16.mxu0 0
      %1631 = vmatpush1.bf16.msra.mxu0 %v1609
      %1632 = vmatprep.subr.bf16.mxu0 0
      %1633 = vmatpush1.bf16.msra.mxu0 %v1608
      %1634 = vmatprep.subr.bf16.mxu0 0
      %1635 = vmatpush1.bf16.msra.mxu0 %v1607
      %1636 = vmatprep.subr.bf16.mxu0 0
      %1637 = vmatpush1.bf16.msra.mxu0 %v1606
      %1638 = vmatprep.subr.bf16.mxu0 0
      %1639 = vmatpush2.bf16.msra.mxu0 0
      %1640 = vmatprep.subr.bf16.mxu0 0
      %1641 = vmatpush2.bf16.msra.mxu0 0
      %1642 = vmatprep.subr.bf16.mxu0 0
      %1643 = vmatpush2.bf16.msra.mxu0 0
      %1644 = vmatprep.subr.bf16.mxu0 0
      %1645 = vmatpush2.bf16.msra.mxu0 0
      %1646 = vmatprep.subr.bf16.mxu0 0
      %1647 = vmatpush2.bf16.msra.mxu0 0
      %1648 = vmatprep.subr.bf16.mxu0 0
      %1649 = vmatpush2.bf16.msra.mxu0 0
      %1650 = vmatprep.subr.bf16.mxu0 0
      %1651 = vmatpush2.bf16.msra.mxu0 0
      %1652 = vmatprep.subr.bf16.mxu0 0
      %1653 = vmatpush2.bf16.msra.mxu0 0
      %1654 = vmatprep.mubr.bf16.mxu0 0
      %1655 = vmatmul.mubr.bf16.gmra.mxu0 %v1542
      %v1656 = vpop.f32.mrf.mxu0
      %v1657 = vadd.f32 0.0, %v1656
      %v1658 = vpop.f32.mrf.mxu0
      %v1659 = vpop.f32.mrf.mxu0
      %v1660 = vadd.f32 0.0, %v1659
      %v1661 = vpop.f32.mrf.mxu0
      %1662 = vmatprep.mubr.bf16.mxu0 0
      %1663 = vmatmul.mubr.bf16.gmra.mxu0 %v1543
      %v1664 = vpop.f32.mrf.mxu0
      %v1665 = vadd.f32 0.0, %v1664
      %v1666 = vpop.f32.mrf.mxu0
      %v1667 = vpop.f32.mrf.mxu0
      %v1668 = vadd.f32 0.0, %v1667
      %v1669 = vpop.f32.mrf.mxu0
      %1670 = vmatprep.mubr.bf16.mxu0 0
      %1671 = vmatmul.mubr.bf16.gmra.mxu0 %v1544
      %v1672 = vpop.f32.mrf.mxu0
      %v1673 = vadd.f32 0.0, %v1672
      %v1674 = vpop.f32.mrf.mxu0
      %v1675 = vpop.f32.mrf.mxu0
      %v1676 = vadd.f32 0.0, %v1675
      %v1677 = vpop.f32.mrf.mxu0
      %1678 = vmatprep.mubr.bf16.mxu0 0
      %1679 = vmatmul.mubr.bf16.gmra.mxu0 %v1545
      %v1680 = vpop.f32.mrf.mxu0
      %v1681 = vadd.f32 0.0, %v1680
      %v1682 = vpop.f32.mrf.mxu0
      %v1683 = vpop.f32.mrf.mxu0
      %v1684 = vadd.f32 0.0, %v1683
      %v1685 = vpop.f32.mrf.mxu0
      %1686 = vmatprep.mubr.bf16.mxu0 0
      %1687 = vmatmul.mubr.bf16.gmra.mxu0 %v1546
      %v1688 = vpop.f32.mrf.mxu0
      %v1689 = vadd.f32 0.0, %v1688
      %v1690 = vpop.f32.mrf.mxu0
      %v1691 = vpop.f32.mrf.mxu0
      %v1692 = vadd.f32 0.0, %v1691
      %v1693 = vpop.f32.mrf.mxu0
      %1694 = vmatprep.mubr.bf16.mxu0 0
      %1695 = vmatmul.mubr.bf16.gmra.mxu0 %v1547
      %v1696 = vpop.f32.mrf.mxu0
      %v1697 = vadd.f32 0.0, %v1696
      %v1698 = vpop.f32.mrf.mxu0
      %v1699 = vpop.f32.mrf.mxu0
      %v1700 = vadd.f32 0.0, %v1699
      %v1701 = vpop.f32.mrf.mxu0
      %1702 = vmatprep.mubr.bf16.mxu0 0
      %1703 = vmatmul.mubr.bf16.gmra.mxu0 %v1548
      %v1704 = vpop.f32.mrf.mxu0
      %v1705 = vadd.f32 0.0, %v1704
      %v1706 = vpop.f32.mrf.mxu0
      %v1707 = vpop.f32.mrf.mxu0
      %v1708 = vadd.f32 0.0, %v1707
      %v1709 = vpop.f32.mrf.mxu0
      %1710 = vmatprep.mubr.bf16.mxu0 0
      %1711 = vmatmul.mubr.bf16.gmra.mxu0 %v1549
      %v1712 = vpop.f32.mrf.mxu0
      %v1713 = vadd.f32 0.0, %v1712
      %v1714 = vpop.f32.mrf.mxu0
      %v1715 = vpop.f32.mrf.mxu0
      %v1716 = vadd.f32 0.0, %v1715
      %v1717 = vpop.f32.mrf.mxu0
      %1718 = vmatprep.mubr.bf16.mxu0 0
      %1719 = vmatmul.mubr.bf16.gmra.mxu0 %v1550
      %v1720 = vpop.f32.mrf.mxu0
      %v1721 = vadd.f32 0.0, %v1720
      %v1722 = vpop.f32.mrf.mxu0
      %v1723 = vpop.f32.mrf.mxu0
      %v1724 = vadd.f32 0.0, %v1723
      %v1725 = vpop.f32.mrf.mxu0
      %1726 = vmatprep.mubr.bf16.mxu0 0
      %1727 = vmatmul.mubr.bf16.gmra.mxu0 %v1551
      %v1728 = vpop.f32.mrf.mxu0
      %v1729 = vadd.f32 0.0, %v1728
      %v1730 = vpop.f32.mrf.mxu0
      %v1731 = vpop.f32.mrf.mxu0
      %v1732 = vadd.f32 0.0, %v1731
      %v1733 = vpop.f32.mrf.mxu0
      %1734 = vmatprep.mubr.bf16.mxu0 0
      %1735 = vmatmul.mubr.bf16.gmra.mxu0 %v1552
      %v1736 = vpop.f32.mrf.mxu0
      %v1737 = vadd.f32 0.0, %v1736
      %v1738 = vpop.f32.mrf.mxu0
      %v1739 = vpop.f32.mrf.mxu0
      %v1740 = vadd.f32 0.0, %v1739
      %v1741 = vpop.f32.mrf.mxu0
      %1742 = vmatprep.mubr.bf16.mxu0 0
      %1743 = vmatmul.mubr.bf16.gmra.mxu0 %v1553
      %v1744 = vpop.f32.mrf.mxu0
      %v1745 = vadd.f32 0.0, %v1744
      %v1746 = vpop.f32.mrf.mxu0
      %v1747 = vpop.f32.mrf.mxu0
      %v1748 = vadd.f32 0.0, %v1747
      %v1749 = vpop.f32.mrf.mxu0
      %1750 = vmatprep.mubr.bf16.mxu0 0
      %1751 = vmatmul.mubr.bf16.gmra.mxu0 %v1554
      %v1752 = vpop.f32.mrf.mxu0
      %v1753 = vadd.f32 0.0, %v1752
      %v1754 = vpop.f32.mrf.mxu0
      %v1755 = vpop.f32.mrf.mxu0
      %v1756 = vadd.f32 0.0, %v1755
      %v1757 = vpop.f32.mrf.mxu0
      %1758 = vmatprep.mubr.bf16.mxu0 0
      %1759 = vmatmul.mubr.bf16.gmra.mxu0 %v1555
      %v1760 = vpop.f32.mrf.mxu0
      %v1761 = vadd.f32 0.0, %v1760
      %v1762 = vpop.f32.mrf.mxu0
      %v1763 = vpop.f32.mrf.mxu0
      %v1764 = vadd.f32 0.0, %v1763
      %v1765 = vpop.f32.mrf.mxu0
      %1766 = vmatprep.mubr.bf16.mxu0 0
      %1767 = vmatmul.mubr.bf16.gmra.mxu0 %v1556
      %v1768 = vpop.f32.mrf.mxu0
      %v1769 = vadd.f32 0.0, %v1768
      %v1770 = vpop.f32.mrf.mxu0
      %v1771 = vpop.f32.mrf.mxu0
      %v1772 = vadd.f32 0.0, %v1771
      %v1773 = vpop.f32.mrf.mxu0
      %1774 = vmatprep.mubr.bf16.mxu0 0
      %1775 = vmatmul.mubr.bf16.gmra.mxu0 %v1557
      %v1776 = vpop.f32.mrf.mxu0
      %v1777 = vadd.f32 0.0, %v1776
      %v1778 = vpop.f32.mrf.mxu0
      %v1779 = vpop.f32.mrf.mxu0
      %v1780 = vadd.f32 0.0, %v1779
      %v1781 = vpop.f32.mrf.mxu0
      %1782 = vdwg.mxu0
      %v1783 = vadd.f32 %v1253, %v1657
      %v1784 = vadd.f32 %v1256, %v1660
      %v1785 = vadd.f32 %v1261, %v1665
      %v1786 = vadd.f32 %v1264, %v1668
      %v1787 = vadd.f32 %v1269, %v1673
      %v1788 = vadd.f32 %v1272, %v1676
      %v1789 = vadd.f32 %v1277, %v1681
      %v1790 = vadd.f32 %v1280, %v1684
      %v1791 = vadd.f32 %v1285, %v1689
      %v1792 = vadd.f32 %v1288, %v1692
      %v1793 = vadd.f32 %v1293, %v1697
      %v1794 = vadd.f32 %v1296, %v1700
      %v1795 = vadd.f32 %v1301, %v1705
      %v1796 = vadd.f32 %v1304, %v1708
      %v1797 = vadd.f32 %v1309, %v1713
      %v1798 = vadd.f32 %v1312, %v1716
      %v1799 = vadd.f32 %v1317, %v1721
      %v1800 = vadd.f32 %v1320, %v1724
      %v1801 = vadd.f32 %v1325, %v1729
      %v1802 = vadd.f32 %v1328, %v1732
      %v1803 = vadd.f32 %v1333, %v1737
      %v1804 = vadd.f32 %v1336, %v1740
      %v1805 = vadd.f32 %v1341, %v1745
      %v1806 = vadd.f32 %v1344, %v1748
      %v1807 = vadd.f32 %v1349, %v1753
      %v1808 = vadd.f32 %v1352, %v1756
      %v1809 = vadd.f32 %v1357, %v1761
      %v1810 = vadd.f32 %v1360, %v1764
      %v1811 = vadd.f32 %v1365, %v1769
      %v1812 = vadd.f32 %v1368, %v1772
      %v1813 = vadd.f32 %v1373, %v1777
      %v1814 = vadd.f32 %v1376, %v1780
      %v1817 = vunpack.c.l.b16 %v264
      %v1818 = vunpack.c.l.b16 %v265
      %v1819 = vpack.c.b16 %v1818, %v1817
      %v1837 = vunpack.c.l.b16 %v318
      %v1838 = vunpack.c.l.b16 %v319
      %v1839 = vunpack.c.l.b16 %v320
      %v1840 = vunpack.c.l.b16 %v321
      %v1841 = vunpack.c.l.b16 %v322
      %v1842 = vunpack.c.l.b16 %v323
      %v1843 = vunpack.c.l.b16 %v324
      %v1844 = vunpack.c.l.b16 %v325
      %v1845 = vunpack.c.l.b16 %v326
      %v1846 = vunpack.c.l.b16 %v327
      %v1847 = vunpack.c.l.b16 %v328
      %v1848 = vunpack.c.l.b16 %v329
      %v1849 = vunpack.c.l.b16 %v330
      %v1850 = vunpack.c.l.b16 %v331
      %v1851 = vunpack.c.l.b16 %v332
      %v1852 = vunpack.c.l.b16 %v333
      %v1853 = vpack.c.b16 %v1838, %v1837
      %v1854 = vpack.c.b16 %v1840, %v1839
      %v1855 = vpack.c.b16 %v1842, %v1841
      %v1856 = vpack.c.b16 %v1844, %v1843
      %v1857 = vpack.c.b16 %v1846, %v1845
      %v1858 = vpack.c.b16 %v1848, %v1847
      %v1859 = vpack.c.b16 %v1850, %v1849
      %v1860 = vpack.c.b16 %v1852, %v1851
      %1869 = vmatprep.subr.bf16.mxu0 0
      %1870 = vmatpush1.bf16.msra.mxu0 %v1860
      %1871 = vmatprep.subr.bf16.mxu0 0
      %1872 = vmatpush1.bf16.msra.mxu0 %v1859
      %1873 = vmatprep.subr.bf16.mxu0 0
      %1874 = vmatpush1.bf16.msra.mxu0 %v1858
      %1875 = vmatprep.subr.bf16.mxu0 0
      %1876 = vmatpush1.bf16.msra.mxu0 %v1857
      %1877 = vmatprep.subr.bf16.mxu0 0
      %1878 = vmatpush1.bf16.msra.mxu0 %v1856
      %1879 = vmatprep.subr.bf16.mxu0 0
      %1880 = vmatpush1.bf16.msra.mxu0 %v1855
      %1881 = vmatprep.subr.bf16.mxu0 0
      %1882 = vmatpush1.bf16.msra.mxu0 %v1854
      %1883 = vmatprep.subr.bf16.mxu0 0
      %1884 = vmatpush1.bf16.msra.mxu0 %v1853
      %1885 = vmatprep.subr.bf16.mxu0 0
      %1886 = vmatpush2.bf16.msra.mxu0 0
      %1887 = vmatprep.subr.bf16.mxu0 0
      %1888 = vmatpush2.bf16.msra.mxu0 0
      %1889 = vmatprep.subr.bf16.mxu0 0
      %1890 = vmatpush2.bf16.msra.mxu0 0
      %1891 = vmatprep.subr.bf16.mxu0 0
      %1892 = vmatpush2.bf16.msra.mxu0 0
      %1893 = vmatprep.subr.bf16.mxu0 0
      %1894 = vmatpush2.bf16.msra.mxu0 0
      %1895 = vmatprep.subr.bf16.mxu0 0
      %1896 = vmatpush2.bf16.msra.mxu0 0
      %1897 = vmatprep.subr.bf16.mxu0 0
      %1898 = vmatpush2.bf16.msra.mxu0 0
      %1899 = vmatprep.subr.bf16.mxu0 0
      %1900 = vmatpush2.bf16.msra.mxu0 0
      %1901 = vmatprep.mubr.bf16.mxu0 0
      %1902 = vmatmul.mubr.bf16.gmra.mxu0 %v1139
      %v1903 = vpop.f32.mrf.mxu0
      %v1904 = vadd.f32 0.0, %v1903
      %v1905 = vpop.f32.mrf.mxu0
      %v1906 = vpop.f32.mrf.mxu0
      %v1907 = vadd.f32 0.0, %v1906
      %v1908 = vpop.f32.mrf.mxu0
      %1909 = vmatprep.mubr.bf16.mxu0 0
      %1910 = vmatmul.mubr.bf16.gmra.mxu0 %v1140
      %v1911 = vpop.f32.mrf.mxu0
      %v1912 = vadd.f32 0.0, %v1911
      %v1913 = vpop.f32.mrf.mxu0
      %v1914 = vpop.f32.mrf.mxu0
      %v1915 = vadd.f32 0.0, %v1914
      %v1916 = vpop.f32.mrf.mxu0
      %1917 = vmatprep.mubr.bf16.mxu0 0
      %1918 = vmatmul.mubr.bf16.gmra.mxu0 %v1141
      %v1919 = vpop.f32.mrf.mxu0
      %v1920 = vadd.f32 0.0, %v1919
      %v1921 = vpop.f32.mrf.mxu0
      %v1922 = vpop.f32.mrf.mxu0
      %v1923 = vadd.f32 0.0, %v1922
      %v1924 = vpop.f32.mrf.mxu0
      %1925 = vmatprep.mubr.bf16.mxu0 0
      %1926 = vmatmul.mubr.bf16.gmra.mxu0 %v1142
      %v1927 = vpop.f32.mrf.mxu0
      %v1928 = vadd.f32 0.0, %v1927
      %v1929 = vpop.f32.mrf.mxu0
      %v1930 = vpop.f32.mrf.mxu0
      %v1931 = vadd.f32 0.0, %v1930
      %v1932 = vpop.f32.mrf.mxu0
      %1933 = vmatprep.mubr.bf16.mxu0 0
      %1934 = vmatmul.mubr.bf16.gmra.mxu0 %v1143
      %v1935 = vpop.f32.mrf.mxu0
      %v1936 = vadd.f32 0.0, %v1935
      %v1937 = vpop.f32.mrf.mxu0
      %v1938 = vpop.f32.mrf.mxu0
      %v1939 = vadd.f32 0.0, %v1938
      %v1940 = vpop.f32.mrf.mxu0
      %1941 = vmatprep.mubr.bf16.mxu0 0
      %1942 = vmatmul.mubr.bf16.gmra.mxu0 %v1144
      %v1943 = vpop.f32.mrf.mxu0
      %v1944 = vadd.f32 0.0, %v1943
      %v1945 = vpop.f32.mrf.mxu0
      %v1946 = vpop.f32.mrf.mxu0
      %v1947 = vadd.f32 0.0, %v1946
      %v1948 = vpop.f32.mrf.mxu0
      %1949 = vmatprep.mubr.bf16.mxu0 0
      %1950 = vmatmul.mubr.bf16.gmra.mxu0 %v1145
      %v1951 = vpop.f32.mrf.mxu0
      %v1952 = vadd.f32 0.0, %v1951
      %v1953 = vpop.f32.mrf.mxu0
      %v1954 = vpop.f32.mrf.mxu0
      %v1955 = vadd.f32 0.0, %v1954
      %v1956 = vpop.f32.mrf.mxu0
      %1957 = vmatprep.mubr.bf16.mxu0 0
      %1958 = vmatmul.mubr.bf16.gmra.mxu0 %v1146
      %v1959 = vpop.f32.mrf.mxu0
      %v1960 = vadd.f32 0.0, %v1959
      %v1961 = vpop.f32.mrf.mxu0
      %v1962 = vpop.f32.mrf.mxu0
      %v1963 = vadd.f32 0.0, %v1962
      %v1964 = vpop.f32.mrf.mxu0
      %1965 = vmatprep.mubr.bf16.mxu0 0
      %1966 = vmatmul.mubr.bf16.gmra.mxu0 %v1147
      %v1967 = vpop.f32.mrf.mxu0
      %v1968 = vadd.f32 0.0, %v1967
      %v1969 = vpop.f32.mrf.mxu0
      %v1970 = vpop.f32.mrf.mxu0
      %v1971 = vadd.f32 0.0, %v1970
      %v1972 = vpop.f32.mrf.mxu0
      %1973 = vmatprep.mubr.bf16.mxu0 0
      %1974 = vmatmul.mubr.bf16.gmra.mxu0 %v1148
      %v1975 = vpop.f32.mrf.mxu0
      %v1976 = vadd.f32 0.0, %v1975
      %v1977 = vpop.f32.mrf.mxu0
      %v1978 = vpop.f32.mrf.mxu0
      %v1979 = vadd.f32 0.0, %v1978
      %v1980 = vpop.f32.mrf.mxu0
      %1981 = vmatprep.mubr.bf16.mxu0 0
      %1982 = vmatmul.mubr.bf16.gmra.mxu0 %v1149
      %v1983 = vpop.f32.mrf.mxu0
      %v1984 = vadd.f32 0.0, %v1983
      %v1985 = vpop.f32.mrf.mxu0
      %v1986 = vpop.f32.mrf.mxu0
      %v1987 = vadd.f32 0.0, %v1986
      %v1988 = vpop.f32.mrf.mxu0
      %1989 = vmatprep.mubr.bf16.mxu0 0
      %1990 = vmatmul.mubr.bf16.gmra.mxu0 %v1150
      %v1991 = vpop.f32.mrf.mxu0
      %v1992 = vadd.f32 0.0, %v1991
      %v1993 = vpop.f32.mrf.mxu0
      %v1994 = vpop.f32.mrf.mxu0
      %v1995 = vadd.f32 0.0, %v1994
      %v1996 = vpop.f32.mrf.mxu0
      %1997 = vmatprep.mubr.bf16.mxu0 0
      %1998 = vmatmul.mubr.bf16.gmra.mxu0 %v1151
      %v1999 = vpop.f32.mrf.mxu0
      %v2000 = vadd.f32 0.0, %v1999
      %v2001 = vpop.f32.mrf.mxu0
      %v2002 = vpop.f32.mrf.mxu0
      %v2003 = vadd.f32 0.0, %v2002
      %v2004 = vpop.f32.mrf.mxu0
      %2005 = vmatprep.mubr.bf16.mxu0 0
      %2006 = vmatmul.mubr.bf16.gmra.mxu0 %v1152
      %v2007 = vpop.f32.mrf.mxu0
      %v2008 = vadd.f32 0.0, %v2007
      %v2009 = vpop.f32.mrf.mxu0
      %v2010 = vpop.f32.mrf.mxu0
      %v2011 = vadd.f32 0.0, %v2010
      %v2012 = vpop.f32.mrf.mxu0
      %2013 = vmatprep.mubr.bf16.mxu0 0
      %2014 = vmatmul.mubr.bf16.gmra.mxu0 %v1153
      %v2015 = vpop.f32.mrf.mxu0
      %v2016 = vadd.f32 0.0, %v2015
      %v2017 = vpop.f32.mrf.mxu0
      %v2018 = vpop.f32.mrf.mxu0
      %v2019 = vadd.f32 0.0, %v2018
      %v2020 = vpop.f32.mrf.mxu0
      %2021 = vmatprep.mubr.bf16.mxu0 0
      %2022 = vmatmul.mubr.bf16.gmra.mxu0 %v1819
      %v2023 = vpop.f32.mrf.mxu0
      %v2024 = vadd.f32 0.0, %v2023
      %v2025 = vpop.f32.mrf.mxu0
      %v2026 = vpop.f32.mrf.mxu0
      %v2027 = vadd.f32 0.0, %v2026
      %v2028 = vpop.f32.mrf.mxu0
      %2029 = vdwg.mxu0
      %v2030 = vadd.f32 %v1783, %v1904
      %v2031 = vadd.f32 %v1784, %v1907
      %v2032 = vadd.f32 %v1785, %v1912
      %v2033 = vadd.f32 %v1786, %v1915
      %v2034 = vadd.f32 %v1787, %v1920
      %v2035 = vadd.f32 %v1788, %v1923
      %v2036 = vadd.f32 %v1789, %v1928
      %v2037 = vadd.f32 %v1790, %v1931
      %v2038 = vadd.f32 %v1791, %v1936
      %v2039 = vadd.f32 %v1792, %v1939
      %v2040 = vadd.f32 %v1793, %v1944
      %v2041 = vadd.f32 %v1794, %v1947
      %v2042 = vadd.f32 %v1795, %v1952
      %v2043 = vadd.f32 %v1796, %v1955
      %v2044 = vadd.f32 %v1797, %v1960
      %v2045 = vadd.f32 %v1798, %v1963
      %v2046 = vadd.f32 %v1799, %v1968
      %v2047 = vadd.f32 %v1800, %v1971
      %v2048 = vadd.f32 %v1801, %v1976
      %v2049 = vadd.f32 %v1802, %v1979
      %v2050 = vadd.f32 %v1803, %v1984
      %v2051 = vadd.f32 %v1804, %v1987
      %v2052 = vadd.f32 %v1805, %v1992
      %v2053 = vadd.f32 %v1806, %v1995
      %v2054 = vadd.f32 %v1807, %v2000
      %v2055 = vadd.f32 %v1808, %v2003
      %v2056 = vadd.f32 %v1809, %v2008
      %v2057 = vadd.f32 %v1810, %v2011
      %v2058 = vadd.f32 %v1811, %v2016
      %v2059 = vadd.f32 %v1812, %v2019
      %v2060 = vadd.f32 %v1813, %v2024
      %v2061 = vadd.f32 %v1814, %v2027
      %v2063 = vshrl.u32 %v264, 16
      %v2065 = vrot.slane %v2063, 4
      %v2066 = vshll.u32 %v264, 16
      %v2068 = vrot.slane %v2066, 5
      %v2069 = vor.u32 %v2065, %v2068
      %v2070 = vrot.slane %v2069, 4
      %v2072 = vshll.u32 %v265, 16
      %v2074 = vrot.slane %v2072, 5
      %v2075 = vsel %vm416, %v2070, %v2074
      %v2076 = vshrl.u32 %v265, 16
      %v2078 = vrot.slane %v2076, 4
      %v2079 = vor.u32 %v2078, %v2074
      %v2080 = vrot.slane %v2079, 4
      %v2082 = vshll.u32 %v266, 16
      %v2084 = vrot.slane %v2082, 5
      %v2085 = vsel %vm416, %v2080, %v2084
      %v2086 = vunpack.c.l.b16 %v2075
      %v2087 = vunpack.c.l.b16 %v2085
      %v2088 = vpack.c.b16 %v2087, %v2086
      %v2106 = vunpack.c.l.b16 %v334
      %v2107 = vunpack.c.l.b16 %v335
      %v2108 = vunpack.c.l.b16 %v336
      %v2109 = vunpack.c.l.b16 %v337
      %v2110 = vunpack.c.l.b16 %v338
      %v2111 = vunpack.c.l.b16 %v339
      %v2112 = vunpack.c.l.b16 %v340
      %v2113 = vunpack.c.l.b16 %v341
      %v2114 = vunpack.c.l.b16 %v342
      %v2115 = vunpack.c.l.b16 %v343
      %v2116 = vunpack.c.l.b16 %v344
      %v2117 = vunpack.c.l.b16 %v345
      %v2118 = vunpack.c.l.b16 %v346
      %v2119 = vunpack.c.l.b16 %v347
      %v2120 = vunpack.c.l.b16 %v348
      %v2121 = vunpack.c.l.b16 %v349
      %v2122 = vpack.c.b16 %v2107, %v2106
      %v2123 = vpack.c.b16 %v2109, %v2108
      %v2124 = vpack.c.b16 %v2111, %v2110
      %v2125 = vpack.c.b16 %v2113, %v2112
      %v2126 = vpack.c.b16 %v2115, %v2114
      %v2127 = vpack.c.b16 %v2117, %v2116
      %v2128 = vpack.c.b16 %v2119, %v2118
      %v2129 = vpack.c.b16 %v2121, %v2120
      %2138 = vmatprep.subr.bf16.mxu0 0
      %2139 = vmatpush1.bf16.msra.mxu0 %v2129
      %2140 = vmatprep.subr.bf16.mxu0 0
      %2141 = vmatpush1.bf16.msra.mxu0 %v2128
      %2142 = vmatprep.subr.bf16.mxu0 0
      %2143 = vmatpush1.bf16.msra.mxu0 %v2127
      %2144 = vmatprep.subr.bf16.mxu0 0
      %2145 = vmatpush1.bf16.msra.mxu0 %v2126
      %2146 = vmatprep.subr.bf16.mxu0 0
      %2147 = vmatpush1.bf16.msra.mxu0 %v2125
      %2148 = vmatprep.subr.bf16.mxu0 0
      %2149 = vmatpush1.bf16.msra.mxu0 %v2124
      %2150 = vmatprep.subr.bf16.mxu0 0
      %2151 = vmatpush1.bf16.msra.mxu0 %v2123
      %2152 = vmatprep.subr.bf16.mxu0 0
      %2153 = vmatpush1.bf16.msra.mxu0 %v2122
      %2154 = vmatprep.subr.bf16.mxu0 0
      %2155 = vmatpush2.bf16.msra.mxu0 0
      %2156 = vmatprep.subr.bf16.mxu0 0
      %2157 = vmatpush2.bf16.msra.mxu0 0
      %2158 = vmatprep.subr.bf16.mxu0 0
      %2159 = vmatpush2.bf16.msra.mxu0 0
      %2160 = vmatprep.subr.bf16.mxu0 0
      %2161 = vmatpush2.bf16.msra.mxu0 0
      %2162 = vmatprep.subr.bf16.mxu0 0
      %2163 = vmatpush2.bf16.msra.mxu0 0
      %2164 = vmatprep.subr.bf16.mxu0 0
      %2165 = vmatpush2.bf16.msra.mxu0 0
      %2166 = vmatprep.subr.bf16.mxu0 0
      %2167 = vmatpush2.bf16.msra.mxu0 0
      %2168 = vmatprep.subr.bf16.mxu0 0
      %2169 = vmatpush2.bf16.msra.mxu0 0
      %2170 = vmatprep.mubr.bf16.mxu0 0
      %2171 = vmatmul.mubr.bf16.gmra.mxu0 %v834
      %v2172 = vpop.f32.mrf.mxu0
      %v2173 = vadd.f32 0.0, %v2172
      %v2174 = vpop.f32.mrf.mxu0
      %v2175 = vpop.f32.mrf.mxu0
      %v2176 = vadd.f32 0.0, %v2175
      %v2177 = vpop.f32.mrf.mxu0
      %2178 = vmatprep.mubr.bf16.mxu0 0
      %2179 = vmatmul.mubr.bf16.gmra.mxu0 %v835
      %v2180 = vpop.f32.mrf.mxu0
      %v2181 = vadd.f32 0.0, %v2180
      %v2182 = vpop.f32.mrf.mxu0
      %v2183 = vpop.f32.mrf.mxu0
      %v2184 = vadd.f32 0.0, %v2183
      %v2185 = vpop.f32.mrf.mxu0
      %2186 = vmatprep.mubr.bf16.mxu0 0
      %2187 = vmatmul.mubr.bf16.gmra.mxu0 %v836
      %v2188 = vpop.f32.mrf.mxu0
      %v2189 = vadd.f32 0.0, %v2188
      %v2190 = vpop.f32.mrf.mxu0
      %v2191 = vpop.f32.mrf.mxu0
      %v2192 = vadd.f32 0.0, %v2191
      %v2193 = vpop.f32.mrf.mxu0
      %2194 = vmatprep.mubr.bf16.mxu0 0
      %2195 = vmatmul.mubr.bf16.gmra.mxu0 %v837
      %v2196 = vpop.f32.mrf.mxu0
      %v2197 = vadd.f32 0.0, %v2196
      %v2198 = vpop.f32.mrf.mxu0
      %v2199 = vpop.f32.mrf.mxu0
      %v2200 = vadd.f32 0.0, %v2199
      %v2201 = vpop.f32.mrf.mxu0
      %2202 = vmatprep.mubr.bf16.mxu0 0
      %2203 = vmatmul.mubr.bf16.gmra.mxu0 %v838
      %v2204 = vpop.f32.mrf.mxu0
      %v2205 = vadd.f32 0.0, %v2204
      %v2206 = vpop.f32.mrf.mxu0
      %v2207 = vpop.f32.mrf.mxu0
      %v2208 = vadd.f32 0.0, %v2207
      %v2209 = vpop.f32.mrf.mxu0
      %2210 = vmatprep.mubr.bf16.mxu0 0
      %2211 = vmatmul.mubr.bf16.gmra.mxu0 %v839
      %v2212 = vpop.f32.mrf.mxu0
      %v2213 = vadd.f32 0.0, %v2212
      %v2214 = vpop.f32.mrf.mxu0
      %v2215 = vpop.f32.mrf.mxu0
      %v2216 = vadd.f32 0.0, %v2215
      %v2217 = vpop.f32.mrf.mxu0
      %2218 = vmatprep.mubr.bf16.mxu0 0
      %2219 = vmatmul.mubr.bf16.gmra.mxu0 %v840
      %v2220 = vpop.f32.mrf.mxu0
      %v2221 = vadd.f32 0.0, %v2220
      %v2222 = vpop.f32.mrf.mxu0
      %v2223 = vpop.f32.mrf.mxu0
      %v2224 = vadd.f32 0.0, %v2223
      %v2225 = vpop.f32.mrf.mxu0
      %2226 = vmatprep.mubr.bf16.mxu0 0
      %2227 = vmatmul.mubr.bf16.gmra.mxu0 %v841
      %v2228 = vpop.f32.mrf.mxu0
      %v2229 = vadd.f32 0.0, %v2228
      %v2230 = vpop.f32.mrf.mxu0
      %v2231 = vpop.f32.mrf.mxu0
      %v2232 = vadd.f32 0.0, %v2231
      %v2233 = vpop.f32.mrf.mxu0
      %2234 = vmatprep.mubr.bf16.mxu0 0
      %2235 = vmatmul.mubr.bf16.gmra.mxu0 %v842
      %v2236 = vpop.f32.mrf.mxu0
      %v2237 = vadd.f32 0.0, %v2236
      %v2238 = vpop.f32.mrf.mxu0
      %v2239 = vpop.f32.mrf.mxu0
      %v2240 = vadd.f32 0.0, %v2239
      %v2241 = vpop.f32.mrf.mxu0
      %2242 = vmatprep.mubr.bf16.mxu0 0
      %2243 = vmatmul.mubr.bf16.gmra.mxu0 %v843
      %v2244 = vpop.f32.mrf.mxu0
      %v2245 = vadd.f32 0.0, %v2244
      %v2246 = vpop.f32.mrf.mxu0
      %v2247 = vpop.f32.mrf.mxu0
      %v2248 = vadd.f32 0.0, %v2247
      %v2249 = vpop.f32.mrf.mxu0
      %2250 = vmatprep.mubr.bf16.mxu0 0
      %2251 = vmatmul.mubr.bf16.gmra.mxu0 %v844
      %v2252 = vpop.f32.mrf.mxu0
      %v2253 = vadd.f32 0.0, %v2252
      %v2254 = vpop.f32.mrf.mxu0
      %v2255 = vpop.f32.mrf.mxu0
      %v2256 = vadd.f32 0.0, %v2255
      %v2257 = vpop.f32.mrf.mxu0
      %2258 = vmatprep.mubr.bf16.mxu0 0
      %2259 = vmatmul.mubr.bf16.gmra.mxu0 %v845
      %v2260 = vpop.f32.mrf.mxu0
      %v2261 = vadd.f32 0.0, %v2260
      %v2262 = vpop.f32.mrf.mxu0
      %v2263 = vpop.f32.mrf.mxu0
      %v2264 = vadd.f32 0.0, %v2263
      %v2265 = vpop.f32.mrf.mxu0
      %2266 = vmatprep.mubr.bf16.mxu0 0
      %2267 = vmatmul.mubr.bf16.gmra.mxu0 %v846
      %v2268 = vpop.f32.mrf.mxu0
      %v2269 = vadd.f32 0.0, %v2268
      %v2270 = vpop.f32.mrf.mxu0
      %v2271 = vpop.f32.mrf.mxu0
      %v2272 = vadd.f32 0.0, %v2271
      %v2273 = vpop.f32.mrf.mxu0
      %2274 = vmatprep.mubr.bf16.mxu0 0
      %2275 = vmatmul.mubr.bf16.gmra.mxu0 %v847
      %v2276 = vpop.f32.mrf.mxu0
      %v2277 = vadd.f32 0.0, %v2276
      %v2278 = vpop.f32.mrf.mxu0
      %v2279 = vpop.f32.mrf.mxu0
      %v2280 = vadd.f32 0.0, %v2279
      %v2281 = vpop.f32.mrf.mxu0
      %2282 = vmatprep.mubr.bf16.mxu0 0
      %2283 = vmatmul.mubr.bf16.gmra.mxu0 %v848
      %v2284 = vpop.f32.mrf.mxu0
      %v2285 = vadd.f32 0.0, %v2284
      %v2286 = vpop.f32.mrf.mxu0
      %v2287 = vpop.f32.mrf.mxu0
      %v2288 = vadd.f32 0.0, %v2287
      %v2289 = vpop.f32.mrf.mxu0
      %2290 = vmatprep.mubr.bf16.mxu0 0
      %2291 = vmatmul.mubr.bf16.gmra.mxu0 %v2088
      %v2292 = vpop.f32.mrf.mxu0
      %v2293 = vadd.f32 0.0, %v2292
      %v2294 = vpop.f32.mrf.mxu0
      %v2295 = vpop.f32.mrf.mxu0
      %v2296 = vadd.f32 0.0, %v2295
      %v2297 = vpop.f32.mrf.mxu0
      %2298 = vdwg.mxu0
      %v2299 = vadd.f32 %v2030, %v2173
      %v2300 = vadd.f32 %v2031, %v2176
      %v2301 = vadd.f32 %v2032, %v2181
      %v2302 = vadd.f32 %v2033, %v2184
      %v2303 = vadd.f32 %v2034, %v2189
      %v2304 = vadd.f32 %v2035, %v2192
      %v2305 = vadd.f32 %v2036, %v2197
      %v2306 = vadd.f32 %v2037, %v2200
      %v2307 = vadd.f32 %v2038, %v2205
      %v2308 = vadd.f32 %v2039, %v2208
      %v2309 = vadd.f32 %v2040, %v2213
      %v2310 = vadd.f32 %v2041, %v2216
      %v2311 = vadd.f32 %v2042, %v2221
      %v2312 = vadd.f32 %v2043, %v2224
      %v2313 = vadd.f32 %v2044, %v2229
      %v2314 = vadd.f32 %v2045, %v2232
      %v2315 = vadd.f32 %v2046, %v2237
      %v2316 = vadd.f32 %v2047, %v2240
      %v2317 = vadd.f32 %v2048, %v2245
      %v2318 = vadd.f32 %v2049, %v2248
      %v2319 = vadd.f32 %v2050, %v2253
      %v2320 = vadd.f32 %v2051, %v2256
      %v2321 = vadd.f32 %v2052, %v2261
      %v2322 = vadd.f32 %v2053, %v2264
      %v2323 = vadd.f32 %v2054, %v2269
      %v2324 = vadd.f32 %v2055, %v2272
      %v2325 = vadd.f32 %v2056, %v2277
      %v2326 = vadd.f32 %v2057, %v2280
      %v2327 = vadd.f32 %v2058, %v2285
      %v2328 = vadd.f32 %v2059, %v2288
      %v2329 = vadd.f32 %v2060, %v2293
      %v2330 = vadd.f32 %v2061, %v2296
      %v2332 = vrot.slane %v264, 5
      %v2333 = vrot.slane %v2332, 4
      %v2334 = vrot.slane %v265, 5
      %v2335 = vsel %vm1397, %v2333, %v2334
      %v2336 = vrot.slane %v2334, 4
      %v2337 = vrot.slane %v266, 5
      %v2338 = vsel %vm1397, %v2336, %v2337
      %v2339 = vunpack.c.l.b16 %v2335
      %v2340 = vunpack.c.l.b16 %v2338
      %v2341 = vpack.c.b16 %v2340, %v2339
      %v2359 = vunpack.c.l.b16 %v350
      %v2360 = vunpack.c.l.b16 %v351
      %v2361 = vunpack.c.l.b16 %v352
      %v2362 = vunpack.c.l.b16 %v353
      %v2363 = vunpack.c.l.b16 %v354
      %v2364 = vunpack.c.l.b16 %v355
      %v2365 = vunpack.c.l.b16 %v356
      %v2366 = vunpack.c.l.b16 %v357
      %v2367 = vunpack.c.l.b16 %v358
      %v2368 = vunpack.c.l.b16 %v359
      %v2369 = vunpack.c.l.b16 %v360
      %v2370 = vunpack.c.l.b16 %v361
      %v2371 = vunpack.c.l.b16 %v362
      %v2372 = vunpack.c.l.b16 %v363
      %v2373 = vunpack.c.l.b16 %v364
      %v2374 = vunpack.c.l.b16 %v365
      %v2375 = vpack.c.b16 %v2360, %v2359
      %v2376 = vpack.c.b16 %v2362, %v2361
      %v2377 = vpack.c.b16 %v2364, %v2363
      %v2378 = vpack.c.b16 %v2366, %v2365
      %v2379 = vpack.c.b16 %v2368, %v2367
      %v2380 = vpack.c.b16 %v2370, %v2369
      %v2381 = vpack.c.b16 %v2372, %v2371
      %v2382 = vpack.c.b16 %v2374, %v2373
      %2391 = vmatprep.subr.bf16.mxu0 0
      %2392 = vmatpush1.bf16.msra.mxu0 %v2382
      %2393 = vmatprep.subr.bf16.mxu0 0
      %2394 = vmatpush1.bf16.msra.mxu0 %v2381
      %2395 = vmatprep.subr.bf16.mxu0 0
      %2396 = vmatpush1.bf16.msra.mxu0 %v2380
      %2397 = vmatprep.subr.bf16.mxu0 0
      %2398 = vmatpush1.bf16.msra.mxu0 %v2379
      %2399 = vmatprep.subr.bf16.mxu0 0
      %2400 = vmatpush1.bf16.msra.mxu0 %v2378
      %2401 = vmatprep.subr.bf16.mxu0 0
      %2402 = vmatpush1.bf16.msra.mxu0 %v2377
      %2403 = vmatprep.subr.bf16.mxu0 0
      %2404 = vmatpush1.bf16.msra.mxu0 %v2376
      %2405 = vmatprep.subr.bf16.mxu0 0
      %2406 = vmatpush1.bf16.msra.mxu0 %v2375
      %2407 = vmatprep.subr.bf16.mxu0 0
      %2408 = vmatpush2.bf16.msra.mxu0 0
      %2409 = vmatprep.subr.bf16.mxu0 0
      %2410 = vmatpush2.bf16.msra.mxu0 0
      %2411 = vmatprep.subr.bf16.mxu0 0
      %2412 = vmatpush2.bf16.msra.mxu0 0
      %2413 = vmatprep.subr.bf16.mxu0 0
      %2414 = vmatpush2.bf16.msra.mxu0 0
      %2415 = vmatprep.subr.bf16.mxu0 0
      %2416 = vmatpush2.bf16.msra.mxu0 0
      %2417 = vmatprep.subr.bf16.mxu0 0
      %2418 = vmatpush2.bf16.msra.mxu0 0
      %2419 = vmatprep.subr.bf16.mxu0 0
      %2420 = vmatpush2.bf16.msra.mxu0 0
      %2421 = vmatprep.subr.bf16.mxu0 0
      %2422 = vmatpush2.bf16.msra.mxu0 0
      %2423 = vmatprep.mubr.bf16.mxu0 0
      %2424 = vmatmul.mubr.bf16.gmra.mxu0 %v1543
      %v2425 = vpop.f32.mrf.mxu0
      %v2426 = vadd.f32 0.0, %v2425
      %v2427 = vpop.f32.mrf.mxu0
      %v2428 = vpop.f32.mrf.mxu0
      %v2429 = vadd.f32 0.0, %v2428
      %v2430 = vpop.f32.mrf.mxu0
      %2431 = vmatprep.mubr.bf16.mxu0 0
      %2432 = vmatmul.mubr.bf16.gmra.mxu0 %v1544
      %v2433 = vpop.f32.mrf.mxu0
      %v2434 = vadd.f32 0.0, %v2433
      %v2435 = vpop.f32.mrf.mxu0
      %v2436 = vpop.f32.mrf.mxu0
      %v2437 = vadd.f32 0.0, %v2436
      %v2438 = vpop.f32.mrf.mxu0
      %2439 = vmatprep.mubr.bf16.mxu0 0
      %2440 = vmatmul.mubr.bf16.gmra.mxu0 %v1545
      %v2441 = vpop.f32.mrf.mxu0
      %v2442 = vadd.f32 0.0, %v2441
      %v2443 = vpop.f32.mrf.mxu0
      %v2444 = vpop.f32.mrf.mxu0
      %v2445 = vadd.f32 0.0, %v2444
      %v2446 = vpop.f32.mrf.mxu0
      %2447 = vmatprep.mubr.bf16.mxu0 0
      %2448 = vmatmul.mubr.bf16.gmra.mxu0 %v1546
      %v2449 = vpop.f32.mrf.mxu0
      %v2450 = vadd.f32 0.0, %v2449
      %v2451 = vpop.f32.mrf.mxu0
      %v2452 = vpop.f32.mrf.mxu0
      %v2453 = vadd.f32 0.0, %v2452
      %v2454 = vpop.f32.mrf.mxu0
      %2455 = vmatprep.mubr.bf16.mxu0 0
      %2456 = vmatmul.mubr.bf16.gmra.mxu0 %v1547
      %v2457 = vpop.f32.mrf.mxu0
      %v2458 = vadd.f32 0.0, %v2457
      %v2459 = vpop.f32.mrf.mxu0
      %v2460 = vpop.f32.mrf.mxu0
      %v2461 = vadd.f32 0.0, %v2460
      %v2462 = vpop.f32.mrf.mxu0
      %2463 = vmatprep.mubr.bf16.mxu0 0
      %2464 = vmatmul.mubr.bf16.gmra.mxu0 %v1548
      %v2465 = vpop.f32.mrf.mxu0
      %v2466 = vadd.f32 0.0, %v2465
      %v2467 = vpop.f32.mrf.mxu0
      %v2468 = vpop.f32.mrf.mxu0
      %v2469 = vadd.f32 0.0, %v2468
      %v2470 = vpop.f32.mrf.mxu0
      %2471 = vmatprep.mubr.bf16.mxu0 0
      %2472 = vmatmul.mubr.bf16.gmra.mxu0 %v1549
      %v2473 = vpop.f32.mrf.mxu0
      %v2474 = vadd.f32 0.0, %v2473
      %v2475 = vpop.f32.mrf.mxu0
      %v2476 = vpop.f32.mrf.mxu0
      %v2477 = vadd.f32 0.0, %v2476
      %v2478 = vpop.f32.mrf.mxu0
      %2479 = vmatprep.mubr.bf16.mxu0 0
      %2480 = vmatmul.mubr.bf16.gmra.mxu0 %v1550
      %v2481 = vpop.f32.mrf.mxu0
      %v2482 = vadd.f32 0.0, %v2481
      %v2483 = vpop.f32.mrf.mxu0
      %v2484 = vpop.f32.mrf.mxu0
      %v2485 = vadd.f32 0.0, %v2484
      %v2486 = vpop.f32.mrf.mxu0
      %2487 = vmatprep.mubr.bf16.mxu0 0
      %2488 = vmatmul.mubr.bf16.gmra.mxu0 %v1551
      %v2489 = vpop.f32.mrf.mxu0
      %v2490 = vadd.f32 0.0, %v2489
      %v2491 = vpop.f32.mrf.mxu0
      %v2492 = vpop.f32.mrf.mxu0
      %v2493 = vadd.f32 0.0, %v2492
      %v2494 = vpop.f32.mrf.mxu0
      %2495 = vmatprep.mubr.bf16.mxu0 0
      %2496 = vmatmul.mubr.bf16.gmra.mxu0 %v1552
      %v2497 = vpop.f32.mrf.mxu0
      %v2498 = vadd.f32 0.0, %v2497
      %v2499 = vpop.f32.mrf.mxu0
      %v2500 = vpop.f32.mrf.mxu0
      %v2501 = vadd.f32 0.0, %v2500
      %v2502 = vpop.f32.mrf.mxu0
      %2503 = vmatprep.mubr.bf16.mxu0 0
      %2504 = vmatmul.mubr.bf16.gmra.mxu0 %v1553
      %v2505 = vpop.f32.mrf.mxu0
      %v2506 = vadd.f32 0.0, %v2505
      %v2507 = vpop.f32.mrf.mxu0
      %v2508 = vpop.f32.mrf.mxu0
      %v2509 = vadd.f32 0.0, %v2508
      %v2510 = vpop.f32.mrf.mxu0
      %2511 = vmatprep.mubr.bf16.mxu0 0
      %2512 = vmatmul.mubr.bf16.gmra.mxu0 %v1554
      %v2513 = vpop.f32.mrf.mxu0
      %v2514 = vadd.f32 0.0, %v2513
      %v2515 = vpop.f32.mrf.mxu0
      %v2516 = vpop.f32.mrf.mxu0
      %v2517 = vadd.f32 0.0, %v2516
      %v2518 = vpop.f32.mrf.mxu0
      %2519 = vmatprep.mubr.bf16.mxu0 0
      %2520 = vmatmul.mubr.bf16.gmra.mxu0 %v1555
      %v2521 = vpop.f32.mrf.mxu0
      %v2522 = vadd.f32 0.0, %v2521
      %v2523 = vpop.f32.mrf.mxu0
      %v2524 = vpop.f32.mrf.mxu0
      %v2525 = vadd.f32 0.0, %v2524
      %v2526 = vpop.f32.mrf.mxu0
      %2527 = vmatprep.mubr.bf16.mxu0 0
      %2528 = vmatmul.mubr.bf16.gmra.mxu0 %v1556
      %v2529 = vpop.f32.mrf.mxu0
      %v2530 = vadd.f32 0.0, %v2529
      %v2531 = vpop.f32.mrf.mxu0
      %v2532 = vpop.f32.mrf.mxu0
      %v2533 = vadd.f32 0.0, %v2532
      %v2534 = vpop.f32.mrf.mxu0
      %2535 = vmatprep.mubr.bf16.mxu0 0
      %2536 = vmatmul.mubr.bf16.gmra.mxu0 %v1557
      %v2537 = vpop.f32.mrf.mxu0
      %v2538 = vadd.f32 0.0, %v2537
      %v2539 = vpop.f32.mrf.mxu0
      %v2540 = vpop.f32.mrf.mxu0
      %v2541 = vadd.f32 0.0, %v2540
      %v2542 = vpop.f32.mrf.mxu0
      %2543 = vmatprep.mubr.bf16.mxu0 0
      %2544 = vmatmul.mubr.bf16.gmra.mxu0 %v2341
      %v2545 = vpop.f32.mrf.mxu0
      %v2546 = vadd.f32 0.0, %v2545
      %v2547 = vpop.f32.mrf.mxu0
      %v2548 = vpop.f32.mrf.mxu0
      %v2549 = vadd.f32 0.0, %v2548
      %v2550 = vpop.f32.mrf.mxu0
      %2551 = vdwg.mxu0
      %v2552 = vadd.f32 %v2299, %v2426
      %v2553 = vadd.f32 %v2300, %v2429
      %v2554 = vadd.f32 %v2301, %v2434
      %v2555 = vadd.f32 %v2302, %v2437
      %v2556 = vadd.f32 %v2303, %v2442
      %v2557 = vadd.f32 %v2304, %v2445
      %v2558 = vadd.f32 %v2305, %v2450
      %v2559 = vadd.f32 %v2306, %v2453
      %v2560 = vadd.f32 %v2307, %v2458
      %v2561 = vadd.f32 %v2308, %v2461
      %v2562 = vadd.f32 %v2309, %v2466
      %v2563 = vadd.f32 %v2310, %v2469
      %v2564 = vadd.f32 %v2311, %v2474
      %v2565 = vadd.f32 %v2312, %v2477
      %v2566 = vadd.f32 %v2313, %v2482
      %v2567 = vadd.f32 %v2314, %v2485
      %v2568 = vadd.f32 %v2315, %v2490
      %v2569 = vadd.f32 %v2316, %v2493
      %v2570 = vadd.f32 %v2317, %v2498
      %v2571 = vadd.f32 %v2318, %v2501
      %v2572 = vadd.f32 %v2319, %v2506
      %v2573 = vadd.f32 %v2320, %v2509
      %v2574 = vadd.f32 %v2321, %v2514
      %v2575 = vadd.f32 %v2322, %v2517
      %v2576 = vadd.f32 %v2323, %v2522
      %v2577 = vadd.f32 %v2324, %v2525
      %v2578 = vadd.f32 %v2325, %v2530
      %v2579 = vadd.f32 %v2326, %v2533
      %v2580 = vadd.f32 %v2327, %v2538
      %v2581 = vadd.f32 %v2328, %v2541
      %v2582 = vadd.f32 %v2329, %v2546
      %v2583 = vadd.f32 %v2330, %v2549
      %v2586 = vunpack.c.l.b16 %v267
      %v2587 = vunpack.c.l.b16 %v268
      %v2588 = vpack.c.b16 %v2587, %v2586
      %v2606 = vunpack.c.l.b16 %v366
      %v2607 = vunpack.c.l.b16 %v367
      %v2608 = vunpack.c.l.b16 %v368
      %v2609 = vunpack.c.l.b16 %v369
      %v2610 = vunpack.c.l.b16 %v370
      %v2611 = vunpack.c.l.b16 %v371
      %v2612 = vunpack.c.l.b16 %v372
      %v2613 = vunpack.c.l.b16 %v373
      %v2614 = vunpack.c.l.b16 %v374
      %v2615 = vunpack.c.l.b16 %v375
      %v2616 = vunpack.c.l.b16 %v376
      %v2617 = vunpack.c.l.b16 %v377
      %v2618 = vunpack.c.l.b16 %v378
      %v2619 = vunpack.c.l.b16 %v379
      %v2620 = vunpack.c.l.b16 %v380
      %v2621 = vunpack.c.l.b16 %v381
      %v2622 = vpack.c.b16 %v2607, %v2606
      %v2623 = vpack.c.b16 %v2609, %v2608
      %v2624 = vpack.c.b16 %v2611, %v2610
      %v2625 = vpack.c.b16 %v2613, %v2612
      %v2626 = vpack.c.b16 %v2615, %v2614
      %v2627 = vpack.c.b16 %v2617, %v2616
      %v2628 = vpack.c.b16 %v2619, %v2618
      %v2629 = vpack.c.b16 %v2621, %v2620
      %2638 = vmatprep.subr.bf16.mxu0 0
      %2639 = vmatpush1.bf16.msra.mxu0 %v2629
      %2640 = vmatprep.subr.bf16.mxu0 0
      %2641 = vmatpush1.bf16.msra.mxu0 %v2628
      %2642 = vmatprep.subr.bf16.mxu0 0
      %2643 = vmatpush1.bf16.msra.mxu0 %v2627
      %2644 = vmatprep.subr.bf16.mxu0 0
      %2645 = vmatpush1.bf16.msra.mxu0 %v2626
      %2646 = vmatprep.subr.bf16.mxu0 0
      %2647 = vmatpush1.bf16.msra.mxu0 %v2625
      %2648 = vmatprep.subr.bf16.mxu0 0
      %2649 = vmatpush1.bf16.msra.mxu0 %v2624
      %2650 = vmatprep.subr.bf16.mxu0 0
      %2651 = vmatpush1.bf16.msra.mxu0 %v2623
      %2652 = vmatprep.subr.bf16.mxu0 0
      %2653 = vmatpush1.bf16.msra.mxu0 %v2622
      %2654 = vmatprep.subr.bf16.mxu0 0
      %2655 = vmatpush2.bf16.msra.mxu0 0
      %2656 = vmatprep.subr.bf16.mxu0 0
      %2657 = vmatpush2.bf16.msra.mxu0 0
      %2658 = vmatprep.subr.bf16.mxu0 0
      %2659 = vmatpush2.bf16.msra.mxu0 0
      %2660 = vmatprep.subr.bf16.mxu0 0
      %2661 = vmatpush2.bf16.msra.mxu0 0
      %2662 = vmatprep.subr.bf16.mxu0 0
      %2663 = vmatpush2.bf16.msra.mxu0 0
      %2664 = vmatprep.subr.bf16.mxu0 0
      %2665 = vmatpush2.bf16.msra.mxu0 0
      %2666 = vmatprep.subr.bf16.mxu0 0
      %2667 = vmatpush2.bf16.msra.mxu0 0
      %2668 = vmatprep.subr.bf16.mxu0 0
      %2669 = vmatpush2.bf16.msra.mxu0 0
      %2670 = vmatprep.mubr.bf16.mxu0 0
      %2671 = vmatmul.mubr.bf16.gmra.mxu0 %v1140
      %v2672 = vpop.f32.mrf.mxu0
      %v2673 = vadd.f32 0.0, %v2672
      %v2674 = vpop.f32.mrf.mxu0
      %v2675 = vpop.f32.mrf.mxu0
      %v2676 = vadd.f32 0.0, %v2675
      %v2677 = vpop.f32.mrf.mxu0
      %2678 = vmatprep.mubr.bf16.mxu0 0
      %2679 = vmatmul.mubr.bf16.gmra.mxu0 %v1141
      %v2680 = vpop.f32.mrf.mxu0
      %v2681 = vadd.f32 0.0, %v2680
      %v2682 = vpop.f32.mrf.mxu0
      %v2683 = vpop.f32.mrf.mxu0
      %v2684 = vadd.f32 0.0, %v2683
      %v2685 = vpop.f32.mrf.mxu0
      %2686 = vmatprep.mubr.bf16.mxu0 0
      %2687 = vmatmul.mubr.bf16.gmra.mxu0 %v1142
      %v2688 = vpop.f32.mrf.mxu0
      %v2689 = vadd.f32 0.0, %v2688
      %v2690 = vpop.f32.mrf.mxu0
      %v2691 = vpop.f32.mrf.mxu0
      %v2692 = vadd.f32 0.0, %v2691
      %v2693 = vpop.f32.mrf.mxu0
      %2694 = vmatprep.mubr.bf16.mxu0 0
      %2695 = vmatmul.mubr.bf16.gmra.mxu0 %v1143
      %v2696 = vpop.f32.mrf.mxu0
      %v2697 = vadd.f32 0.0, %v2696
      %v2698 = vpop.f32.mrf.mxu0
      %v2699 = vpop.f32.mrf.mxu0
      %v2700 = vadd.f32 0.0, %v2699
      %v2701 = vpop.f32.mrf.mxu0
      %2702 = vmatprep.mubr.bf16.mxu0 0
      %2703 = vmatmul.mubr.bf16.gmra.mxu0 %v1144
      %v2704 = vpop.f32.mrf.mxu0
      %v2705 = vadd.f32 0.0, %v2704
      %v2706 = vpop.f32.mrf.mxu0
      %v2707 = vpop.f32.mrf.mxu0
      %v2708 = vadd.f32 0.0, %v2707
      %v2709 = vpop.f32.mrf.mxu0
      %2710 = vmatprep.mubr.bf16.mxu0 0
      %2711 = vmatmul.mubr.bf16.gmra.mxu0 %v1145
      %v2712 = vpop.f32.mrf.mxu0
      %v2713 = vadd.f32 0.0, %v2712
      %v2714 = vpop.f32.mrf.mxu0
      %v2715 = vpop.f32.mrf.mxu0
      %v2716 = vadd.f32 0.0, %v2715
      %v2717 = vpop.f32.mrf.mxu0
      %2718 = vmatprep.mubr.bf16.mxu0 0
      %2719 = vmatmul.mubr.bf16.gmra.mxu0 %v1146
      %v2720 = vpop.f32.mrf.mxu0
      %v2721 = vadd.f32 0.0, %v2720
      %v2722 = vpop.f32.mrf.mxu0
      %v2723 = vpop.f32.mrf.mxu0
      %v2724 = vadd.f32 0.0, %v2723
      %v2725 = vpop.f32.mrf.mxu0
      %2726 = vmatprep.mubr.bf16.mxu0 0
      %2727 = vmatmul.mubr.bf16.gmra.mxu0 %v1147
      %v2728 = vpop.f32.mrf.mxu0
      %v2729 = vadd.f32 0.0, %v2728
      %v2730 = vpop.f32.mrf.mxu0
      %v2731 = vpop.f32.mrf.mxu0
      %v2732 = vadd.f32 0.0, %v2731
      %v2733 = vpop.f32.mrf.mxu0
      %2734 = vmatprep.mubr.bf16.mxu0 0
      %2735 = vmatmul.mubr.bf16.gmra.mxu0 %v1148
      %v2736 = vpop.f32.mrf.mxu0
      %v2737 = vadd.f32 0.0, %v2736
      %v2738 = vpop.f32.mrf.mxu0
      %v2739 = vpop.f32.mrf.mxu0
      %v2740 = vadd.f32 0.0, %v2739
      %v2741 = vpop.f32.mrf.mxu0
      %2742 = vmatprep.mubr.bf16.mxu0 0
      %2743 = vmatmul.mubr.bf16.gmra.mxu0 %v1149
      %v2744 = vpop.f32.mrf.mxu0
      %v2745 = vadd.f32 0.0, %v2744
      %v2746 = vpop.f32.mrf.mxu0
      %v2747 = vpop.f32.mrf.mxu0
      %v2748 = vadd.f32 0.0, %v2747
      %v2749 = vpop.f32.mrf.mxu0
      %2750 = vmatprep.mubr.bf16.mxu0 0
      %2751 = vmatmul.mubr.bf16.gmra.mxu0 %v1150
      %v2752 = vpop.f32.mrf.mxu0
      %v2753 = vadd.f32 0.0, %v2752
      %v2754 = vpop.f32.mrf.mxu0
      %v2755 = vpop.f32.mrf.mxu0
      %v2756 = vadd.f32 0.0, %v2755
      %v2757 = vpop.f32.mrf.mxu0
      %2758 = vmatprep.mubr.bf16.mxu0 0
      %2759 = vmatmul.mubr.bf16.gmra.mxu0 %v1151
      %v2760 = vpop.f32.mrf.mxu0
      %v2761 = vadd.f32 0.0, %v2760
      %v2762 = vpop.f32.mrf.mxu0
      %v2763 = vpop.f32.mrf.mxu0
      %v2764 = vadd.f32 0.0, %v2763
      %v2765 = vpop.f32.mrf.mxu0
      %2766 = vmatprep.mubr.bf16.mxu0 0
      %2767 = vmatmul.mubr.bf16.gmra.mxu0 %v1152
      %v2768 = vpop.f32.mrf.mxu0
      %v2769 = vadd.f32 0.0, %v2768
      %v2770 = vpop.f32.mrf.mxu0
      %v2771 = vpop.f32.mrf.mxu0
      %v2772 = vadd.f32 0.0, %v2771
      %v2773 = vpop.f32.mrf.mxu0
      %2774 = vmatprep.mubr.bf16.mxu0 0
      %2775 = vmatmul.mubr.bf16.gmra.mxu0 %v1153
      %v2776 = vpop.f32.mrf.mxu0
      %v2777 = vadd.f32 0.0, %v2776
      %v2778 = vpop.f32.mrf.mxu0
      %v2779 = vpop.f32.mrf.mxu0
      %v2780 = vadd.f32 0.0, %v2779
      %v2781 = vpop.f32.mrf.mxu0
      %2782 = vmatprep.mubr.bf16.mxu0 0
      %2783 = vmatmul.mubr.bf16.gmra.mxu0 %v1819
      %v2784 = vpop.f32.mrf.mxu0
      %v2785 = vadd.f32 0.0, %v2784
      %v2786 = vpop.f32.mrf.mxu0
      %v2787 = vpop.f32.mrf.mxu0
      %v2788 = vadd.f32 0.0, %v2787
      %v2789 = vpop.f32.mrf.mxu0
      %2790 = vmatprep.mubr.bf16.mxu0 0
      %2791 = vmatmul.mubr.bf16.gmra.mxu0 %v2588
      %v2792 = vpop.f32.mrf.mxu0
      %v2793 = vadd.f32 0.0, %v2792
      %v2794 = vpop.f32.mrf.mxu0
      %v2795 = vpop.f32.mrf.mxu0
      %v2796 = vadd.f32 0.0, %v2795
      %v2797 = vpop.f32.mrf.mxu0
      %2798 = vdwg.mxu0
      %v2799 = vadd.f32 %v2552, %v2673
      %v2800 = vadd.f32 %v2553, %v2676
      %v2801 = vadd.f32 %v2554, %v2681
      %v2802 = vadd.f32 %v2555, %v2684
      %v2803 = vadd.f32 %v2556, %v2689
      %v2804 = vadd.f32 %v2557, %v2692
      %v2805 = vadd.f32 %v2558, %v2697
      %v2806 = vadd.f32 %v2559, %v2700
      %v2807 = vadd.f32 %v2560, %v2705
      %v2808 = vadd.f32 %v2561, %v2708
      %v2809 = vadd.f32 %v2562, %v2713
      %v2810 = vadd.f32 %v2563, %v2716
      %v2811 = vadd.f32 %v2564, %v2721
      %v2812 = vadd.f32 %v2565, %v2724
      %v2813 = vadd.f32 %v2566, %v2729
      %v2814 = vadd.f32 %v2567, %v2732
      %v2815 = vadd.f32 %v2568, %v2737
      %v2816 = vadd.f32 %v2569, %v2740
      %v2817 = vadd.f32 %v2570, %v2745
      %v2818 = vadd.f32 %v2571, %v2748
      %v2819 = vadd.f32 %v2572, %v2753
      %v2820 = vadd.f32 %v2573, %v2756
      %v2821 = vadd.f32 %v2574, %v2761
      %v2822 = vadd.f32 %v2575, %v2764
      %v2823 = vadd.f32 %v2576, %v2769
      %v2824 = vadd.f32 %v2577, %v2772
      %v2825 = vadd.f32 %v2578, %v2777
      %v2826 = vadd.f32 %v2579, %v2780
      %v2827 = vadd.f32 %v2580, %v2785
      %v2828 = vadd.f32 %v2581, %v2788
      %v2829 = vadd.f32 %v2582, %v2793
      %v2830 = vadd.f32 %v2583, %v2796
      %v2832 = vshrl.u32 %v267, 16
      %v2834 = vrot.slane %v2832, 4
      %v2835 = vshll.u32 %v267, 16
      %v2837 = vrot.slane %v2835, 5
      %v2838 = vor.u32 %v2834, %v2837
      %v2839 = vrot.slane %v2838, 4
      %v2841 = vshll.u32 %v268, 16
      %v2843 = vrot.slane %v2841, 5
      %v2844 = vsel %vm416, %v2839, %v2843
      %v2845 = vshrl.u32 %v268, 16
      %v2847 = vrot.slane %v2845, 4
      %v2848 = vor.u32 %v2847, %v2843
      %v2849 = vrot.slane %v2848, 4
      %v2851 = vshll.u32 %v269, 16
      %v2853 = vrot.slane %v2851, 5
      %v2854 = vsel %vm416, %v2849, %v2853
      %v2855 = vunpack.c.l.b16 %v2844
      %v2856 = vunpack.c.l.b16 %v2854
      %v2857 = vpack.c.b16 %v2856, %v2855
      %v2875 = vunpack.c.l.b16 %v382
      %v2876 = vunpack.c.l.b16 %v383
      %v2877 = vunpack.c.l.b16 %v384
      %v2878 = vunpack.c.l.b16 %v385
      %v2879 = vunpack.c.l.b16 %v386
      %v2880 = vunpack.c.l.b16 %v387
      %v2881 = vunpack.c.l.b16 %v388
      %v2882 = vunpack.c.l.b16 %v389
      %v2883 = vunpack.c.l.b16 %v390
      %v2884 = vunpack.c.l.b16 %v391
      %v2885 = vunpack.c.l.b16 %v392
      %v2886 = vunpack.c.l.b16 %v393
      %v2887 = vunpack.c.l.b16 %v394
      %v2888 = vunpack.c.l.b16 %v395
      %v2889 = vunpack.c.l.b16 %v396
      %v2890 = vunpack.c.l.b16 %v397
      %v2891 = vpack.c.b16 %v2876, %v2875
      %v2892 = vpack.c.b16 %v2878, %v2877
      %v2893 = vpack.c.b16 %v2880, %v2879
      %v2894 = vpack.c.b16 %v2882, %v2881
      %v2895 = vpack.c.b16 %v2884, %v2883
      %v2896 = vpack.c.b16 %v2886, %v2885
      %v2897 = vpack.c.b16 %v2888, %v2887
      %v2898 = vpack.c.b16 %v2890, %v2889
      %2907 = vmatprep.subr.bf16.mxu0 0
      %2908 = vmatpush1.bf16.msra.mxu0 %v2898
      %2909 = vmatprep.subr.bf16.mxu0 0
      %2910 = vmatpush1.bf16.msra.mxu0 %v2897
      %2911 = vmatprep.subr.bf16.mxu0 0
      %2912 = vmatpush1.bf16.msra.mxu0 %v2896
      %2913 = vmatprep.subr.bf16.mxu0 0
      %2914 = vmatpush1.bf16.msra.mxu0 %v2895
      %2915 = vmatprep.subr.bf16.mxu0 0
      %2916 = vmatpush1.bf16.msra.mxu0 %v2894
      %2917 = vmatprep.subr.bf16.mxu0 0
      %2918 = vmatpush1.bf16.msra.mxu0 %v2893
      %2919 = vmatprep.subr.bf16.mxu0 0
      %2920 = vmatpush1.bf16.msra.mxu0 %v2892
      %2921 = vmatprep.subr.bf16.mxu0 0
      %2922 = vmatpush1.bf16.msra.mxu0 %v2891
      %2923 = vmatprep.subr.bf16.mxu0 0
      %2924 = vmatpush2.bf16.msra.mxu0 0
      %2925 = vmatprep.subr.bf16.mxu0 0
      %2926 = vmatpush2.bf16.msra.mxu0 0
      %2927 = vmatprep.subr.bf16.mxu0 0
      %2928 = vmatpush2.bf16.msra.mxu0 0
      %2929 = vmatprep.subr.bf16.mxu0 0
      %2930 = vmatpush2.bf16.msra.mxu0 0
      %2931 = vmatprep.subr.bf16.mxu0 0
      %2932 = vmatpush2.bf16.msra.mxu0 0
      %2933 = vmatprep.subr.bf16.mxu0 0
      %2934 = vmatpush2.bf16.msra.mxu0 0
      %2935 = vmatprep.subr.bf16.mxu0 0
      %2936 = vmatpush2.bf16.msra.mxu0 0
      %2937 = vmatprep.subr.bf16.mxu0 0
      %2938 = vmatpush2.bf16.msra.mxu0 0
      %2939 = vmatprep.mubr.bf16.mxu0 0
      %2940 = vmatmul.mubr.bf16.gmra.mxu0 %v835
      %v2941 = vpop.f32.mrf.mxu0
      %v2942 = vadd.f32 0.0, %v2941
      %v2943 = vpop.f32.mrf.mxu0
      %v2944 = vpop.f32.mrf.mxu0
      %v2945 = vadd.f32 0.0, %v2944
      %v2946 = vpop.f32.mrf.mxu0
      %2947 = vmatprep.mubr.bf16.mxu0 0
      %2948 = vmatmul.mubr.bf16.gmra.mxu0 %v836
      %v2949 = vpop.f32.mrf.mxu0
      %v2950 = vadd.f32 0.0, %v2949
      %v2951 = vpop.f32.mrf.mxu0
      %v2952 = vpop.f32.mrf.mxu0
      %v2953 = vadd.f32 0.0, %v2952
      %v2954 = vpop.f32.mrf.mxu0
      %2955 = vmatprep.mubr.bf16.mxu0 0
      %2956 = vmatmul.mubr.bf16.gmra.mxu0 %v837
      %v2957 = vpop.f32.mrf.mxu0
      %v2958 = vadd.f32 0.0, %v2957
      %v2959 = vpop.f32.mrf.mxu0
      %v2960 = vpop.f32.mrf.mxu0
      %v2961 = vadd.f32 0.0, %v2960
      %v2962 = vpop.f32.mrf.mxu0
      %2963 = vmatprep.mubr.bf16.mxu0 0
      %2964 = vmatmul.mubr.bf16.gmra.mxu0 %v838
      %v2965 = vpop.f32.mrf.mxu0
      %v2966 = vadd.f32 0.0, %v2965
      %v2967 = vpop.f32.mrf.mxu0
      %v2968 = vpop.f32.mrf.mxu0
      %v2969 = vadd.f32 0.0, %v2968
      %v2970 = vpop.f32.mrf.mxu0
      %2971 = vmatprep.mubr.bf16.mxu0 0
      %2972 = vmatmul.mubr.bf16.gmra.mxu0 %v839
      %v2973 = vpop.f32.mrf.mxu0
      %v2974 = vadd.f32 0.0, %v2973
      %v2975 = vpop.f32.mrf.mxu0
      %v2976 = vpop.f32.mrf.mxu0
      %v2977 = vadd.f32 0.0, %v2976
      %v2978 = vpop.f32.mrf.mxu0
      %2979 = vmatprep.mubr.bf16.mxu0 0
      %2980 = vmatmul.mubr.bf16.gmra.mxu0 %v840
      %v2981 = vpop.f32.mrf.mxu0
      %v2982 = vadd.f32 0.0, %v2981
      %v2983 = vpop.f32.mrf.mxu0
      %v2984 = vpop.f32.mrf.mxu0
      %v2985 = vadd.f32 0.0, %v2984
      %v2986 = vpop.f32.mrf.mxu0
      %2987 = vmatprep.mubr.bf16.mxu0 0
      %2988 = vmatmul.mubr.bf16.gmra.mxu0 %v841
      %v2989 = vpop.f32.mrf.mxu0
      %v2990 = vadd.f32 0.0, %v2989
      %v2991 = vpop.f32.mrf.mxu0
      %v2992 = vpop.f32.mrf.mxu0
      %v2993 = vadd.f32 0.0, %v2992
      %v2994 = vpop.f32.mrf.mxu0
      %2995 = vmatprep.mubr.bf16.mxu0 0
      %2996 = vmatmul.mubr.bf16.gmra.mxu0 %v842
      %v2997 = vpop.f32.mrf.mxu0
      %v2998 = vadd.f32 0.0, %v2997
      %v2999 = vpop.f32.mrf.mxu0
      %v3000 = vpop.f32.mrf.mxu0
      %v3001 = vadd.f32 0.0, %v3000
      %v3002 = vpop.f32.mrf.mxu0
      %3003 = vmatprep.mubr.bf16.mxu0 0
      %3004 = vmatmul.mubr.bf16.gmra.mxu0 %v843
      %v3005 = vpop.f32.mrf.mxu0
      %v3006 = vadd.f32 0.0, %v3005
      %v3007 = vpop.f32.mrf.mxu0
      %v3008 = vpop.f32.mrf.mxu0
      %v3009 = vadd.f32 0.0, %v3008
      %v3010 = vpop.f32.mrf.mxu0
      %3011 = vmatprep.mubr.bf16.mxu0 0
      %3012 = vmatmul.mubr.bf16.gmra.mxu0 %v844
      %v3013 = vpop.f32.mrf.mxu0
      %v3014 = vadd.f32 0.0, %v3013
      %v3015 = vpop.f32.mrf.mxu0
      %v3016 = vpop.f32.mrf.mxu0
      %v3017 = vadd.f32 0.0, %v3016
      %v3018 = vpop.f32.mrf.mxu0
      %3019 = vmatprep.mubr.bf16.mxu0 0
      %3020 = vmatmul.mubr.bf16.gmra.mxu0 %v845
      %v3021 = vpop.f32.mrf.mxu0
      %v3022 = vadd.f32 0.0, %v3021
      %v3023 = vpop.f32.mrf.mxu0
      %v3024 = vpop.f32.mrf.mxu0
      %v3025 = vadd.f32 0.0, %v3024
      %v3026 = vpop.f32.mrf.mxu0
      %3027 = vmatprep.mubr.bf16.mxu0 0
      %3028 = vmatmul.mubr.bf16.gmra.mxu0 %v846
      %v3029 = vpop.f32.mrf.mxu0
      %v3030 = vadd.f32 0.0, %v3029
      %v3031 = vpop.f32.mrf.mxu0
      %v3032 = vpop.f32.mrf.mxu0
      %v3033 = vadd.f32 0.0, %v3032
      %v3034 = vpop.f32.mrf.mxu0
      %3035 = vmatprep.mubr.bf16.mxu0 0
      %3036 = vmatmul.mubr.bf16.gmra.mxu0 %v847
      %v3037 = vpop.f32.mrf.mxu0
      %v3038 = vadd.f32 0.0, %v3037
      %v3039 = vpop.f32.mrf.mxu0
      %v3040 = vpop.f32.mrf.mxu0
      %v3041 = vadd.f32 0.0, %v3040
      %v3042 = vpop.f32.mrf.mxu0
      %3043 = vmatprep.mubr.bf16.mxu0 0
      %3044 = vmatmul.mubr.bf16.gmra.mxu0 %v848
      %v3045 = vpop.f32.mrf.mxu0
      %v3046 = vadd.f32 0.0, %v3045
      %v3047 = vpop.f32.mrf.mxu0
      %v3048 = vpop.f32.mrf.mxu0
      %v3049 = vadd.f32 0.0, %v3048
      %v3050 = vpop.f32.mrf.mxu0
      %3051 = vmatprep.mubr.bf16.mxu0 0
      %3052 = vmatmul.mubr.bf16.gmra.mxu0 %v2088
      %v3053 = vpop.f32.mrf.mxu0
      %v3054 = vadd.f32 0.0, %v3053
      %v3055 = vpop.f32.mrf.mxu0
      %v3056 = vpop.f32.mrf.mxu0
      %v3057 = vadd.f32 0.0, %v3056
      %v3058 = vpop.f32.mrf.mxu0
      %3059 = vmatprep.mubr.bf16.mxu0 0
      %3060 = vmatmul.mubr.bf16.gmra.mxu0 %v2857
      %v3061 = vpop.f32.mrf.mxu0
      %v3062 = vadd.f32 0.0, %v3061
      %v3063 = vpop.f32.mrf.mxu0
      %v3064 = vpop.f32.mrf.mxu0
      %v3065 = vadd.f32 0.0, %v3064
      %v3066 = vpop.f32.mrf.mxu0
      %3067 = vdwg.mxu0
      %v3068 = vadd.f32 %v2799, %v2942
      %v3069 = vadd.f32 %v2800, %v2945
      %v3070 = vadd.f32 %v2801, %v2950
      %v3071 = vadd.f32 %v2802, %v2953
      %v3072 = vadd.f32 %v2803, %v2958
      %v3073 = vadd.f32 %v2804, %v2961
      %v3074 = vadd.f32 %v2805, %v2966
      %v3075 = vadd.f32 %v2806, %v2969
      %v3076 = vadd.f32 %v2807, %v2974
      %v3077 = vadd.f32 %v2808, %v2977
      %v3078 = vadd.f32 %v2809, %v2982
      %v3079 = vadd.f32 %v2810, %v2985
      %v3080 = vadd.f32 %v2811, %v2990
      %v3081 = vadd.f32 %v2812, %v2993
      %v3082 = vadd.f32 %v2813, %v2998
      %v3083 = vadd.f32 %v2814, %v3001
      %v3084 = vadd.f32 %v2815, %v3006
      %v3085 = vadd.f32 %v2816, %v3009
      %v3086 = vadd.f32 %v2817, %v3014
      %v3087 = vadd.f32 %v2818, %v3017
      %v3088 = vadd.f32 %v2819, %v3022
      %v3089 = vadd.f32 %v2820, %v3025
      %v3090 = vadd.f32 %v2821, %v3030
      %v3091 = vadd.f32 %v2822, %v3033
      %v3092 = vadd.f32 %v2823, %v3038
      %v3093 = vadd.f32 %v2824, %v3041
      %v3094 = vadd.f32 %v2825, %v3046
      %v3095 = vadd.f32 %v2826, %v3049
      %v3096 = vadd.f32 %v2827, %v3054
      %v3097 = vadd.f32 %v2828, %v3057
      %v3098 = vadd.f32 %v2829, %v3062
      %v3099 = vadd.f32 %v2830, %v3065
      %v3101 = vrot.slane %v267, 5
      %v3102 = vrot.slane %v3101, 4
      %v3103 = vrot.slane %v268, 5
      %v3104 = vsel %vm1397, %v3102, %v3103
      %v3105 = vrot.slane %v3103, 4
      %v3106 = vrot.slane %v269, 5
      %v3107 = vsel %vm1397, %v3105, %v3106
      %v3108 = vunpack.c.l.b16 %v3104
      %v3109 = vunpack.c.l.b16 %v3107
      %v3110 = vpack.c.b16 %v3109, %v3108
      %v3128 = vunpack.c.l.b16 %v398
      %v3129 = vunpack.c.l.b16 %v399
      %v3130 = vunpack.c.l.b16 %v400
      %v3131 = vunpack.c.l.b16 %v401
      %v3132 = vunpack.c.l.b16 %v402
      %v3133 = vunpack.c.l.b16 %v403
      %v3134 = vunpack.c.l.b16 %v404
      %v3135 = vunpack.c.l.b16 %v405
      %v3136 = vunpack.c.l.b16 %v406
      %v3137 = vunpack.c.l.b16 %v407
      %v3138 = vunpack.c.l.b16 %v408
      %v3139 = vunpack.c.l.b16 %v409
      %v3140 = vunpack.c.l.b16 %v410
      %v3141 = vunpack.c.l.b16 %v411
      %v3142 = vunpack.c.l.b16 %v412
      %v3143 = vunpack.c.l.b16 %v413
      %v3144 = vpack.c.b16 %v3129, %v3128
      %v3145 = vpack.c.b16 %v3131, %v3130
      %v3146 = vpack.c.b16 %v3133, %v3132
      %v3147 = vpack.c.b16 %v3135, %v3134
      %v3148 = vpack.c.b16 %v3137, %v3136
      %v3149 = vpack.c.b16 %v3139, %v3138
      %v3150 = vpack.c.b16 %v3141, %v3140
      %v3151 = vpack.c.b16 %v3143, %v3142
      %3160 = vmatprep.subr.bf16.mxu0 0
      %3161 = vmatpush1.bf16.msra.mxu0 %v3151
      %3162 = vmatprep.subr.bf16.mxu0 0
      %3163 = vmatpush1.bf16.msra.mxu0 %v3150
      %3164 = vmatprep.subr.bf16.mxu0 0
      %3165 = vmatpush1.bf16.msra.mxu0 %v3149
      %3166 = vmatprep.subr.bf16.mxu0 0
      %3167 = vmatpush1.bf16.msra.mxu0 %v3148
      %3168 = vmatprep.subr.bf16.mxu0 0
      %3169 = vmatpush1.bf16.msra.mxu0 %v3147
      %3170 = vmatprep.subr.bf16.mxu0 0
      %3171 = vmatpush1.bf16.msra.mxu0 %v3146
      %3172 = vmatprep.subr.bf16.mxu0 0
      %3173 = vmatpush1.bf16.msra.mxu0 %v3145
      %3174 = vmatprep.subr.bf16.mxu0 0
      %3175 = vmatpush1.bf16.msra.mxu0 %v3144
      %3176 = vmatprep.subr.bf16.mxu0 0
      %3177 = vmatpush2.bf16.msra.mxu0 0
      %3178 = vmatprep.subr.bf16.mxu0 0
      %3179 = vmatpush2.bf16.msra.mxu0 0
      %3180 = vmatprep.subr.bf16.mxu0 0
      %3181 = vmatpush2.bf16.msra.mxu0 0
      %3182 = vmatprep.subr.bf16.mxu0 0
      %3183 = vmatpush2.bf16.msra.mxu0 0
      %3184 = vmatprep.subr.bf16.mxu0 0
      %3185 = vmatpush2.bf16.msra.mxu0 0
      %3186 = vmatprep.subr.bf16.mxu0 0
      %3187 = vmatpush2.bf16.msra.mxu0 0
      %3188 = vmatprep.subr.bf16.mxu0 0
      %3189 = vmatpush2.bf16.msra.mxu0 0
      %3190 = vmatprep.subr.bf16.mxu0 0
      %3191 = vmatpush2.bf16.msra.mxu0 0
      %3192 = vmatprep.mubr.bf16.mxu0 0
      %3193 = vmatmul.mubr.bf16.gmra.mxu0 %v1544
      %v3194 = vpop.f32.mrf.mxu0
      %v3195 = vadd.f32 0.0, %v3194
      %v3196 = vpop.f32.mrf.mxu0
      %v3197 = vpop.f32.mrf.mxu0
      %v3198 = vadd.f32 0.0, %v3197
      %v3199 = vpop.f32.mrf.mxu0
      %3200 = vmatprep.mubr.bf16.mxu0 0
      %3201 = vmatmul.mubr.bf16.gmra.mxu0 %v1545
      %v3202 = vpop.f32.mrf.mxu0
      %v3203 = vadd.f32 0.0, %v3202
      %v3204 = vpop.f32.mrf.mxu0
      %v3205 = vpop.f32.mrf.mxu0
      %v3206 = vadd.f32 0.0, %v3205
      %v3207 = vpop.f32.mrf.mxu0
      %3208 = vmatprep.mubr.bf16.mxu0 0
      %3209 = vmatmul.mubr.bf16.gmra.mxu0 %v1546
      %v3210 = vpop.f32.mrf.mxu0
      %v3211 = vadd.f32 0.0, %v3210
      %v3212 = vpop.f32.mrf.mxu0
      %v3213 = vpop.f32.mrf.mxu0
      %v3214 = vadd.f32 0.0, %v3213
      %v3215 = vpop.f32.mrf.mxu0
      %3216 = vmatprep.mubr.bf16.mxu0 0
      %3217 = vmatmul.mubr.bf16.gmra.mxu0 %v1547
      %v3218 = vpop.f32.mrf.mxu0
      %v3219 = vadd.f32 0.0, %v3218
      %v3220 = vpop.f32.mrf.mxu0
      %v3221 = vpop.f32.mrf.mxu0
      %v3222 = vadd.f32 0.0, %v3221
      %v3223 = vpop.f32.mrf.mxu0
      %3224 = vmatprep.mubr.bf16.mxu0 0
      %3225 = vmatmul.mubr.bf16.gmra.mxu0 %v1548
      %v3226 = vpop.f32.mrf.mxu0
      %v3227 = vadd.f32 0.0, %v3226
      %v3228 = vpop.f32.mrf.mxu0
      %v3229 = vpop.f32.mrf.mxu0
      %v3230 = vadd.f32 0.0, %v3229
      %v3231 = vpop.f32.mrf.mxu0
      %3232 = vmatprep.mubr.bf16.mxu0 0
      %3233 = vmatmul.mubr.bf16.gmra.mxu0 %v1549
      %v3234 = vpop.f32.mrf.mxu0
      %v3235 = vadd.f32 0.0, %v3234
      %v3236 = vpop.f32.mrf.mxu0
      %v3237 = vpop.f32.mrf.mxu0
      %v3238 = vadd.f32 0.0, %v3237
      %v3239 = vpop.f32.mrf.mxu0
      %3240 = vmatprep.mubr.bf16.mxu0 0
      %3241 = vmatmul.mubr.bf16.gmra.mxu0 %v1550
      %v3242 = vpop.f32.mrf.mxu0
      %v3243 = vadd.f32 0.0, %v3242
      %v3244 = vpop.f32.mrf.mxu0
      %v3245 = vpop.f32.mrf.mxu0
      %v3246 = vadd.f32 0.0, %v3245
      %v3247 = vpop.f32.mrf.mxu0
      %3248 = vmatprep.mubr.bf16.mxu0 0
      %3249 = vmatmul.mubr.bf16.gmra.mxu0 %v1551
      %v3250 = vpop.f32.mrf.mxu0
      %v3251 = vadd.f32 0.0, %v3250
      %v3252 = vpop.f32.mrf.mxu0
      %v3253 = vpop.f32.mrf.mxu0
      %v3254 = vadd.f32 0.0, %v3253
      %v3255 = vpop.f32.mrf.mxu0
      %3256 = vmatprep.mubr.bf16.mxu0 0
      %3257 = vmatmul.mubr.bf16.gmra.mxu0 %v1552
      %v3258 = vpop.f32.mrf.mxu0
      %v3259 = vadd.f32 0.0, %v3258
      %v3260 = vpop.f32.mrf.mxu0
      %v3261 = vpop.f32.mrf.mxu0
      %v3262 = vadd.f32 0.0, %v3261
      %v3263 = vpop.f32.mrf.mxu0
      %3264 = vmatprep.mubr.bf16.mxu0 0
      %3265 = vmatmul.mubr.bf16.gmra.mxu0 %v1553
      %v3266 = vpop.f32.mrf.mxu0
      %v3267 = vadd.f32 0.0, %v3266
      %v3268 = vpop.f32.mrf.mxu0
      %v3269 = vpop.f32.mrf.mxu0
      %v3270 = vadd.f32 0.0, %v3269
      %v3271 = vpop.f32.mrf.mxu0
      %3272 = vmatprep.mubr.bf16.mxu0 0
      %3273 = vmatmul.mubr.bf16.gmra.mxu0 %v1554
      %v3274 = vpop.f32.mrf.mxu0
      %v3275 = vadd.f32 0.0, %v3274
      %v3276 = vpop.f32.mrf.mxu0
      %v3277 = vpop.f32.mrf.mxu0
      %v3278 = vadd.f32 0.0, %v3277
      %v3279 = vpop.f32.mrf.mxu0
      %3280 = vmatprep.mubr.bf16.mxu0 0
      %3281 = vmatmul.mubr.bf16.gmra.mxu0 %v1555
      %v3282 = vpop.f32.mrf.mxu0
      %v3283 = vadd.f32 0.0, %v3282
      %v3284 = vpop.f32.mrf.mxu0
      %v3285 = vpop.f32.mrf.mxu0
      %v3286 = vadd.f32 0.0, %v3285
      %v3287 = vpop.f32.mrf.mxu0
      %3288 = vmatprep.mubr.bf16.mxu0 0
      %3289 = vmatmul.mubr.bf16.gmra.mxu0 %v1556
      %v3290 = vpop.f32.mrf.mxu0
      %v3291 = vadd.f32 0.0, %v3290
      %v3292 = vpop.f32.mrf.mxu0
      %v3293 = vpop.f32.mrf.mxu0
      %v3294 = vadd.f32 0.0, %v3293
      %v3295 = vpop.f32.mrf.mxu0
      %3296 = vmatprep.mubr.bf16.mxu0 0
      %3297 = vmatmul.mubr.bf16.gmra.mxu0 %v1557
      %v3298 = vpop.f32.mrf.mxu0
      %v3299 = vadd.f32 0.0, %v3298
      %v3300 = vpop.f32.mrf.mxu0
      %v3301 = vpop.f32.mrf.mxu0
      %v3302 = vadd.f32 0.0, %v3301
      %v3303 = vpop.f32.mrf.mxu0
      %3304 = vmatprep.mubr.bf16.mxu0 0
      %3305 = vmatmul.mubr.bf16.gmra.mxu0 %v2341
      %v3306 = vpop.f32.mrf.mxu0
      %v3307 = vadd.f32 0.0, %v3306
      %v3308 = vpop.f32.mrf.mxu0
      %v3309 = vpop.f32.mrf.mxu0
      %v3310 = vadd.f32 0.0, %v3309
      %v3311 = vpop.f32.mrf.mxu0
      %3312 = vmatprep.mubr.bf16.mxu0 0
      %3313 = vmatmul.mubr.bf16.gmra.mxu0 %v3110
      %v3314 = vpop.f32.mrf.mxu0
      %v3315 = vadd.f32 0.0, %v3314
      %v3316 = vpop.f32.mrf.mxu0
      %v3317 = vpop.f32.mrf.mxu0
      %v3318 = vadd.f32 0.0, %v3317
      %v3319 = vpop.f32.mrf.mxu0
      %3320 = vdwg.mxu0
      %v3321 = vadd.f32 %v3068, %v3195
      %v3322 = vadd.f32 %v3069, %v3198
      %v3323 = vadd.f32 %v3070, %v3203
      %v3324 = vadd.f32 %v3071, %v3206
      %v3325 = vadd.f32 %v3072, %v3211
      %v3326 = vadd.f32 %v3073, %v3214
      %v3327 = vadd.f32 %v3074, %v3219
      %v3328 = vadd.f32 %v3075, %v3222
      %v3329 = vadd.f32 %v3076, %v3227
      %v3330 = vadd.f32 %v3077, %v3230
      %v3331 = vadd.f32 %v3078, %v3235
      %v3332 = vadd.f32 %v3079, %v3238
      %v3333 = vadd.f32 %v3080, %v3243
      %v3334 = vadd.f32 %v3081, %v3246
      %v3335 = vadd.f32 %v3082, %v3251
      %v3336 = vadd.f32 %v3083, %v3254
      %v3337 = vadd.f32 %v3084, %v3259
      %v3338 = vadd.f32 %v3085, %v3262
      %v3339 = vadd.f32 %v3086, %v3267
      %v3340 = vadd.f32 %v3087, %v3270
      %v3341 = vadd.f32 %v3088, %v3275
      %v3342 = vadd.f32 %v3089, %v3278
      %v3343 = vadd.f32 %v3090, %v3283
      %v3344 = vadd.f32 %v3091, %v3286
      %v3345 = vadd.f32 %v3092, %v3291
      %v3346 = vadd.f32 %v3093, %v3294
      %v3347 = vadd.f32 %v3094, %v3299
      %v3348 = vadd.f32 %v3095, %v3302
      %v3349 = vadd.f32 %v3096, %v3307
      %v3350 = vadd.f32 %v3097, %v3310
      %v3351 = vadd.f32 %v3098, %v3315
      %v3352 = vadd.f32 %v3099, %v3318
      %v3353 = vpack.c.bf16 %v3322, %v3321
      %v3354 = vpack.c.bf16 %v3324, %v3323
      %v3355 = vpack.c.bf16 %v3326, %v3325
      %v3356 = vpack.c.bf16 %v3328, %v3327
      %v3357 = vpack.c.bf16 %v3330, %v3329
      %v3358 = vpack.c.bf16 %v3332, %v3331
      %v3359 = vpack.c.bf16 %v3334, %v3333
      %v3360 = vpack.c.bf16 %v3336, %v3335
      %v3361 = vpack.c.bf16 %v3338, %v3337
      %v3362 = vpack.c.bf16 %v3340, %v3339
      %v3363 = vpack.c.bf16 %v3342, %v3341
      %v3364 = vpack.c.bf16 %v3344, %v3343
      %v3365 = vpack.c.bf16 %v3346, %v3345
      %v3366 = vpack.c.bf16 %v3348, %v3347
      %v3367 = vpack.c.bf16 %v3350, %v3349
      %v3368 = vpack.c.bf16 %v3352, %v3351
      %v3385 = vunpack.c.l.b16 %v3353
      %v3386 = vunpack.c.h.b16 %v3353
      %v3387 = vunpack.c.l.b16 %v3354
      %v3388 = vunpack.c.h.b16 %v3354
      %v3389 = vunpack.c.l.b16 %v3355
      %v3390 = vunpack.c.h.b16 %v3355
      %v3391 = vunpack.c.l.b16 %v3356
      %v3392 = vunpack.c.h.b16 %v3356
      %v3393 = vunpack.c.l.b16 %v3357
      %v3394 = vunpack.c.h.b16 %v3357
      %v3395 = vunpack.c.l.b16 %v3358
      %v3396 = vunpack.c.h.b16 %v3358
      %v3397 = vunpack.c.l.b16 %v3359
      %v3398 = vunpack.c.h.b16 %v3359
      %v3399 = vunpack.c.l.b16 %v3360
      %v3400 = vunpack.c.h.b16 %v3360
      %v3401 = vunpack.c.l.b16 %v3361
      %v3402 = vunpack.c.h.b16 %v3361
      %v3403 = vunpack.c.l.b16 %v3362
      %v3404 = vunpack.c.h.b16 %v3362
      %v3405 = vunpack.c.l.b16 %v3363
      %v3406 = vunpack.c.h.b16 %v3363
      %v3407 = vunpack.c.l.b16 %v3364
      %v3408 = vunpack.c.h.b16 %v3364
      %v3409 = vunpack.c.l.b16 %v3365
      %v3410 = vunpack.c.h.b16 %v3365
      %v3411 = vunpack.c.l.b16 %v3366
      %v3412 = vunpack.c.h.b16 %v3366
      %v3413 = vunpack.c.l.b16 %v3367
      %v3414 = vunpack.c.h.b16 %v3367
      %v3415 = vunpack.c.l.b16 %v3368
      %v3416 = vunpack.c.h.b16 %v3368
      %v3417 = vpack.c.b16 %v3385, %v3385
      %v3418 = vpack.c.b16 %v3386, %v3386
      %v3419 = vpack.c.b16 %v3387, %v3387
      %v3420 = vpack.c.b16 %v3388, %v3388
      %v3421 = vpack.c.b16 %v3389, %v3389
      %v3422 = vpack.c.b16 %v3390, %v3390
      %v3423 = vpack.c.b16 %v3391, %v3391
      %v3424 = vpack.c.b16 %v3392, %v3392
      %v3425 = vpack.c.b16 %v3393, %v3393
      %v3426 = vpack.c.b16 %v3394, %v3394
      %v3427 = vpack.c.b16 %v3395, %v3395
      %v3428 = vpack.c.b16 %v3396, %v3396
      %v3429 = vpack.c.b16 %v3397, %v3397
      %v3430 = vpack.c.b16 %v3398, %v3398
      %v3431 = vpack.c.b16 %v3399, %v3399
      %v3432 = vpack.c.b16 %v3400, %v3400
      %v3433 = vpack.c.b16 %v3401, %v3401
      %v3434 = vpack.c.b16 %v3402, %v3402
      %v3435 = vpack.c.b16 %v3403, %v3403
      %v3436 = vpack.c.b16 %v3404, %v3404
      %v3437 = vpack.c.b16 %v3405, %v3405
      %v3438 = vpack.c.b16 %v3406, %v3406
      %v3439 = vpack.c.b16 %v3407, %v3407
      %v3440 = vpack.c.b16 %v3408, %v3408
      %v3441 = vpack.c.b16 %v3409, %v3409
      %v3442 = vpack.c.b16 %v3410, %v3410
      %v3443 = vpack.c.b16 %v3411, %v3411
      %v3444 = vpack.c.b16 %v3412, %v3412
      %v3445 = vpack.c.b16 %v3413, %v3413
      %v3446 = vpack.c.b16 %v3414, %v3414
      %v3447 = vpack.c.b16 %v3415, %v3415
      %v3448 = vpack.c.b16 %v3416, %v3416
      %3481 = vst [vmem:[%s208] sm:$0xf] %v3417
      %3482 = vst [vmem:[%s208 + $0x4] sm:$0xf] %v3418
      %3483 = vst [vmem:[%s208 + $0x8] sm:$0xf] %v3419
      %3484 = vst [vmem:[%s208 + $0xc] sm:$0xf] %v3420
      %3485 = vst [vmem:[%s208 + $0x10] sm:$0xf] %v3421
      %3486 = vst [vmem:[%s208 + $0x14] sm:$0xf] %v3422
      %3487 = vst [vmem:[%s208 + $0x18] sm:$0xf] %v3423
      %3488 = vst [vmem:[%s208 + $0x1c] sm:$0xf] %v3424
      %3489 = vst [vmem:[%s208 + $0x20] sm:$0xf] %v3425
      %3490 = vst [vmem:[%s208 + $0x24] sm:$0xf] %v3426
      %3491 = vst [vmem:[%s208 + $0x28] sm:$0xf] %v3427
      %3492 = vst [vmem:[%s208 + $0x2c] sm:$0xf] %v3428
      %3493 = vst [vmem:[%s208 + $0x30] sm:$0xf] %v3429
      %3494 = vst [vmem:[%s208 + $0x34] sm:$0xf] %v3430
      %3495 = vst [vmem:[%s208 + $0x38] sm:$0xf] %v3431
      %3496 = vst [vmem:[%s208 + $0x3c] sm:$0xf] %v3432
      %3497 = vst [vmem:[%s208 + $0x40] sm:$0xf] %v3433
      %3498 = vst [vmem:[%s208 + $0x44] sm:$0xf] %v3434
      %3499 = vst [vmem:[%s208 + $0x48] sm:$0xf] %v3435
      %3500 = vst [vmem:[%s208 + $0x4c] sm:$0xf] %v3436
      %3501 = vst [vmem:[%s208 + $0x50] sm:$0xf] %v3437
      %3502 = vst [vmem:[%s208 + $0x54] sm:$0xf] %v3438
      %3503 = vst [vmem:[%s208 + $0x58] sm:$0xf] %v3439
      %3504 = vst [vmem:[%s208 + $0x5c] sm:$0xf] %v3440
      %3505 = vst [vmem:[%s208 + $0x60] sm:$0xf] %v3441
      %3506 = vst [vmem:[%s208 + $0x64] sm:$0xf] %v3442
      %3507 = vst [vmem:[%s208 + $0x68] sm:$0xf] %v3443
      %3508 = vst [vmem:[%s208 + $0x6c] sm:$0xf] %v3444
      %3509 = vst [vmem:[%s208 + $0x70] sm:$0xf] %v3445
      %3510 = vst [vmem:[%s208 + $0x74] sm:$0xf] %v3446
      %3511 = vst [vmem:[%s208 + $0x78] sm:$0xf] %v3447
      %3512 = vst [vmem:[%s208 + $0x7c] sm:$0xf] %v3448
      %v3513 = vadd.f32 %v3321, %v3322
      %v3514 = vadd.f32 %v3513, %v3323
      %v3515 = vadd.f32 %v3514, %v3324
      %v3516 = vadd.f32 %v3515, %v3325
      %v3517 = vadd.f32 %v3516, %v3326
      %v3518 = vadd.f32 %v3517, %v3327
      %v3519 = vadd.f32 %v3518, %v3328
      %v3520 = vadd.f32 %v3519, %v3329
      %v3521 = vadd.f32 %v3520, %v3330
      %v3522 = vadd.f32 %v3521, %v3331
      %v3523 = vadd.f32 %v3522, %v3332
      %v3524 = vadd.f32 %v3523, %v3333
      %v3525 = vadd.f32 %v3524, %v3334
      %v3526 = vadd.f32 %v3525, %v3335
      %v3527 = vadd.f32 %v3526, %v3336
      %v3528 = vadd.f32 %v3527, %v3337
      %v3529 = vadd.f32 %v3528, %v3338
      %v3530 = vadd.f32 %v3529, %v3339
      %v3531 = vadd.f32 %v3530, %v3340
      %v3532 = vadd.f32 %v3531, %v3341
      %v3533 = vadd.f32 %v3532, %v3342
      %v3534 = vadd.f32 %v3533, %v3343
      %v3535 = vadd.f32 %v3534, %v3344
      %v3536 = vadd.f32 %v3535, %v3345
      %v3537 = vadd.f32 %v3536, %v3346
      %v3538 = vadd.f32 %v3537, %v3347
      %v3539 = vadd.f32 %v3538, %v3348
      %v3540 = vadd.f32 %v3539, %v3349
      %v3541 = vadd.f32 %v3540, %v3350
      %v3542 = vadd.f32 %v3541, %v3351
      %v3543 = vadd.f32 %v3542, %v3352
      %v3544 = vrot.slane %v3543, 4
      %v3545 = vadd.f32 %v3543, %v3544
      %v3546 = vrot.slane %v3545, 2
      %v3547 = vadd.f32 %v3545, %v3546
      %v3548 = vrot.slane %v3547, 1
      %v3549 = vadd.f32 %v3547, %v3548
      %3550 = vst [vmem:[%s211] sm:$0x1] %v3549
      %v3551 = vmul.f32 %v3321, %v3321
      %v3552 = vmul.f32 %v3322, %v3322
      %v3553 = vmul.f32 %v3323, %v3323
      %v3554 = vmul.f32 %v3324, %v3324
      %v3555 = vmul.f32 %v3325, %v3325
      %v3556 = vmul.f32 %v3326, %v3326
      %v3557 = vmul.f32 %v3327, %v3327
      %v3558 = vmul.f32 %v3328, %v3328
      %v3559 = vmul.f32 %v3329, %v3329
      %v3560 = vmul.f32 %v3330, %v3330
      %v3561 = vmul.f32 %v3331, %v3331
      %v3562 = vmul.f32 %v3332, %v3332
      %v3563 = vmul.f32 %v3333, %v3333
      %v3564 = vmul.f32 %v3334, %v3334
      %v3565 = vmul.f32 %v3335, %v3335
      %v3566 = vmul.f32 %v3336, %v3336
      %v3567 = vmul.f32 %v3337, %v3337
      %v3568 = vmul.f32 %v3338, %v3338
      %v3569 = vmul.f32 %v3339, %v3339
      %v3570 = vmul.f32 %v3340, %v3340
      %v3571 = vmul.f32 %v3341, %v3341
      %v3572 = vmul.f32 %v3342, %v3342
      %v3573 = vmul.f32 %v3343, %v3343
      %v3574 = vmul.f32 %v3344, %v3344
      %v3575 = vmul.f32 %v3345, %v3345
      %v3576 = vmul.f32 %v3346, %v3346
      %v3577 = vmul.f32 %v3347, %v3347
      %v3578 = vmul.f32 %v3348, %v3348
      %v3579 = vmul.f32 %v3349, %v3349
      %v3580 = vmul.f32 %v3350, %v3350
      %v3581 = vmul.f32 %v3351, %v3351
      %v3582 = vmul.f32 %v3352, %v3352
      %v3583 = vadd.f32 %v3551, %v3552
      %v3584 = vadd.f32 %v3583, %v3553
      %v3585 = vadd.f32 %v3584, %v3554
      %v3586 = vadd.f32 %v3585, %v3555
      %v3587 = vadd.f32 %v3586, %v3556
      %v3588 = vadd.f32 %v3587, %v3557
      %v3589 = vadd.f32 %v3588, %v3558
      %v3590 = vadd.f32 %v3589, %v3559
      %v3591 = vadd.f32 %v3590, %v3560
      %v3592 = vadd.f32 %v3591, %v3561
      %v3593 = vadd.f32 %v3592, %v3562
      %v3594 = vadd.f32 %v3593, %v3563
      %v3595 = vadd.f32 %v3594, %v3564
      %v3596 = vadd.f32 %v3595, %v3565
      %v3597 = vadd.f32 %v3596, %v3566
      %v3598 = vadd.f32 %v3597, %v3567
      %v3599 = vadd.f32 %v3598, %v3568
      %v3600 = vadd.f32 %v3599, %v3569
      %v3601 = vadd.f32 %v3600, %v3570
      %v3602 = vadd.f32 %v3601, %v3571
      %v3603 = vadd.f32 %v3602, %v3572
      %v3604 = vadd.f32 %v3603, %v3573
      %v3605 = vadd.f32 %v3604, %v3574
      %v3606 = vadd.f32 %v3605, %v3575
      %v3607 = vadd.f32 %v3606, %v3576
      %v3608 = vadd.f32 %v3607, %v3577
      %v3609 = vadd.f32 %v3608, %v3578
      %v3610 = vadd.f32 %v3609, %v3579
      %v3611 = vadd.f32 %v3610, %v3580
      %v3612 = vadd.f32 %v3611, %v3581
      %v3613 = vadd.f32 %v3612, %v3582
      %v3614 = vrot.slane %v3613, 4
      %v3615 = vadd.f32 %v3613, %v3614
      %v3616 = vrot.slane %v3615, 2
      %v3617 = vadd.f32 %v3615, %v3616
      %v3618 = vrot.slane %v3617, 1
      %v3619 = vadd.f32 %v3617, %v3618
      %3620 = vst [vmem:[%s214] sm:$0x1] %v3619
      %p3621 = scmp.lt.s32.totalorder %s16, 1
      %s3622 = scalar_select %p3621, %s16, 1
      %s3623 = smul.addr %s3622, 32
      %s3624 = smul.addr %s3623, 4
      %s3625 = scalar_lea.vmem %s2, %s3624
      %p3626 = scmp.lt.s32.totalorder %s16, 1
      %s3627 = scalar_select %p3626, %s16, 1
      %s3628 = scalar_lea.vmem %s3, %s3627
      %p3629 = scmp.lt.s32.totalorder %s16, 1
      %s3630 = scalar_select %p3629, %s16, 1
      %s3631 = scalar_lea.vmem %s4, %s3630
      // Predicated region
      $region29: #{conv_bn_relu.2} parent=27 // pred_check
        %p3632 = pneg %p81
      $region30: #{conv_bn_relu.2} parent=27 // pred_check_branch
        %3634 = sbr.rel (%p3632) target = $region32
      $region31: #{conv_bn_relu.2} parent=27 // pred_region
        _
      $region32: #{conv_bn_relu.2} parent=27 // pred_fallthru
        _
      // Predicated region
      $region33: #{conv_bn_relu.2} parent=27 // pred_check
        %p3635 = pneg %p107
      $region34: #{conv_bn_relu.2} parent=27 // pred_check_branch
        %3637 = sbr.rel (%p3635) target = $region36
      $region35: #{conv_bn_relu.2} parent=27 // pred_region
        _
      $region36: #{conv_bn_relu.2} parent=27 // pred_fallthru
        _
      // Predicated region
      $region37: #{conv_bn_relu.2} parent=27 // pred_check
        %p3638 = pneg %p133
      $region38: #{conv_bn_relu.2} parent=27 // pred_check_branch
        %3640 = sbr.rel (%p3638) target = $region40
      $region39: #{conv_bn_relu.2} parent=27 // pred_region
        _
      $region40: #{conv_bn_relu.2} parent=27 // pred_fallthru
        _
    $region28: #{conv_bn_relu.2} parent=5 // pred_fallthru
      _
    %p3641 = scmp.le.s32.totalorder 2, %s11
    // Predicated region
    $region41: #{conv_bn_relu.2} parent=5 // pred_check
      %p3642 = pneg %p3641
    $region42: #{conv_bn_relu.2} parent=5 // pred_check_branch
      %3644 = sbr.rel (%p3642) target = $region44
    $region43: #{conv_bn_relu.2} parent=5 // pred_region
      %s3645 = ssub.s32 %s11, 2
      // Predicated region
      $region45: #{conv_bn_relu.2} parent=43 // pred_check
        %p3646 = pneg %p87
      $region46: #{conv_bn_relu.2} parent=43 // pred_check_branch
        %3648 = sbr.rel (%p3646) target = $region48
      $region47: #{conv_bn_relu.2} parent=43 // pred_region
        %p3649 = scmp.lt.s32.totalorder %s17, 1
        %s3650 = scalar_select %p3649, %s17, 1
        %s3651 = smul.addr %s3650, 32
        %s3652 = smul.addr %s3651, 4
        %s3653 = scalar_lea.vmem %s2, %s3652
      $region48: #{conv_bn_relu.2} parent=43 // pred_fallthru
        _
      // Predicated region
      $region49: #{conv_bn_relu.2} parent=43 // pred_check
        %p3654 = pneg %p113
      $region50: #{conv_bn_relu.2} parent=43 // pred_check_branch
        %3656 = sbr.rel (%p3654) target = $region52
      $region51: #{conv_bn_relu.2} parent=43 // pred_region
        %p3657 = scmp.lt.s32.totalorder %s17, 1
        %s3658 = scalar_select %p3657, %s17, 1
        %s3659 = scalar_lea.vmem %s3, %s3658
      $region52: #{conv_bn_relu.2} parent=43 // pred_fallthru
        _
      // Predicated region
      $region53: #{conv_bn_relu.2} parent=43 // pred_check
        %p3660 = pneg %p139
      $region54: #{conv_bn_relu.2} parent=43 // pred_check_branch
        %3662 = sbr.rel (%p3660) target = $region56
      $region55: #{conv_bn_relu.2} parent=43 // pred_region
        %p3663 = scmp.lt.s32.totalorder %s17, 1
        %s3664 = scalar_select %p3663, %s17, 1
        %s3665 = scalar_lea.vmem %s4, %s3664
      $region56: #{conv_bn_relu.2} parent=43 // pred_fallthru
        _
    $region44: #{conv_bn_relu.2} parent=5 // pred_fallthru
      _
  $region6: #{conv_bn_relu.2} parent=0 // loop_footer
    %s15 = sadd.s32 1, %s11
  $region7: #{conv_bn_relu.2} parent=0 // loop_footer_branch
    %10 = sbr.rel target = $region3
  $region8: #{conv_bn_relu.2} parent=0 // loop_exit
    _

</llo_original>
